<compile_context>
chip_gen: v7x
topology: tpu7x:2x2x1
jax: 0.10.0
libtpu: 0.0.40
codegen_flags: <defaults>
</compile_context>

<pallas_src>
import jax
import jax.numpy as jnp
from jax import lax
from jax.experimental import pallas as pl
from jax.experimental.pallas import tpu as pltpu


def _fill_im2col(x_bf, xcol_ref, W):
    """Fill xcol_ref (H*W, 9*Cp) bf16 with the nine zero-padded 3x3 taps of x_bf.

    x_bf: (H, W, Cp) bfloat16.  Tap t = ky*3 + kx (ky, kx in {0,1,2}) occupies the
    column band [t*Cp, (t+1)*Cp) and holds x[h+ky-1, w+kx-1, :] (zero when out of
    range), flattened over (h, w) — matching the (3,3,Cin,Cout)->(9*Cp,Cp) fold.
    """
    H, _, Cp = x_bf.shape
    HW = H * W
    zcol = jnp.zeros((H, 1, Cp), jnp.bfloat16)
    zrows = jnp.zeros((W, Cp), jnp.bfloat16)
    for dx in (-1, 0, 1):
        # One W-direction shift per dx (bf16), reused for all three dy taps.
        if dx == 1:
            slab = jnp.concatenate([x_bf[:, 1:], zcol], axis=1)
        elif dx == -1:
            slab = jnp.concatenate([zcol, x_bf[:, :-1]], axis=1)
        else:
            slab = x_bf
        slab2 = slab.reshape(HW, Cp)            # free relayout (W % 8 == 0)
        for dy in (-1, 0, 1):
            t = (dy + 1) * 3 + (dx + 1)
            band = pl.ds(t * Cp, Cp)
            if dy == 0:
                xcol_ref[:, band] = slab2
            elif dy == 1:                       # tap row r reads slab row r + W
                xcol_ref[pl.ds(0, HW - W), band] = slab2[W:]
                xcol_ref[pl.ds(HW - W, W), band] = zrows
            else:                               # dy == -1: tap row r reads r - W
                xcol_ref[pl.ds(W, HW - W), band] = slab2[: HW - W]
                xcol_ref[pl.ds(0, W), band] = zrows


def _conv3x3(x_bf, w_ref, xcol_ref, W):
    """3x3 stride-1 SAME conv as one folded-tap MXU matmul. Returns (H*W, Cp) f32."""
    _fill_im2col(x_bf, xcol_ref, W)
    return jnp.dot(xcol_ref[...], w_ref[...], preferred_element_type=jnp.float32)


def basic_block_kernel(x_ref, w1_ref, s1_ref, b1_ref, w2_ref, s2_ref, b2_ref,
                       o_ref, xcol_ref):
    # x_ref:    (1, H, W, Cp) f32   one image per grid step (channel-padded)
    # w*_ref:   (9*Cp, Cp)    bf16  folded 3x3 conv weights
    # s*/b*:    (1, Cp)       f32   folded BN scale / bias (eval mode)
    # o_ref:    (1, H, W, Cp) f32
    # xcol_ref: (H*W, 9*Cp)   bf16  im2col scratch
    _, H, W, Cp = x_ref.shape
    x = x_ref[0]                                          # (H, W, Cp) f32

    # ---- conv1 + bn1 (folded affine) + relu ----
    c1 = _conv3x3(x.astype(jnp.bfloat16), w1_ref, xcol_ref, W)      # (HW, Cp) f32
    o1 = jnp.maximum(c1 * s1_ref[...] + b1_ref[...], 0.0)

    # ---- conv2 + bn2 ----
    c2 = _conv3x3(o1.astype(jnp.bfloat16).reshape(H, W, Cp), w2_ref, xcol_ref, W)
    o2 = c2 * s2_ref[...] + b2_ref[...]

    # ---- identity residual (stride=1, downsample=None) + relu ----
    out = jnp.maximum(o2 + x.reshape(H * W, Cp), 0.0)
    o_ref[0] = out.reshape(H, W, Cp).astype(o_ref.dtype)


def basic_block_2d(x_nchw, w1, s1, b1, w2, s2, b2):
    """x_nchw: (N, C, H, W) float32.  Returns (N, C, H, W) float32."""
    N, C, H, W = x_nchw.shape
    Cin, Cout = w1.shape[2], w1.shape[3]
    assert Cin == C and Cout == C, "identity residual requires inplanes == planes"
    assert W % 8 == 0, "W must be a multiple of 8 for aligned slab relayout"
    Cp = max(128, ((C + 127) // 128) * 128)               # lane-dense channels

    # NCHW -> NHWC (PyTorch-interface only) + channel pad.  No spatial padding.
    x = jnp.transpose(x_nchw, (0, 2, 3, 1))
    x = jnp.pad(x, ((0, 0), (0, 0), (0, 0), (0, Cp - C)))

    def fold_w(w):
        wp = jnp.pad(w, ((0, 0), (0, 0), (0, Cp - Cin), (0, Cp - Cout)))
        return wp.reshape(9 * Cp, Cp).astype(jnp.bfloat16)   # bf16 once, wrapper-side

    def fold_sb(v):
        return jnp.pad(v.reshape(-1), (0, Cp - Cout)).reshape(1, Cp).astype(jnp.float32)

    w1c, w2c = fold_w(w1), fold_w(w2)
    s1p, b1p, s2p, b2p = fold_sb(s1), fold_sb(b1), fold_sb(s2), fold_sb(b2)

    # VMEM budget: double-buffered image in/out + double-buffered weights +
    # im2col scratch + f32 intermediates, 2x headroom; clamp to [32 MiB, 64 MiB]
    # so it stays within v7x physical VMEM and never below the v6e default.
    work = (4 * H * W * Cp * 4            # in + out blocks, double-buffered
            + 4 * 9 * Cp * Cp * 2         # two folded bf16 weights, double-buffered
            + H * W * 9 * Cp * 2          # im2col scratch
            + 8 * H * W * Cp * 4)         # f32 intermediates / headroom
    vmem_limit = int(min(64 * 2**20, max(2 * work, 32 * 2**20)))

    out = pl.pallas_call(
        basic_block_kernel,
        out_shape=jax.ShapeDtypeStruct((N, H, W, Cp), jnp.float32),
        grid_spec=pltpu.PrefetchScalarGridSpec(
            num_scalar_prefetch=0,
            grid=(N,),
            in_specs=[
                pl.BlockSpec((1, H, W, Cp), lambda n: (n, 0, 0, 0)),
                pl.BlockSpec((9 * Cp, Cp), lambda n: (0, 0)),
                pl.BlockSpec((1, Cp), lambda n: (0, 0)),
                pl.BlockSpec((1, Cp), lambda n: (0, 0)),
                pl.BlockSpec((9 * Cp, Cp), lambda n: (0, 0)),
                pl.BlockSpec((1, Cp), lambda n: (0, 0)),
                pl.BlockSpec((1, Cp), lambda n: (0, 0)),
            ],
            out_specs=pl.BlockSpec((1, H, W, Cp), lambda n: (n, 0, 0, 0)),
            scratch_shapes=[pltpu.VMEM((H * W, 9 * Cp), jnp.bfloat16)],
        ),
        compiler_params=pltpu.CompilerParams(
            dimension_semantics=("parallel",),
            vmem_limit_bytes=vmem_limit),
    )(x, w1c, s1p, b1p, w2c, s2p, b2p)

    out = out[..., :C]                                    # drop channel padding
    return jnp.transpose(out, (0, 3, 1, 2))               # NHWC -> NCHW


def reference_block(x_nchw, w1, s1, b1, w2, s2, b2):
    """Plain-JAX f32 reference (for correctness check)."""
    x = jnp.transpose(x_nchw, (0, 2, 3, 1))
    dn = lax.conv_dimension_numbers(x.shape, w1.shape, ("NHWC", "HWIO", "NHWC"))
    c1 = lax.conv_general_dilated(x, w1, (1, 1), "SAME", dimension_numbers=dn)
    o1 = jnp.maximum(c1 * s1 + b1, 0.0)
    c2 = lax.conv_general_dilated(o1, w2, (1, 1), "SAME", dimension_numbers=dn)
    o2 = c2 * s2 + b2
    out = jnp.maximum(o2 + x, 0.0)
    return jnp.transpose(out, (0, 3, 1, 2))


def make_params(key, inplanes, planes, eps=1e-5):
    ks = jax.random.split(key, 10)
    w1 = 0.1 * jax.random.normal(ks[0], (3, 3, inplanes, planes), jnp.float32)
    w2 = 0.1 * jax.random.normal(ks[1], (3, 3, planes, planes), jnp.float32)
    # BN params (eval mode, running stats), folded into per-channel scale/bias.
    g1 = 1.0 + 0.1 * jax.random.normal(ks[2], (planes,), jnp.float32)
    be1 = 0.1 * jax.random.normal(ks[3], (planes,), jnp.float32)
    m1 = 0.1 * jax.random.normal(ks[4], (planes,), jnp.float32)
    v1 = 0.5 + jax.random.uniform(ks[5], (planes,), jnp.float32)
    g2 = 1.0 + 0.1 * jax.random.normal(ks[6], (planes,), jnp.float32)
    be2 = 0.1 * jax.random.normal(ks[7], (planes,), jnp.float32)
    m2 = 0.1 * jax.random.normal(ks[8], (planes,), jnp.float32)
    v2 = 0.5 + jax.random.uniform(ks[9], (planes,), jnp.float32)
    s1 = (g1 / jnp.sqrt(v1 + eps)).reshape(1, planes)
    b1 = (be1 - m1 * g1 / jnp.sqrt(v1 + eps)).reshape(1, planes)
    s2 = (g2 / jnp.sqrt(v2 + eps)).reshape(1, planes)
    b2 = (be2 - m2 * g2 / jnp.sqrt(v2 + eps)).reshape(1, planes)
    return w1, s1, b1, w2, s2, b2


if __name__ == "__main__":
    key = jax.random.PRNGKey(0)
    kx, kp = jax.random.split(key)

    N, C, H, W = 2, 4, 16, 16                      # inplanes = planes = 4, stride = 1
    x = jax.random.normal(kx, (N, C, H, W), jnp.float32)
    params = make_params(kp, C, C)

    fwd = jax.jit(basic_block_2d)
    out = jax.block_until_ready(fwd(x, *params))

    ref = reference_block(x, *params)
    assert out.shape == (N, C, H, W)
    # bf16 matmul operands with f32 accumulation -> ~1e-3-level relative drift
    # vs the f32 reference; 2e-2 gives comfortable margin.
    assert jnp.allclose(out, ref, atol=2e-2, rtol=2e-2), "Pallas kernel mismatch vs reference"

    print("KERNEL_OK")
</pallas_src>

<mosaic_0001>
module attributes {stable_mosaic.version = 11 : i64} {
  func.func @basic_block_kernel(%arg0: i32, %arg1: memref<1x16x16x128xf32, #tpu.memory_space<vmem>>, %arg2: memref<1152x128xbf16, #tpu.memory_space<vmem>>, %arg3: memref<1x128xf32, #tpu.memory_space<vmem>>, %arg4: memref<1x128xf32, #tpu.memory_space<vmem>>, %arg5: memref<1152x128xbf16, #tpu.memory_space<vmem>>, %arg6: memref<1x128xf32, #tpu.memory_space<vmem>>, %arg7: memref<1x128xf32, #tpu.memory_space<vmem>>, %arg8: memref<1x16x16x128xf32, #tpu.memory_space<vmem>>, %arg9: memref<256x1152xbf16, #tpu.memory_space<vmem>>) attributes {dimension_semantics = [#tpu.dimension_semantics<parallel>], iteration_bounds = array<i64: 2>, scalar_prefetch = 0 : i64, scratch_operands = 1 : i64, tpu.core_type = #tpu.core_type<tc>, window_params = [{transform_indices = @transform_0, window_bounds = array<i64: 1, 16, 16, 128>}, {pipeline_mode = #tpu.pipeline_mode<synchronous>, transform_indices = @transform_1, window_bounds = array<i64: 1152, 128>}, {pipeline_mode = #tpu.pipeline_mode<synchronous>, transform_indices = @transform_2, window_bounds = array<i64: 1, 128>}, {pipeline_mode = #tpu.pipeline_mode<synchronous>, transform_indices = @transform_3, window_bounds = array<i64: 1, 128>}, {pipeline_mode = #tpu.pipeline_mode<synchronous>, transform_indices = @transform_4, window_bounds = array<i64: 1152, 128>}, {pipeline_mode = #tpu.pipeline_mode<synchronous>, transform_indices = @transform_5, window_bounds = array<i64: 1, 128>}, {pipeline_mode = #tpu.pipeline_mode<synchronous>, transform_indices = @transform_6, window_bounds = array<i64: 1, 128>}, {transform_indices = @transform_7, window_bounds = array<i64: 1, 16, 16, 128>}]} {
    %c0 = arith.constant 0 : index
    %c0_0 = arith.constant 0 : index
    %c0_1 = arith.constant 0 : index
    %c0_2 = arith.constant 0 : index
    %0 = vector.load %arg1[%c0, %c0_0, %c0_1, %c0_2] : memref<1x16x16x128xf32, #tpu.memory_space<vmem>>, vector<1x16x16x128xf32>
    %1 = vector.shape_cast %0 : vector<1x16x16x128xf32> to vector<16x16x128xf32>
    %2 = arith.truncf %1 : vector<16x16x128xf32> to vector<16x16x128xbf16>
    %cst = arith.constant 0.000000e+00 : bf16
    %3 = vector.broadcast %cst : bf16 to vector<16x1x128xbf16>
    %cst_3 = arith.constant 0.000000e+00 : bf16
    %4 = vector.broadcast %cst_3 : bf16 to vector<16x128xbf16>
    %5 = vector.extract_strided_slice %2 {offsets = [0, 0, 0], sizes = [16, 15, 128], strides = [1, 1, 1]} : vector<16x16x128xbf16> to vector<16x15x128xbf16>
    %6 = tpu.concatenate %3, %5 in 1 : vector<16x1x128xbf16>, vector<16x15x128xbf16> -> vector<16x16x128xbf16>
    %7 = vector.shape_cast %6 : vector<16x16x128xbf16> to vector<256x128xbf16>
    %8 = vector.extract_strided_slice %7 {offsets = [0, 0], sizes = [240, 128], strides = [1, 1]} : vector<256x128xbf16> to vector<240x128xbf16>
    %c16 = arith.constant 16 : index
    %c0_4 = arith.constant 0 : index
    %9 = vector.load %arg9[%c16, %c0_4] : memref<256x1152xbf16, #tpu.memory_space<vmem>>, vector<240x128xbf16>
    tpu.vector_store %arg9[%c16, %c0_4], %8 {strides = array<i32>} : memref<256x1152xbf16, #tpu.memory_space<vmem>>, vector<240x128xbf16>,
    %c0_5 = arith.constant 0 : index
    %c0_6 = arith.constant 0 : index
    %10 = vector.load %arg9[%c0_5, %c0_6] : memref<256x1152xbf16, #tpu.memory_space<vmem>>, vector<16x128xbf16>
    tpu.vector_store %arg9[%c0_5, %c0_6], %4 {strides = array<i32>} : memref<256x1152xbf16, #tpu.memory_space<vmem>>, vector<16x128xbf16>,
    %c0_7 = arith.constant 0 : index
    %c384 = arith.constant 384 : index
    %11 = vector.load %arg9[%c0_7, %c384] : memref<256x1152xbf16, #tpu.memory_space<vmem>>, vector<256x128xbf16>
    tpu.vector_store %arg9[%c0_7, %c384], %7 {strides = array<i32>} : memref<256x1152xbf16, #tpu.memory_space<vmem>>, vector<256x128xbf16>,
    %12 = vector.extract_strided_slice %7 {offsets = [16, 0], sizes = [240, 128], strides = [1, 1]} : vector<256x128xbf16> to vector<240x128xbf16>
    %c0_8 = arith.constant 0 : index
    %c768 = arith.constant 768 : index
    %13 = vector.load %arg9[%c0_8, %c768] : memref<256x1152xbf16, #tpu.memory_space<vmem>>, vector<240x128xbf16>
    tpu.vector_store %arg9[%c0_8, %c768], %12 {strides = array<i32>} : memref<256x1152xbf16, #tpu.memory_space<vmem>>, vector<240x128xbf16>,
    %c240 = arith.constant 240 : index
    %c768_9 = arith.constant 768 : index
    %14 = vector.load %arg9[%c240, %c768_9] : memref<256x1152xbf16, #tpu.memory_space<vmem>>, vector<16x128xbf16>
    tpu.vector_store %arg9[%c240, %c768_9], %4 {strides = array<i32>} : memref<256x1152xbf16, #tpu.memory_space<vmem>>, vector<16x128xbf16>,
    %15 = vector.shape_cast %2 : vector<16x16x128xbf16> to vector<256x128xbf16>
    %16 = vector.extract_strided_slice %15 {offsets = [0, 0], sizes = [240, 128], strides = [1, 1]} : vector<256x128xbf16> to vector<240x128xbf16>
    %c16_10 = arith.constant 16 : index
    %c128 = arith.constant 128 : index
    %17 = vector.load %arg9[%c16_10, %c128] : memref<256x1152xbf16, #tpu.memory_space<vmem>>, vector<240x128xbf16>
    tpu.vector_store %arg9[%c16_10, %c128], %16 {strides = array<i32>} : memref<256x1152xbf16, #tpu.memory_space<vmem>>, vector<240x128xbf16>,
    %c0_11 = arith.constant 0 : index
    %c128_12 = arith.constant 128 : index
    %18 = vector.load %arg9[%c0_11, %c128_12] : memref<256x1152xbf16, #tpu.memory_space<vmem>>, vector<16x128xbf16>
    tpu.vector_store %arg9[%c0_11, %c128_12], %4 {strides = array<i32>} : memref<256x1152xbf16, #tpu.memory_space<vmem>>, vector<16x128xbf16>,
    %c0_13 = arith.constant 0 : index
    %c512 = arith.constant 512 : index
    %19 = vector.load %arg9[%c0_13, %c512] : memref<256x1152xbf16, #tpu.memory_space<vmem>>, vector<256x128xbf16>
    tpu.vector_store %arg9[%c0_13, %c512], %15 {strides = array<i32>} : memref<256x1152xbf16, #tpu.memory_space<vmem>>, vector<256x128xbf16>,
    %20 = vector.extract_strided_slice %15 {offsets = [16, 0], sizes = [240, 128], strides = [1, 1]} : vector<256x128xbf16> to vector<240x128xbf16>
    %c0_14 = arith.constant 0 : index
    %c896 = arith.constant 896 : index
    %21 = vector.load %arg9[%c0_14, %c896] : memref<256x1152xbf16, #tpu.memory_space<vmem>>, vector<240x128xbf16>
    tpu.vector_store %arg9[%c0_14, %c896], %20 {strides = array<i32>} : memref<256x1152xbf16, #tpu.memory_space<vmem>>, vector<240x128xbf16>,
    %c240_15 = arith.constant 240 : index
    %c896_16 = arith.constant 896 : index
    %22 = vector.load %arg9[%c240_15, %c896_16] : memref<256x1152xbf16, #tpu.memory_space<vmem>>, vector<16x128xbf16>
    tpu.vector_store %arg9[%c240_15, %c896_16], %4 {strides = array<i32>} : memref<256x1152xbf16, #tpu.memory_space<vmem>>, vector<16x128xbf16>,
    %23 = vector.extract_strided_slice %2 {offsets = [0, 1, 0], sizes = [16, 15, 128], strides = [1, 1, 1]} : vector<16x16x128xbf16> to vector<16x15x128xbf16>
    %24 = tpu.concatenate %23, %3 in 1 : vector<16x15x128xbf16>, vector<16x1x128xbf16> -> vector<16x16x128xbf16>
    %25 = vector.shape_cast %24 : vector<16x16x128xbf16> to vector<256x128xbf16>
    %26 = vector.extract_strided_slice %25 {offsets = [0, 0], sizes = [240, 128], strides = [1, 1]} : vector<256x128xbf16> to vector<240x128xbf16>
    %c16_17 = arith.constant 16 : index
    %c256 = arith.constant 256 : index
    %27 = vector.load %arg9[%c16_17, %c256] : memref<256x1152xbf16, #tpu.memory_space<vmem>>, vector<240x128xbf16>
    tpu.vector_store %arg9[%c16_17, %c256], %26 {strides = array<i32>} : memref<256x1152xbf16, #tpu.memory_space<vmem>>, vector<240x128xbf16>,
    %c0_18 = arith.constant 0 : index
    %c256_19 = arith.constant 256 : index
    %28 = vector.load %arg9[%c0_18, %c256_19] : memref<256x1152xbf16, #tpu.memory_space<vmem>>, vector<16x128xbf16>
    tpu.vector_store %arg9[%c0_18, %c256_19], %4 {strides = array<i32>} : memref<256x1152xbf16, #tpu.memory_space<vmem>>, vector<16x128xbf16>,
    %c0_20 = arith.constant 0 : index
    %c640 = arith.constant 640 : index
    %29 = vector.load %arg9[%c0_20, %c640] : memref<256x1152xbf16, #tpu.memory_space<vmem>>, vector<256x128xbf16>
    tpu.vector_store %arg9[%c0_20, %c640], %25 {strides = array<i32>} : memref<256x1152xbf16, #tpu.memory_space<vmem>>, vector<256x128xbf16>,
    %30 = vector.extract_strided_slice %25 {offsets = [16, 0], sizes = [240, 128], strides = [1, 1]} : vector<256x128xbf16> to vector<240x128xbf16>
    %c0_21 = arith.constant 0 : index
    %c1024 = arith.constant 1024 : index
    %31 = vector.load %arg9[%c0_21, %c1024] : memref<256x1152xbf16, #tpu.memory_space<vmem>>, vector<240x128xbf16>
    tpu.vector_store %arg9[%c0_21, %c1024], %30 {strides = array<i32>} : memref<256x1152xbf16, #tpu.memory_space<vmem>>, vector<240x128xbf16>,
    %c240_22 = arith.constant 240 : index
    %c1024_23 = arith.constant 1024 : index
    %32 = vector.load %arg9[%c240_22, %c1024_23] : memref<256x1152xbf16, #tpu.memory_space<vmem>>, vector<16x128xbf16>
    tpu.vector_store %arg9[%c240_22, %c1024_23], %4 {strides = array<i32>} : memref<256x1152xbf16, #tpu.memory_space<vmem>>, vector<16x128xbf16>,
    %c0_24 = arith.constant 0 : index
    %c0_25 = arith.constant 0 : index
    %33 = vector.load %arg9[%c0_24, %c0_25] : memref<256x1152xbf16, #tpu.memory_space<vmem>>, vector<256x1152xbf16>
    %c0_26 = arith.constant 0 : index
    %c0_27 = arith.constant 0 : index
    %34 = vector.load %arg2[%c0_26, %c0_27] : memref<1152x128xbf16, #tpu.memory_space<vmem>>, vector<1152x128xbf16>
    %cst_28 = arith.constant dense<0.000000e+00> : vector<256x128xf32>
    %35 = tpu.matmul %33, %34, %cst_28 {dimension_numbers = #tpu.dot_dimension_numbers<[1], [0], [0], [1], [0, 0, 1, 1], [], []>} : vector<256x1152xbf16>, vector<1152x128xbf16>, vector<256x128xf32> -> vector<256x128xf32>
    %c0_29 = arith.constant 0 : index
    %c0_30 = arith.constant 0 : index
    %36 = vector.load %arg3[%c0_29, %c0_30] : memref<1x128xf32, #tpu.memory_space<vmem>>, vector<1x128xf32>
    %37 = vector.broadcast %36 : vector<1x128xf32> to vector<256x128xf32>
    %38 = arith.mulf %35, %37 : vector<256x128xf32>
    %c0_31 = arith.constant 0 : index
    %c0_32 = arith.constant 0 : index
    %39 = vector.load %arg4[%c0_31, %c0_32] : memref<1x128xf32, #tpu.memory_space<vmem>>, vector<1x128xf32>
    %40 = vector.broadcast %39 : vector<1x128xf32> to vector<256x128xf32>
    %41 = arith.addf %38, %40 : vector<256x128xf32>
    %cst_33 = arith.constant 0.000000e+00 : f32
    %42 = vector.broadcast %cst_33 : f32 to vector<256x128xf32>
    %43 = arith.maximumf %41, %42 : vector<256x128xf32>
    %44 = arith.truncf %43 : vector<256x128xf32> to vector<256x128xbf16>
    %45 = vector.shape_cast %44 : vector<256x128xbf16> to vector<16x16x128xbf16>
    %cst_34 = arith.constant 0.000000e+00 : bf16
    %46 = vector.broadcast %cst_34 : bf16 to vector<16x1x128xbf16>
    %cst_35 = arith.constant 0.000000e+00 : bf16
    %47 = vector.broadcast %cst_35 : bf16 to vector<16x128xbf16>
    %48 = vector.extract_strided_slice %45 {offsets = [0, 0, 0], sizes = [16, 15, 128], strides = [1, 1, 1]} : vector<16x16x128xbf16> to vector<16x15x128xbf16>
    %49 = tpu.concatenate %46, %48 in 1 : vector<16x1x128xbf16>, vector<16x15x128xbf16> -> vector<16x16x128xbf16>
    %50 = vector.shape_cast %49 : vector<16x16x128xbf16> to vector<256x128xbf16>
    %51 = vector.extract_strided_slice %50 {offsets = [0, 0], sizes = [240, 128], strides = [1, 1]} : vector<256x128xbf16> to vector<240x128xbf16>
    %c16_36 = arith.constant 16 : index
    %c0_37 = arith.constant 0 : index
    %52 = vector.load %arg9[%c16_36, %c0_37] : memref<256x1152xbf16, #tpu.memory_space<vmem>>, vector<240x128xbf16>
    tpu.vector_store %arg9[%c16_36, %c0_37], %51 {strides = array<i32>} : memref<256x1152xbf16, #tpu.memory_space<vmem>>, vector<240x128xbf16>,
    %c0_38 = arith.constant 0 : index
    %c0_39 = arith.constant 0 : index
    %53 = vector.load %arg9[%c0_38, %c0_39] : memref<256x1152xbf16, #tpu.memory_space<vmem>>, vector<16x128xbf16>
    tpu.vector_store %arg9[%c0_38, %c0_39], %47 {strides = array<i32>} : memref<256x1152xbf16, #tpu.memory_space<vmem>>, vector<16x128xbf16>,
    %c0_40 = arith.constant 0 : index
    %c384_41 = arith.constant 384 : index
    %54 = vector.load %arg9[%c0_40, %c384_41] : memref<256x1152xbf16, #tpu.memory_space<vmem>>, vector<256x128xbf16>
    tpu.vector_store %arg9[%c0_40, %c384_41], %50 {strides = array<i32>} : memref<256x1152xbf16, #tpu.memory_space<vmem>>, vector<256x128xbf16>,
    %55 = vector.extract_strided_slice %50 {offsets = [16, 0], sizes = [240, 128], strides = [1, 1]} : vector<256x128xbf16> to vector<240x128xbf16>
    %c0_42 = arith.constant 0 : index
    %c768_43 = arith.constant 768 : index
    %56 = vector.load %arg9[%c0_42, %c768_43] : memref<256x1152xbf16, #tpu.memory_space<vmem>>, vector<240x128xbf16>
    tpu.vector_store %arg9[%c0_42, %c768_43], %55 {strides = array<i32>} : memref<256x1152xbf16, #tpu.memory_space<vmem>>, vector<240x128xbf16>,
    %c240_44 = arith.constant 240 : index
    %c768_45 = arith.constant 768 : index
    %57 = vector.load %arg9[%c240_44, %c768_45] : memref<256x1152xbf16, #tpu.memory_space<vmem>>, vector<16x128xbf16>
    tpu.vector_store %arg9[%c240_44, %c768_45], %47 {strides = array<i32>} : memref<256x1152xbf16, #tpu.memory_space<vmem>>, vector<16x128xbf16>,
    %58 = vector.shape_cast %45 : vector<16x16x128xbf16> to vector<256x128xbf16>
    %59 = vector.extract_strided_slice %58 {offsets = [0, 0], sizes = [240, 128], strides = [1, 1]} : vector<256x128xbf16> to vector<240x128xbf16>
    %c16_46 = arith.constant 16 : index
    %c128_47 = arith.constant 128 : index
    %60 = vector.load %arg9[%c16_46, %c128_47] : memref<256x1152xbf16, #tpu.memory_space<vmem>>, vector<240x128xbf16>
    tpu.vector_store %arg9[%c16_46, %c128_47], %59 {strides = array<i32>} : memref<256x1152xbf16, #tpu.memory_space<vmem>>, vector<240x128xbf16>,
    %c0_48 = arith.constant 0 : index
    %c128_49 = arith.constant 128 : index
    %61 = vector.load %arg9[%c0_48, %c128_49] : memref<256x1152xbf16, #tpu.memory_space<vmem>>, vector<16x128xbf16>
    tpu.vector_store %arg9[%c0_48, %c128_49], %47 {strides = array<i32>} : memref<256x1152xbf16, #tpu.memory_space<vmem>>, vector<16x128xbf16>,
    %c0_50 = arith.constant 0 : index
    %c512_51 = arith.constant 512 : index
    %62 = vector.load %arg9[%c0_50, %c512_51] : memref<256x1152xbf16, #tpu.memory_space<vmem>>, vector<256x128xbf16>
    tpu.vector_store %arg9[%c0_50, %c512_51], %58 {strides = array<i32>} : memref<256x1152xbf16, #tpu.memory_space<vmem>>, vector<256x128xbf16>,
    %63 = vector.extract_strided_slice %58 {offsets = [16, 0], sizes = [240, 128], strides = [1, 1]} : vector<256x128xbf16> to vector<240x128xbf16>
    %c0_52 = arith.constant 0 : index
    %c896_53 = arith.constant 896 : index
    %64 = vector.load %arg9[%c0_52, %c896_53] : memref<256x1152xbf16, #tpu.memory_space<vmem>>, vector<240x128xbf16>
    tpu.vector_store %arg9[%c0_52, %c896_53], %63 {strides = array<i32>} : memref<256x1152xbf16, #tpu.memory_space<vmem>>, vector<240x128xbf16>,
    %c240_54 = arith.constant 240 : index
    %c896_55 = arith.constant 896 : index
    %65 = vector.load %arg9[%c240_54, %c896_55] : memref<256x1152xbf16, #tpu.memory_space<vmem>>, vector<16x128xbf16>
    tpu.vector_store %arg9[%c240_54, %c896_55], %47 {strides = array<i32>} : memref<256x1152xbf16, #tpu.memory_space<vmem>>, vector<16x128xbf16>,
    %66 = vector.extract_strided_slice %45 {offsets = [0, 1, 0], sizes = [16, 15, 128], strides = [1, 1, 1]} : vector<16x16x128xbf16> to vector<16x15x128xbf16>
    %67 = tpu.concatenate %66, %46 in 1 : vector<16x15x128xbf16>, vector<16x1x128xbf16> -> vector<16x16x128xbf16>
    %68 = vector.shape_cast %67 : vector<16x16x128xbf16> to vector<256x128xbf16>
    %69 = vector.extract_strided_slice %68 {offsets = [0, 0], sizes = [240, 128], strides = [1, 1]} : vector<256x128xbf16> to vector<240x128xbf16>
    %c16_56 = arith.constant 16 : index
    %c256_57 = arith.constant 256 : index
    %70 = vector.load %arg9[%c16_56, %c256_57] : memref<256x1152xbf16, #tpu.memory_space<vmem>>, vector<240x128xbf16>
    tpu.vector_store %arg9[%c16_56, %c256_57], %69 {strides = array<i32>} : memref<256x1152xbf16, #tpu.memory_space<vmem>>, vector<240x128xbf16>,
    %c0_58 = arith.constant 0 : index
    %c256_59 = arith.constant 256 : index
    %71 = vector.load %arg9[%c0_58, %c256_59] : memref<256x1152xbf16, #tpu.memory_space<vmem>>, vector<16x128xbf16>
    tpu.vector_store %arg9[%c0_58, %c256_59], %47 {strides = array<i32>} : memref<256x1152xbf16, #tpu.memory_space<vmem>>, vector<16x128xbf16>,
    %c0_60 = arith.constant 0 : index
    %c640_61 = arith.constant 640 : index
    %72 = vector.load %arg9[%c0_60, %c640_61] : memref<256x1152xbf16, #tpu.memory_space<vmem>>, vector<256x128xbf16>
    tpu.vector_store %arg9[%c0_60, %c640_61], %68 {strides = array<i32>} : memref<256x1152xbf16, #tpu.memory_space<vmem>>, vector<256x128xbf16>,
    %73 = vector.extract_strided_slice %68 {offsets = [16, 0], sizes = [240, 128], strides = [1, 1]} : vector<256x128xbf16> to vector<240x128xbf16>
    %c0_62 = arith.constant 0 : index
    %c1024_63 = arith.constant 1024 : index
    %74 = vector.load %arg9[%c0_62, %c1024_63] : memref<256x1152xbf16, #tpu.memory_space<vmem>>, vector<240x128xbf16>
    tpu.vector_store %arg9[%c0_62, %c1024_63], %73 {strides = array<i32>} : memref<256x1152xbf16, #tpu.memory_space<vmem>>, vector<240x128xbf16>,
    %c240_64 = arith.constant 240 : index
    %c1024_65 = arith.constant 1024 : index
    %75 = vector.load %arg9[%c240_64, %c1024_65] : memref<256x1152xbf16, #tpu.memory_space<vmem>>, vector<16x128xbf16>
    tpu.vector_store %arg9[%c240_64, %c1024_65], %47 {strides = array<i32>} : memref<256x1152xbf16, #tpu.memory_space<vmem>>, vector<16x128xbf16>,
    %c0_66 = arith.constant 0 : index
    %c0_67 = arith.constant 0 : index
    %76 = vector.load %arg9[%c0_66, %c0_67] : memref<256x1152xbf16, #tpu.memory_space<vmem>>, vector<256x1152xbf16>
    %c0_68 = arith.constant 0 : index
    %c0_69 = arith.constant 0 : index
    %77 = vector.load %arg5[%c0_68, %c0_69] : memref<1152x128xbf16, #tpu.memory_space<vmem>>, vector<1152x128xbf16>
    %cst_70 = arith.constant dense<0.000000e+00> : vector<256x128xf32>
    %78 = tpu.matmul %76, %77, %cst_70 {dimension_numbers = #tpu.dot_dimension_numbers<[1], [0], [0], [1], [0, 0, 1, 1], [], []>} : vector<256x1152xbf16>, vector<1152x128xbf16>, vector<256x128xf32> -> vector<256x128xf32>
    %c0_71 = arith.constant 0 : index
    %c0_72 = arith.constant 0 : index
    %79 = vector.load %arg6[%c0_71, %c0_72] : memref<1x128xf32, #tpu.memory_space<vmem>>, vector<1x128xf32>
    %80 = vector.broadcast %79 : vector<1x128xf32> to vector<256x128xf32>
    %81 = arith.mulf %78, %80 : vector<256x128xf32>
    %c0_73 = arith.constant 0 : index
    %c0_74 = arith.constant 0 : index
    %82 = vector.load %arg7[%c0_73, %c0_74] : memref<1x128xf32, #tpu.memory_space<vmem>>, vector<1x128xf32>
    %83 = vector.broadcast %82 : vector<1x128xf32> to vector<256x128xf32>
    %84 = arith.addf %81, %83 : vector<256x128xf32>
    %85 = vector.shape_cast %1 : vector<16x16x128xf32> to vector<256x128xf32>
    %86 = arith.addf %84, %85 : vector<256x128xf32>
    %cst_75 = arith.constant 0.000000e+00 : f32
    %87 = vector.broadcast %cst_75 : f32 to vector<256x128xf32>
    %88 = arith.maximumf %86, %87 : vector<256x128xf32>
    %89 = vector.shape_cast %88 : vector<256x128xf32> to vector<16x16x128xf32>
    %c0_76 = arith.constant 0 : index
    %c0_77 = arith.constant 0 : index
    %c0_78 = arith.constant 0 : index
    %c0_79 = arith.constant 0 : index
    %90 = vector.load %arg8[%c0_76, %c0_77, %c0_78, %c0_79] : memref<1x16x16x128xf32, #tpu.memory_space<vmem>>, vector<1x16x16x128xf32>
    %91 = vector.shape_cast %90 : vector<1x16x16x128xf32> to vector<16x16x128xf32>
    %92 = vector.shape_cast %89 : vector<16x16x128xf32> to vector<1x16x16x128xf32>
    tpu.vector_store %arg8[%c0_76, %c0_77, %c0_78, %c0_79], %92 {strides = array<i32>} : memref<1x16x16x128xf32, #tpu.memory_space<vmem>>, vector<1x16x16x128xf32>,
    return
  }
  func.func @transform_0(%arg0: i32) -> (i32, i32, i32, i32) {
    %c0_i32 = arith.constant 0 : i32
    %c0_i32_0 = arith.constant 0 : i32
    %c0_i32_1 = arith.constant 0 : i32
    %c0_i32_2 = arith.constant 0 : i32
    return %arg0, %c0_i32, %c0_i32_0, %c0_i32_1 : i32, i32, i32, i32
  }
  func.func @transform_1(%arg0: i32) -> (i32, i32) {
    %c0_i32 = arith.constant 0 : i32
    %c0_i32_0 = arith.constant 0 : i32
    %c0_i32_1 = arith.constant 0 : i32
    return %c0_i32, %c0_i32_0 : i32, i32
  }
  func.func @transform_2(%arg0: i32) -> (i32, i32) {
    %c0_i32 = arith.constant 0 : i32
    %c0_i32_0 = arith.constant 0 : i32
    %c0_i32_1 = arith.constant 0 : i32
    return %c0_i32, %c0_i32_0 : i32, i32
  }
  func.func @transform_3(%arg0: i32) -> (i32, i32) {
    %c0_i32 = arith.constant 0 : i32
    %c0_i32_0 = arith.constant 0 : i32
    %c0_i32_1 = arith.constant 0 : i32
    return %c0_i32, %c0_i32_0 : i32, i32
  }
  func.func @transform_4(%arg0: i32) -> (i32, i32) {
    %c0_i32 = arith.constant 0 : i32
    %c0_i32_0 = arith.constant 0 : i32
    %c0_i32_1 = arith.constant 0 : i32
    return %c0_i32, %c0_i32_0 : i32, i32
  }
  func.func @transform_5(%arg0: i32) -> (i32, i32) {
    %c0_i32 = arith.constant 0 : i32
    %c0_i32_0 = arith.constant 0 : i32
    %c0_i32_1 = arith.constant 0 : i32
    return %c0_i32, %c0_i32_0 : i32, i32
  }
  func.func @transform_6(%arg0: i32) -> (i32, i32) {
    %c0_i32 = arith.constant 0 : i32
    %c0_i32_0 = arith.constant 0 : i32
    %c0_i32_1 = arith.constant 0 : i32
    return %c0_i32, %c0_i32_0 : i32, i32
  }
  func.func @transform_7(%arg0: i32) -> (i32, i32, i32, i32) {
    %c0_i32 = arith.constant 0 : i32
    %c0_i32_0 = arith.constant 0 : i32
    %c0_i32_1 = arith.constant 0 : i32
    %c0_i32_2 = arith.constant 0 : i32
    return %arg0, %c0_i32, %c0_i32_0, %c0_i32_1 : i32, i32, i32, i32
  }
}

</mosaic_0001>

<llo_original>
// kernel: basic_block_2d.1
$region0: #{basic_block_2d.1}
  #allocation0 [shape = 'u32[]', space=smem, size = 0x4, offset = 0x4, fixed_abs, tag = 'smem constant byte address 0x4 - core index']
  #allocation1 [shape = 'u32[144,128]{1,0:T(1,128)}', space=vmem, size = 0x12000, scoped, tag = 'internal scratch']
  #allocation2 [shape = 'bf16[256,1152]{1,0:T(16,128)(2,1)}', space=vmem, size = 0x90000, scoped, tag = 'scratch operand']
  %s0 = inlined_call_operand.vmem [shape: f32[2,16,16,128], index: 0, kind: input, shape index: {}]
  %s1 = inlined_call_operand.vmem [shape: bf16[1152,128], index: 1, kind: input, shape index: {}]
  %s2 = inlined_call_operand.vmem [shape: f32[1,128], index: 2, kind: input, shape index: {}]
  %s3 = inlined_call_operand.vmem [shape: f32[1,128], index: 3, kind: input, shape index: {}]
  %s4 = inlined_call_operand.vmem [shape: bf16[1152,128], index: 4, kind: input, shape index: {}]
  %s5 = inlined_call_operand.vmem [shape: f32[1,128], index: 5, kind: input, shape index: {}]
  %s6 = inlined_call_operand.vmem [shape: f32[1,128], index: 6, kind: input, shape index: {}]
  %s7 = inlined_call_operand.vmem [shape: f32[2,16,16,128], index: 7, kind: output, shape index: {}]
  %s8 = sld [smem:[#allocation0]]
  $region61: #{basic_block_2d.1} parent=0
    _
  %s10 = ssub.s32 1, %s8
  %s11 = scalar_select 0, %s10, %s8
  loop: start=0, step=1, limit=4
  $region2: #{basic_block_2d.1} parent=0 // loop_pre_header
    _
  $region3: #{basic_block_2d.1} parent=0 // loop_header
    %s13 = sphi 0, %s17
    %p14 = scmp.ge.s32.totalorder %s13, 4
    %s23 = sphi 0, %s25
    %s26 = sphi 0, %s23
    %s27 = sphi 0, %s26
    %s43 = sphi 0, %s27
    %s47 = sphi 0, %s47
    %s49 = sphi 0, %s47
    %s50 = sphi 0, %s49
    %s64 = sphi 0, %s50
    %s68 = sphi 0, %s68
    %s70 = sphi 0, %s68
    %s71 = sphi 0, %s70
    %s85 = sphi 0, %s71
    %s89 = sphi 0, %s89
    %s91 = sphi 0, %s89
    %s92 = sphi 0, %s91
    %s106 = sphi 0, %s92
    %s110 = sphi 0, %s110
    %s112 = sphi 0, %s110
    %s113 = sphi 0, %s112
    %s127 = sphi 0, %s113
    %s131 = sphi 0, %s131
    %s133 = sphi 0, %s131
    %s134 = sphi 0, %s133
    %s148 = sphi 0, %s134
    %s152 = sphi 0, %s152
    %s154 = sphi 0, %s152
    %s155 = sphi 0, %s154
    %s169 = sphi 0, %s155
    %s175 = sphi 0, %s177
    %s178 = sphi 0, %s175
    %s179 = sphi 0, %s178
    %s195 = sphi 0, %s179
  $region4: #{basic_block_2d.1} parent=0 // loop_header_branch
    %16 = sbr.rel (%p14) target = $region8
  $region5: #{basic_block_2d.1} parent=0 // loop_body
    %s18 = ssub.s32 %s13, 1
    %s19 = ssub.s32 %s13, 2
    %s20 = sadd.s32 %s13, 1
    %s21 = ssub.s32 %s13, %s20
    %p22 = scmp.eq.s32.totalorder %s21, 0
    %s24 = sadd.s32 %s23, 1
    %s25 = scalar_select %p22, %s23, %s24
    %p28 = pneg %p22
    %p29 = scmp.eq.s32.totalorder %s13, 1
    %p30 = por %p28, %p29
    %p31 = scmp.ne.s32.totalorder %s23, %s26
    %p32 = scmp.eq.s32.totalorder %s13, 0
    %p33 = por %p31, %p32
    %p34 = scmp.ne.s32.totalorder %s23, %s26
    %p35 = scmp.eq.s32.totalorder %s18, 1
    %p36 = por %p34, %p35
    %p37 = scmp.ne.s32.totalorder %s26, %s27
    %p38 = scmp.eq.s32.totalorder %s18, 0
    %p39 = por %p37, %p38
    %p40 = scmp.ne.s32.totalorder %s26, %s27
    %p41 = scmp.eq.s32.totalorder %s19, 1
    %p42 = por %p40, %p41
    %p44 = scmp.ne.s32.totalorder %s27, %s43
    %p45 = scmp.eq.s32.totalorder %s19, 0
    %p46 = por %p44, %p45
    %s48 = sadd.s32 %s47, 1
    %p51 = scmp.eq.s32.totalorder %s13, 1
    %p52 = scmp.ne.s32.totalorder %s47, %s49
    %p53 = scmp.eq.s32.totalorder %s13, 0
    %p54 = por %p52, %p53
    %p55 = scmp.ne.s32.totalorder %s47, %s49
    %p56 = scmp.eq.s32.totalorder %s18, 1
    %p57 = por %p55, %p56
    %p58 = scmp.ne.s32.totalorder %s49, %s50
    %p59 = scmp.eq.s32.totalorder %s18, 0
    %p60 = por %p58, %p59
    %p61 = scmp.ne.s32.totalorder %s49, %s50
    %p62 = scmp.eq.s32.totalorder %s19, 1
    %p63 = por %p61, %p62
    %p65 = scmp.ne.s32.totalorder %s50, %s64
    %p66 = scmp.eq.s32.totalorder %s19, 0
    %p67 = por %p65, %p66
    %s69 = sadd.s32 %s68, 1
    %p72 = scmp.eq.s32.totalorder %s13, 1
    %p73 = scmp.ne.s32.totalorder %s68, %s70
    %p74 = scmp.eq.s32.totalorder %s13, 0
    %p75 = por %p73, %p74
    %p76 = scmp.ne.s32.totalorder %s68, %s70
    %p77 = scmp.eq.s32.totalorder %s18, 1
    %p78 = por %p76, %p77
    %p79 = scmp.ne.s32.totalorder %s70, %s71
    %p80 = scmp.eq.s32.totalorder %s18, 0
    %p81 = por %p79, %p80
    %p82 = scmp.ne.s32.totalorder %s70, %s71
    %p83 = scmp.eq.s32.totalorder %s19, 1
    %p84 = por %p82, %p83
    %p86 = scmp.ne.s32.totalorder %s71, %s85
    %p87 = scmp.eq.s32.totalorder %s19, 0
    %p88 = por %p86, %p87
    %s90 = sadd.s32 %s89, 1
    %p93 = scmp.eq.s32.totalorder %s13, 1
    %p94 = scmp.ne.s32.totalorder %s89, %s91
    %p95 = scmp.eq.s32.totalorder %s13, 0
    %p96 = por %p94, %p95
    %p97 = scmp.ne.s32.totalorder %s89, %s91
    %p98 = scmp.eq.s32.totalorder %s18, 1
    %p99 = por %p97, %p98
    %p100 = scmp.ne.s32.totalorder %s91, %s92
    %p101 = scmp.eq.s32.totalorder %s18, 0
    %p102 = por %p100, %p101
    %p103 = scmp.ne.s32.totalorder %s91, %s92
    %p104 = scmp.eq.s32.totalorder %s19, 1
    %p105 = por %p103, %p104
    %p107 = scmp.ne.s32.totalorder %s92, %s106
    %p108 = scmp.eq.s32.totalorder %s19, 0
    %p109 = por %p107, %p108
    %s111 = sadd.s32 %s110, 1
    %p114 = scmp.eq.s32.totalorder %s13, 1
    %p115 = scmp.ne.s32.totalorder %s110, %s112
    %p116 = scmp.eq.s32.totalorder %s13, 0
    %p117 = por %p115, %p116
    %p118 = scmp.ne.s32.totalorder %s110, %s112
    %p119 = scmp.eq.s32.totalorder %s18, 1
    %p120 = por %p118, %p119
    %p121 = scmp.ne.s32.totalorder %s112, %s113
    %p122 = scmp.eq.s32.totalorder %s18, 0
    %p123 = por %p121, %p122
    %p124 = scmp.ne.s32.totalorder %s112, %s113
    %p125 = scmp.eq.s32.totalorder %s19, 1
    %p126 = por %p124, %p125
    %p128 = scmp.ne.s32.totalorder %s113, %s127
    %p129 = scmp.eq.s32.totalorder %s19, 0
    %p130 = por %p128, %p129
    %s132 = sadd.s32 %s131, 1
    %p135 = scmp.eq.s32.totalorder %s13, 1
    %p136 = scmp.ne.s32.totalorder %s131, %s133
    %p137 = scmp.eq.s32.totalorder %s13, 0
    %p138 = por %p136, %p137
    %p139 = scmp.ne.s32.totalorder %s131, %s133
    %p140 = scmp.eq.s32.totalorder %s18, 1
    %p141 = por %p139, %p140
    %p142 = scmp.ne.s32.totalorder %s133, %s134
    %p143 = scmp.eq.s32.totalorder %s18, 0
    %p144 = por %p142, %p143
    %p145 = scmp.ne.s32.totalorder %s133, %s134
    %p146 = scmp.eq.s32.totalorder %s19, 1
    %p147 = por %p145, %p146
    %p149 = scmp.ne.s32.totalorder %s134, %s148
    %p150 = scmp.eq.s32.totalorder %s19, 0
    %p151 = por %p149, %p150
    %s153 = sadd.s32 %s152, 1
    %p156 = scmp.eq.s32.totalorder %s13, 1
    %p157 = scmp.ne.s32.totalorder %s152, %s154
    %p158 = scmp.eq.s32.totalorder %s13, 0
    %p159 = por %p157, %p158
    %p160 = scmp.ne.s32.totalorder %s152, %s154
    %p161 = scmp.eq.s32.totalorder %s18, 1
    %p162 = por %p160, %p161
    %p163 = scmp.ne.s32.totalorder %s154, %s155
    %p164 = scmp.eq.s32.totalorder %s18, 0
    %p165 = por %p163, %p164
    %p166 = scmp.ne.s32.totalorder %s154, %s155
    %p167 = scmp.eq.s32.totalorder %s19, 1
    %p168 = por %p166, %p167
    %p170 = scmp.ne.s32.totalorder %s155, %s169
    %p171 = scmp.eq.s32.totalorder %s19, 0
    %p172 = por %p170, %p171
    %s173 = ssub.s32 %s13, %s20
    %p174 = scmp.eq.s32.totalorder %s173, 0
    %s176 = sadd.s32 %s175, 1
    %s177 = scalar_select %p174, %s175, %s176
    %p180 = pneg %p174
    %p181 = scmp.eq.s32.totalorder %s13, 1
    %p182 = por %p180, %p181
    %p183 = scmp.ne.s32.totalorder %s175, %s178
    %p184 = scmp.eq.s32.totalorder %s13, 0
    %p185 = por %p183, %p184
    %p186 = scmp.ne.s32.totalorder %s175, %s178
    %p187 = scmp.eq.s32.totalorder %s18, 1
    %p188 = por %p186, %p187
    %p189 = scmp.ne.s32.totalorder %s178, %s179
    %p190 = scmp.eq.s32.totalorder %s18, 0
    %p191 = por %p189, %p190
    %p192 = scmp.ne.s32.totalorder %s178, %s179
    %p193 = scmp.eq.s32.totalorder %s19, 1
    %p194 = por %p192, %p193
    %p196 = scmp.ne.s32.totalorder %s179, %s195
    %p197 = scmp.eq.s32.totalorder %s19, 0
    %p198 = por %p196, %p197
    %p199 = scmp.le.s32.totalorder 1, %s13
    %p200 = scmp.lt.s32.totalorder %s13, 3
    %p201 = pnand %p199, %p200
    %p202 = pneg %p201
    // Predicated region
    $region9: #{basic_block_2d.1} parent=5 // pred_check
      _
    $region10: #{basic_block_2d.1} parent=5 // pred_check_branch
      %204 = sbr.rel (%p201) target = $region12
    $region11: #{basic_block_2d.1} parent=5 // pred_region
      %s205 = ssub.s32 %s13, 1
      // Predicated region
      $region13: #{basic_block_2d.1} parent=11 // pred_check
        %p206 = pneg %p60
      $region14: #{basic_block_2d.1} parent=11 // pred_check_branch
        %208 = sbr.rel (%p206) target = $region16
      $region15: #{basic_block_2d.1} parent=11 // pred_region
        _
      $region16: #{basic_block_2d.1} parent=11 // pred_fallthru
        _
      // Predicated region
      $region17: #{basic_block_2d.1} parent=11 // pred_check
        %p209 = pneg %p81
      $region18: #{basic_block_2d.1} parent=11 // pred_check_branch
        %211 = sbr.rel (%p209) target = $region20
      $region19: #{basic_block_2d.1} parent=11 // pred_region
        _
      $region20: #{basic_block_2d.1} parent=11 // pred_fallthru
        _
      // Predicated region
      $region21: #{basic_block_2d.1} parent=11 // pred_check
        %p212 = pneg %p102
      $region22: #{basic_block_2d.1} parent=11 // pred_check_branch
        %214 = sbr.rel (%p212) target = $region24
      $region23: #{basic_block_2d.1} parent=11 // pred_region
        _
      $region24: #{basic_block_2d.1} parent=11 // pred_fallthru
        _
      // Predicated region
      $region25: #{basic_block_2d.1} parent=11 // pred_check
        %p215 = pneg %p123
      $region26: #{basic_block_2d.1} parent=11 // pred_check_branch
        %217 = sbr.rel (%p215) target = $region28
      $region27: #{basic_block_2d.1} parent=11 // pred_region
        _
      $region28: #{basic_block_2d.1} parent=11 // pred_fallthru
        _
      // Predicated region
      $region29: #{basic_block_2d.1} parent=11 // pred_check
        %p218 = pneg %p144
      $region30: #{basic_block_2d.1} parent=11 // pred_check_branch
        %220 = sbr.rel (%p218) target = $region32
      $region31: #{basic_block_2d.1} parent=11 // pred_region
        _
      $region32: #{basic_block_2d.1} parent=11 // pred_fallthru
        _
      // Predicated region
      $region33: #{basic_block_2d.1} parent=11 // pred_check
        %p221 = pneg %p165
      $region34: #{basic_block_2d.1} parent=11 // pred_check_branch
        %223 = sbr.rel (%p221) target = $region36
      $region35: #{basic_block_2d.1} parent=11 // pred_region
        _
      $region36: #{basic_block_2d.1} parent=11 // pred_fallthru
        _
    $region12: #{basic_block_2d.1} parent=5 // pred_fallthru
      _
    %p224 = scmp.lt.s32.totalorder %s13, 2
    // Predicated region
    $region37: #{basic_block_2d.1} parent=5 // pred_check
      %p225 = pneg %p224
    $region38: #{basic_block_2d.1} parent=5 // pred_check_branch
      %227 = sbr.rel (%p225) target = $region40
    $region39: #{basic_block_2d.1} parent=5 // pred_region
      // Predicated region
      $region41: #{basic_block_2d.1} parent=39 // pred_check
        %p228 = pneg %p33
      $region42: #{basic_block_2d.1} parent=39 // pred_check_branch
        %230 = sbr.rel (%p228) target = $region44
      $region43: #{basic_block_2d.1} parent=39 // pred_region
        %p231 = scmp.lt.s32.totalorder %s13, 1
        %s232 = scalar_select %p231, %s13, 1
        %s233 = smul.addr %s232, 32
        %s234 = smul.addr %s233, 8
        %s235 = scalar_lea.vmem %s0, %s234
      $region44: #{basic_block_2d.1} parent=39 // pred_fallthru
        _
    $region40: #{basic_block_2d.1} parent=5 // pred_fallthru
      _
    %p236 = scmp.le.s32.totalorder 1, %s13
    %p237 = scmp.lt.s32.totalorder %s13, 3
    %p238 = pnand %p236, %p237
    %p239 = pneg %p238
    // Predicated region
    $region45: #{basic_block_2d.1} parent=5 // pred_check
      _
    $region46: #{basic_block_2d.1} parent=5 // pred_check_branch
      %241 = sbr.rel (%p238) target = $region48
    $region47: #{basic_block_2d.1} parent=5 // pred_region
      %s242 = ssub.s32 %s13, 1
      %p243 = scmp.lt.s32.totalorder %s18, 1
      %s244 = scalar_select %p243, %s18, 1
      %s245 = smul.addr %s244, 32
      %s246 = smul.addr %s245, 8
      %s247 = scalar_lea.vmem %s0, %s246
      %p248 = pneg %p39
      %p249 = pneg %p36
      %p250 = pneg %p60
      %p251 = pneg %p57
      %p252 = pneg %p81
      %p253 = pneg %p78
      %p254 = pneg %p102
      %p255 = pneg %p99
      %p256 = pneg %p123
      %p257 = pneg %p120
      %p258 = pneg %p144
      %p259 = pneg %p141
      %p260 = pneg %p165
      %p261 = pneg %p162
      %p262 = pneg %p191
      %p263 = pneg %p188
      %p264 = scmp.lt.s32.totalorder %s18, 1
      %s265 = scalar_select %p264, %s18, 1
      %s266 = smul.addr %s265, 32
      %s267 = smul.addr %s266, 8
      %s268 = scalar_lea.vmem %s7, %s267
      %p269 = scmp.lt.s32.totalorder %s18, 1
      %s270 = scalar_select %p269, %s18, 1
      %s271 = smul.addr %s270, 32
      %s272 = smul.addr %s271, 8
      %s273 = scalar_lea.vmem %s0, %s272
      %p274 = scmp.lt.s32.totalorder %s18, 1
      %s275 = scalar_select %p274, %s18, 1
      %s276 = smul.addr %s275, 32
      %s277 = smul.addr %s276, 8
      %s278 = scalar_lea.vmem %s7, %s277
      %v280 = vld [vmem:[%s273] sm:$0xff]
      %v281 = vld [vmem:[%s273 + $0x8] sm:$0xff]
      %v282 = vld [vmem:[%s273 + $0x10] sm:$0xff]
      %v283 = vld [vmem:[%s273 + $0x18] sm:$0xff]
      %v284 = vld [vmem:[%s273 + $0x20] sm:$0xff]
      %v285 = vld [vmem:[%s273 + $0x28] sm:$0xff]
      %v286 = vld [vmem:[%s273 + $0x30] sm:$0xff]
      %v287 = vld [vmem:[%s273 + $0x38] sm:$0xff]
      %v288 = vld [vmem:[%s273 + $0x40] sm:$0xff]
      %v289 = vld [vmem:[%s273 + $0x48] sm:$0xff]
      %v290 = vld [vmem:[%s273 + $0x50] sm:$0xff]
      %v291 = vld [vmem:[%s273 + $0x58] sm:$0xff]
      %v292 = vld [vmem:[%s273 + $0x60] sm:$0xff]
      %v293 = vld [vmem:[%s273 + $0x68] sm:$0xff]
      %v294 = vld [vmem:[%s273 + $0x70] sm:$0xff]
      %v295 = vld [vmem:[%s273 + $0x78] sm:$0xff]
      %v296 = vld [vmem:[%s273 + $0x80] sm:$0xff]
      %v297 = vld [vmem:[%s273 + $0x88] sm:$0xff]
      %v298 = vld [vmem:[%s273 + $0x90] sm:$0xff]
      %v299 = vld [vmem:[%s273 + $0x98] sm:$0xff]
      %v300 = vld [vmem:[%s273 + $0xa0] sm:$0xff]
      %v301 = vld [vmem:[%s273 + $0xa8] sm:$0xff]
      %v302 = vld [vmem:[%s273 + $0xb0] sm:$0xff]
      %v303 = vld [vmem:[%s273 + $0xb8] sm:$0xff]
      %v304 = vld [vmem:[%s273 + $0xc0] sm:$0xff]
      %v305 = vld [vmem:[%s273 + $0xc8] sm:$0xff]
      %v306 = vld [vmem:[%s273 + $0xd0] sm:$0xff]
      %v307 = vld [vmem:[%s273 + $0xd8] sm:$0xff]
      %v308 = vld [vmem:[%s273 + $0xe0] sm:$0xff]
      %v309 = vld [vmem:[%s273 + $0xe8] sm:$0xff]
      %v310 = vld [vmem:[%s273 + $0xf0] sm:$0xff]
      %v311 = vld [vmem:[%s273 + $0xf8] sm:$0xff]
      %v312 = vpack.c.bf16 %v281, %v280
      %v313 = vpack.c.bf16 %v283, %v282
      %v314 = vpack.c.bf16 %v285, %v284
      %v315 = vpack.c.bf16 %v287, %v286
      %v316 = vpack.c.bf16 %v289, %v288
      %v317 = vpack.c.bf16 %v291, %v290
      %v318 = vpack.c.bf16 %v293, %v292
      %v319 = vpack.c.bf16 %v295, %v294
      %v320 = vpack.c.bf16 %v297, %v296
      %v321 = vpack.c.bf16 %v299, %v298
      %v322 = vpack.c.bf16 %v301, %v300
      %v323 = vpack.c.bf16 %v303, %v302
      %v324 = vpack.c.bf16 %v305, %v304
      %v325 = vpack.c.bf16 %v307, %v306
      %v326 = vpack.c.bf16 %v309, %v308
      %v327 = vpack.c.bf16 %v311, %v310
      %v329 = vshrl.u32 %v312, 16
      %v331 = vrot.slane %v329, 7
      %v332 = vshll.u32 %v312, 16
      %v334 = vor.u32 %v331, %v332
      %v336 = vshrl.u32 %v313, 16
      %v338 = vrot.slane %v336, 7
      %v339 = vshll.u32 %v313, 16
      %v341 = vor.u32 %v338, %v339
      %v343 = vshrl.u32 %v314, 16
      %v345 = vrot.slane %v343, 7
      %v346 = vshll.u32 %v314, 16
      %v348 = vor.u32 %v345, %v346
      %v350 = vshrl.u32 %v315, 16
      %v352 = vrot.slane %v350, 7
      %v353 = vshll.u32 %v315, 16
      %v355 = vor.u32 %v352, %v353
      %v357 = vshrl.u32 %v316, 16
      %v359 = vrot.slane %v357, 7
      %v360 = vshll.u32 %v316, 16
      %v362 = vor.u32 %v359, %v360
      %v364 = vshrl.u32 %v317, 16
      %v366 = vrot.slane %v364, 7
      %v367 = vshll.u32 %v317, 16
      %v369 = vor.u32 %v366, %v367
      %v371 = vshrl.u32 %v318, 16
      %v373 = vrot.slane %v371, 7
      %v374 = vshll.u32 %v318, 16
      %v376 = vor.u32 %v373, %v374
      %v378 = vshrl.u32 %v319, 16
      %v380 = vrot.slane %v378, 7
      %v381 = vshll.u32 %v319, 16
      %v383 = vor.u32 %v380, %v381
      %v385 = vshrl.u32 %v320, 16
      %v387 = vrot.slane %v385, 7
      %v388 = vshll.u32 %v320, 16
      %v390 = vor.u32 %v387, %v388
      %v392 = vshrl.u32 %v321, 16
      %v394 = vrot.slane %v392, 7
      %v395 = vshll.u32 %v321, 16
      %v397 = vor.u32 %v394, %v395
      %v399 = vshrl.u32 %v322, 16
      %v401 = vrot.slane %v399, 7
      %v402 = vshll.u32 %v322, 16
      %v404 = vor.u32 %v401, %v402
      %v406 = vshrl.u32 %v323, 16
      %v408 = vrot.slane %v406, 7
      %v409 = vshll.u32 %v323, 16
      %v411 = vor.u32 %v408, %v409
      %v413 = vshrl.u32 %v324, 16
      %v415 = vrot.slane %v413, 7
      %v416 = vshll.u32 %v324, 16
      %v418 = vor.u32 %v415, %v416
      %v420 = vshrl.u32 %v325, 16
      %v422 = vrot.slane %v420, 7
      %v423 = vshll.u32 %v325, 16
      %v425 = vor.u32 %v422, %v423
      %v427 = vshrl.u32 %v326, 16
      %v429 = vrot.slane %v427, 7
      %v430 = vshll.u32 %v326, 16
      %v432 = vor.u32 %v429, %v430
      %v434 = vshrl.u32 %v327, 16
      %v436 = vrot.slane %v434, 7
      %v437 = vshll.u32 %v327, 16
      %v439 = vor.u32 %v436, %v437
      %vm456 = vcmask 1040384
      %vm457 = vsmask.f32 256
      %vm458 = vmand %vm456, %vm457
      %v459 = vsel %vm458, 0, %v334
      %v460 = vsel %vm458, 0, %v341
      %v461 = vsel %vm458, 0, %v348
      %v462 = vsel %vm458, 0, %v355
      %v463 = vsel %vm458, 0, %v362
      %v464 = vsel %vm458, 0, %v369
      %v465 = vsel %vm458, 0, %v376
      %v466 = vsel %vm458, 0, %v383
      %v467 = vsel %vm458, 0, %v390
      %v468 = vsel %vm458, 0, %v397
      %v469 = vsel %vm458, 0, %v404
      %v470 = vsel %vm458, 0, %v411
      %v471 = vsel %vm458, 0, %v418
      %v472 = vsel %vm458, 0, %v425
      %v473 = vsel %vm458, 0, %v432
      %v474 = vsel %vm458, 0, %v439
      %475 = vst [vmem:[#allocation2 + $0x48] sm:$0xff] %v459
      %476 = vst [vmem:[#allocation2 + $0x90] sm:$0xff] %v460
      %477 = vst [vmem:[#allocation2 + $0xd8] sm:$0xff] %v461
      %478 = vst [vmem:[#allocation2 + $0x120] sm:$0xff] %v462
      %479 = vst [vmem:[#allocation2 + $0x168] sm:$0xff] %v463
      %480 = vst [vmem:[#allocation2 + $0x1b0] sm:$0xff] %v464
      %481 = vst [vmem:[#allocation2 + $0x1f8] sm:$0xff] %v465
      %482 = vst [vmem:[#allocation2 + $0x240] sm:$0xff] %v466
      %483 = vst [vmem:[#allocation2 + $0x288] sm:$0xff] %v467
      %484 = vst [vmem:[#allocation2 + $0x2d0] sm:$0xff] %v468
      %485 = vst [vmem:[#allocation2 + $0x318] sm:$0xff] %v469
      %486 = vst [vmem:[#allocation2 + $0x360] sm:$0xff] %v470
      %487 = vst [vmem:[#allocation2 + $0x3a8] sm:$0xff] %v471
      %488 = vst [vmem:[#allocation2 + $0x3f0] sm:$0xff] %v472
      %489 = vst [vmem:[#allocation2 + $0x438] sm:$0xff] %v473
      %490 = vst [vmem:[#allocation2] sm:$0xff] 0
      %491 = vst [vmem:[#allocation2 + $0x18] sm:$0xff] %v459
      %492 = vst [vmem:[#allocation2 + $0x60] sm:$0xff] %v460
      %493 = vst [vmem:[#allocation2 + $0xa8] sm:$0xff] %v461
      %494 = vst [vmem:[#allocation2 + $0xf0] sm:$0xff] %v462
      %495 = vst [vmem:[#allocation2 + $0x138] sm:$0xff] %v463
      %496 = vst [vmem:[#allocation2 + $0x180] sm:$0xff] %v464
      %497 = vst [vmem:[#allocation2 + $0x1c8] sm:$0xff] %v465
      %498 = vst [vmem:[#allocation2 + $0x210] sm:$0xff] %v466
      %499 = vst [vmem:[#allocation2 + $0x258] sm:$0xff] %v467
      %500 = vst [vmem:[#allocation2 + $0x2a0] sm:$0xff] %v468
      %501 = vst [vmem:[#allocation2 + $0x2e8] sm:$0xff] %v469
      %502 = vst [vmem:[#allocation2 + $0x330] sm:$0xff] %v470
      %503 = vst [vmem:[#allocation2 + $0x378] sm:$0xff] %v471
      %504 = vst [vmem:[#allocation2 + $0x3c0] sm:$0xff] %v472
      %505 = vst [vmem:[#allocation2 + $0x408] sm:$0xff] %v473
      %506 = vst [vmem:[#allocation2 + $0x450] sm:$0xff] %v474
      %507 = vst [vmem:[#allocation2 + $0x30] sm:$0xff] %v460
      %508 = vst [vmem:[#allocation2 + $0x78] sm:$0xff] %v461
      %509 = vst [vmem:[#allocation2 + $0xc0] sm:$0xff] %v462
      %510 = vst [vmem:[#allocation2 + $0x108] sm:$0xff] %v463
      %511 = vst [vmem:[#allocation2 + $0x150] sm:$0xff] %v464
      %512 = vst [vmem:[#allocation2 + $0x198] sm:$0xff] %v465
      %513 = vst [vmem:[#allocation2 + $0x1e0] sm:$0xff] %v466
      %514 = vst [vmem:[#allocation2 + $0x228] sm:$0xff] %v467
      %515 = vst [vmem:[#allocation2 + $0x270] sm:$0xff] %v468
      %516 = vst [vmem:[#allocation2 + $0x2b8] sm:$0xff] %v469
      %517 = vst [vmem:[#allocation2 + $0x300] sm:$0xff] %v470
      %518 = vst [vmem:[#allocation2 + $0x348] sm:$0xff] %v471
      %519 = vst [vmem:[#allocation2 + $0x390] sm:$0xff] %v472
      %520 = vst [vmem:[#allocation2 + $0x3d8] sm:$0xff] %v473
      %521 = vst [vmem:[#allocation2 + $0x420] sm:$0xff] %v474
      %522 = vst [vmem:[#allocation2 + $0x468] sm:$0xff] 0
      %523 = vst [vmem:[#allocation2 + $0x50] sm:$0xff] %v312
      %524 = vst [vmem:[#allocation2 + $0x98] sm:$0xff] %v313
      %525 = vst [vmem:[#allocation2 + $0xe0] sm:$0xff] %v314
      %526 = vst [vmem:[#allocation2 + $0x128] sm:$0xff] %v315
      %527 = vst [vmem:[#allocation2 + $0x170] sm:$0xff] %v316
      %528 = vst [vmem:[#allocation2 + $0x1b8] sm:$0xff] %v317
      %529 = vst [vmem:[#allocation2 + $0x200] sm:$0xff] %v318
      %530 = vst [vmem:[#allocation2 + $0x248] sm:$0xff] %v319
      %531 = vst [vmem:[#allocation2 + $0x290] sm:$0xff] %v320
      %532 = vst [vmem:[#allocation2 + $0x2d8] sm:$0xff] %v321
      %533 = vst [vmem:[#allocation2 + $0x320] sm:$0xff] %v322
      %534 = vst [vmem:[#allocation2 + $0x368] sm:$0xff] %v323
      %535 = vst [vmem:[#allocation2 + $0x3b0] sm:$0xff] %v324
      %536 = vst [vmem:[#allocation2 + $0x3f8] sm:$0xff] %v325
      %537 = vst [vmem:[#allocation2 + $0x440] sm:$0xff] %v326
      %538 = vst [vmem:[#allocation2 + $0x8] sm:$0xff] 0
      %539 = vst [vmem:[#allocation2 + $0x20] sm:$0xff] %v312
      %540 = vst [vmem:[#allocation2 + $0x68] sm:$0xff] %v313
      %541 = vst [vmem:[#allocation2 + $0xb0] sm:$0xff] %v314
      %542 = vst [vmem:[#allocation2 + $0xf8] sm:$0xff] %v315
      %543 = vst [vmem:[#allocation2 + $0x140] sm:$0xff] %v316
      %544 = vst [vmem:[#allocation2 + $0x188] sm:$0xff] %v317
      %545 = vst [vmem:[#allocation2 + $0x1d0] sm:$0xff] %v318
      %546 = vst [vmem:[#allocation2 + $0x218] sm:$0xff] %v319
      %547 = vst [vmem:[#allocation2 + $0x260] sm:$0xff] %v320
      %548 = vst [vmem:[#allocation2 + $0x2a8] sm:$0xff] %v321
      %549 = vst [vmem:[#allocation2 + $0x2f0] sm:$0xff] %v322
      %550 = vst [vmem:[#allocation2 + $0x338] sm:$0xff] %v323
      %551 = vst [vmem:[#allocation2 + $0x380] sm:$0xff] %v324
      %552 = vst [vmem:[#allocation2 + $0x3c8] sm:$0xff] %v325
      %553 = vst [vmem:[#allocation2 + $0x410] sm:$0xff] %v326
      %554 = vst [vmem:[#allocation2 + $0x458] sm:$0xff] %v327
      %555 = vst [vmem:[#allocation2 + $0x38] sm:$0xff] %v313
      %556 = vst [vmem:[#allocation2 + $0x80] sm:$0xff] %v314
      %557 = vst [vmem:[#allocation2 + $0xc8] sm:$0xff] %v315
      %558 = vst [vmem:[#allocation2 + $0x110] sm:$0xff] %v316
      %559 = vst [vmem:[#allocation2 + $0x158] sm:$0xff] %v317
      %560 = vst [vmem:[#allocation2 + $0x1a0] sm:$0xff] %v318
      %561 = vst [vmem:[#allocation2 + $0x1e8] sm:$0xff] %v319
      %562 = vst [vmem:[#allocation2 + $0x230] sm:$0xff] %v320
      %563 = vst [vmem:[#allocation2 + $0x278] sm:$0xff] %v321
      %564 = vst [vmem:[#allocation2 + $0x2c0] sm:$0xff] %v322
      %565 = vst [vmem:[#allocation2 + $0x308] sm:$0xff] %v323
      %566 = vst [vmem:[#allocation2 + $0x350] sm:$0xff] %v324
      %567 = vst [vmem:[#allocation2 + $0x398] sm:$0xff] %v325
      %568 = vst [vmem:[#allocation2 + $0x3e0] sm:$0xff] %v326
      %569 = vst [vmem:[#allocation2 + $0x428] sm:$0xff] %v327
      %570 = vst [vmem:[#allocation2 + $0x470] sm:$0xff] 0
      %v571 = vrot.slane %v332, 1
      %v572 = vor.u32 %v329, %v571
      %v573 = vrot.slane %v339, 1
      %v574 = vor.u32 %v336, %v573
      %v575 = vrot.slane %v346, 1
      %v576 = vor.u32 %v343, %v575
      %v577 = vrot.slane %v353, 1
      %v578 = vor.u32 %v350, %v577
      %v579 = vrot.slane %v360, 1
      %v580 = vor.u32 %v357, %v579
      %v581 = vrot.slane %v367, 1
      %v582 = vor.u32 %v364, %v581
      %v583 = vrot.slane %v374, 1
      %v584 = vor.u32 %v371, %v583
      %v585 = vrot.slane %v381, 1
      %v586 = vor.u32 %v378, %v585
      %v587 = vrot.slane %v388, 1
      %v588 = vor.u32 %v385, %v587
      %v589 = vrot.slane %v395, 1
      %v590 = vor.u32 %v392, %v589
      %v591 = vrot.slane %v402, 1
      %v592 = vor.u32 %v399, %v591
      %v593 = vrot.slane %v409, 1
      %v594 = vor.u32 %v406, %v593
      %v595 = vrot.slane %v416, 1
      %v596 = vor.u32 %v413, %v595
      %v597 = vrot.slane %v423, 1
      %v598 = vor.u32 %v420, %v597
      %v599 = vrot.slane %v430, 1
      %v600 = vor.u32 %v427, %v599
      %v601 = vrot.slane %v437, 1
      %v602 = vor.u32 %v434, %v601
      %vm619 = vcmask 1047552
      %vm620 = vsmask.f32 7424
      %vm621 = vmand %vm619, %vm620
      %v622 = vsel %vm621, %v572, 0
      %v623 = vsel %vm621, %v574, 0
      %v624 = vsel %vm621, %v576, 0
      %v625 = vsel %vm621, %v578, 0
      %v626 = vsel %vm621, %v580, 0
      %v627 = vsel %vm621, %v582, 0
      %v628 = vsel %vm621, %v584, 0
      %v629 = vsel %vm621, %v586, 0
      %v630 = vsel %vm621, %v588, 0
      %v631 = vsel %vm621, %v590, 0
      %v632 = vsel %vm621, %v592, 0
      %v633 = vsel %vm621, %v594, 0
      %v634 = vsel %vm621, %v596, 0
      %v635 = vsel %vm621, %v598, 0
      %v636 = vsel %vm621, %v600, 0
      %v637 = vsel %vm621, %v602, 0
      %638 = vst [vmem:[#allocation2 + $0x58] sm:$0xff] %v622
      %639 = vst [vmem:[#allocation2 + $0xa0] sm:$0xff] %v623
      %640 = vst [vmem:[#allocation2 + $0xe8] sm:$0xff] %v624
      %641 = vst [vmem:[#allocation2 + $0x130] sm:$0xff] %v625
      %642 = vst [vmem:[#allocation2 + $0x178] sm:$0xff] %v626
      %643 = vst [vmem:[#allocation2 + $0x1c0] sm:$0xff] %v627
      %644 = vst [vmem:[#allocation2 + $0x208] sm:$0xff] %v628
      %645 = vst [vmem:[#allocation2 + $0x250] sm:$0xff] %v629
      %646 = vst [vmem:[#allocation2 + $0x298] sm:$0xff] %v630
      %647 = vst [vmem:[#allocation2 + $0x2e0] sm:$0xff] %v631
      %648 = vst [vmem:[#allocation2 + $0x328] sm:$0xff] %v632
      %649 = vst [vmem:[#allocation2 + $0x370] sm:$0xff] %v633
      %650 = vst [vmem:[#allocation2 + $0x3b8] sm:$0xff] %v634
      %651 = vst [vmem:[#allocation2 + $0x400] sm:$0xff] %v635
      %652 = vst [vmem:[#allocation2 + $0x448] sm:$0xff] %v636
      %653 = vst [vmem:[#allocation2 + $0x10] sm:$0xff] 0
      %654 = vst [vmem:[#allocation2 + $0x28] sm:$0xff] %v622
      %655 = vst [vmem:[#allocation2 + $0x70] sm:$0xff] %v623
      %656 = vst [vmem:[#allocation2 + $0xb8] sm:$0xff] %v624
      %657 = vst [vmem:[#allocation2 + $0x100] sm:$0xff] %v625
      %658 = vst [vmem:[#allocation2 + $0x148] sm:$0xff] %v626
      %659 = vst [vmem:[#allocation2 + $0x190] sm:$0xff] %v627
      %660 = vst [vmem:[#allocation2 + $0x1d8] sm:$0xff] %v628
      %661 = vst [vmem:[#allocation2 + $0x220] sm:$0xff] %v629
      %662 = vst [vmem:[#allocation2 + $0x268] sm:$0xff] %v630
      %663 = vst [vmem:[#allocation2 + $0x2b0] sm:$0xff] %v631
      %664 = vst [vmem:[#allocation2 + $0x2f8] sm:$0xff] %v632
      %665 = vst [vmem:[#allocation2 + $0x340] sm:$0xff] %v633
      %666 = vst [vmem:[#allocation2 + $0x388] sm:$0xff] %v634
      %667 = vst [vmem:[#allocation2 + $0x3d0] sm:$0xff] %v635
      %668 = vst [vmem:[#allocation2 + $0x418] sm:$0xff] %v636
      %669 = vst [vmem:[#allocation2 + $0x460] sm:$0xff] %v637
      %670 = vst [vmem:[#allocation2 + $0x40] sm:$0xff] %v623
      %671 = vst [vmem:[#allocation2 + $0x88] sm:$0xff] %v624
      %672 = vst [vmem:[#allocation2 + $0xd0] sm:$0xff] %v625
      %673 = vst [vmem:[#allocation2 + $0x118] sm:$0xff] %v626
      %674 = vst [vmem:[#allocation2 + $0x160] sm:$0xff] %v627
      %675 = vst [vmem:[#allocation2 + $0x1a8] sm:$0xff] %v628
      %676 = vst [vmem:[#allocation2 + $0x1f0] sm:$0xff] %v629
      %677 = vst [vmem:[#allocation2 + $0x238] sm:$0xff] %v630
      %678 = vst [vmem:[#allocation2 + $0x280] sm:$0xff] %v631
      %679 = vst [vmem:[#allocation2 + $0x2c8] sm:$0xff] %v632
      %680 = vst [vmem:[#allocation2 + $0x310] sm:$0xff] %v633
      %681 = vst [vmem:[#allocation2 + $0x358] sm:$0xff] %v634
      %682 = vst [vmem:[#allocation2 + $0x3a0] sm:$0xff] %v635
      %683 = vst [vmem:[#allocation2 + $0x3e8] sm:$0xff] %v636
      %684 = vst [vmem:[#allocation2 + $0x430] sm:$0xff] %v637
      %685 = vst [vmem:[#allocation2 + $0x478] sm:$0xff] 0
      %v686 = vld [vmem:[#allocation2] sm:$0xff]
      %v687 = vld [vmem:[#allocation2 + $0x8] sm:$0xff]
      %v688 = vld [vmem:[#allocation2 + $0x10] sm:$0xff]
      %v689 = vld [vmem:[#allocation2 + $0x18] sm:$0xff]
      %v690 = vld [vmem:[#allocation2 + $0x20] sm:$0xff]
      %v691 = vld [vmem:[#allocation2 + $0x28] sm:$0xff]
      %v692 = vld [vmem:[#allocation2 + $0x30] sm:$0xff]
      %v693 = vld [vmem:[#allocation2 + $0x38] sm:$0xff]
      %v694 = vld [vmem:[#allocation2 + $0x40] sm:$0xff]
      %v695 = vld [vmem:[#allocation2 + $0x48] sm:$0xff]
      %v696 = vld [vmem:[#allocation2 + $0x50] sm:$0xff]
      %v697 = vld [vmem:[#allocation2 + $0x58] sm:$0xff]
      %v698 = vld [vmem:[#allocation2 + $0x60] sm:$0xff]
      %v699 = vld [vmem:[#allocation2 + $0x68] sm:$0xff]
      %v700 = vld [vmem:[#allocation2 + $0x70] sm:$0xff]
      %v701 = vld [vmem:[#allocation2 + $0x78] sm:$0xff]
      %v702 = vld [vmem:[#allocation2 + $0x80] sm:$0xff]
      %v703 = vld [vmem:[#allocation2 + $0x88] sm:$0xff]
      %v704 = vld [vmem:[#allocation2 + $0x90] sm:$0xff]
      %v705 = vld [vmem:[#allocation2 + $0x98] sm:$0xff]
      %v706 = vld [vmem:[#allocation2 + $0xa0] sm:$0xff]
      %v707 = vld [vmem:[#allocation2 + $0xa8] sm:$0xff]
      %v708 = vld [vmem:[#allocation2 + $0xb0] sm:$0xff]
      %v709 = vld [vmem:[#allocation2 + $0xb8] sm:$0xff]
      %v710 = vld [vmem:[#allocation2 + $0xc0] sm:$0xff]
      %v711 = vld [vmem:[#allocation2 + $0xc8] sm:$0xff]
      %v712 = vld [vmem:[#allocation2 + $0xd0] sm:$0xff]
      %v713 = vld [vmem:[#allocation2 + $0xd8] sm:$0xff]
      %v714 = vld [vmem:[#allocation2 + $0xe0] sm:$0xff]
      %v715 = vld [vmem:[#allocation2 + $0xe8] sm:$0xff]
      %v716 = vld [vmem:[#allocation2 + $0xf0] sm:$0xff]
      %v717 = vld [vmem:[#allocation2 + $0xf8] sm:$0xff]
      %v718 = vld [vmem:[#allocation2 + $0x100] sm:$0xff]
      %v719 = vld [vmem:[#allocation2 + $0x108] sm:$0xff]
      %v720 = vld [vmem:[#allocation2 + $0x110] sm:$0xff]
      %v721 = vld [vmem:[#allocation2 + $0x118] sm:$0xff]
      %v722 = vld [vmem:[#allocation2 + $0x120] sm:$0xff]
      %v723 = vld [vmem:[#allocation2 + $0x128] sm:$0xff]
      %v724 = vld [vmem:[#allocation2 + $0x130] sm:$0xff]
      %v725 = vld [vmem:[#allocation2 + $0x138] sm:$0xff]
      %v726 = vld [vmem:[#allocation2 + $0x140] sm:$0xff]
      %v727 = vld [vmem:[#allocation2 + $0x148] sm:$0xff]
      %v728 = vld [vmem:[#allocation2 + $0x150] sm:$0xff]
      %v729 = vld [vmem:[#allocation2 + $0x158] sm:$0xff]
      %v730 = vld [vmem:[#allocation2 + $0x160] sm:$0xff]
      %v731 = vld [vmem:[#allocation2 + $0x168] sm:$0xff]
      %v732 = vld [vmem:[#allocation2 + $0x170] sm:$0xff]
      %v733 = vld [vmem:[#allocation2 + $0x178] sm:$0xff]
      %v734 = vld [vmem:[#allocation2 + $0x180] sm:$0xff]
      %v735 = vld [vmem:[#allocation2 + $0x188] sm:$0xff]
      %v736 = vld [vmem:[#allocation2 + $0x190] sm:$0xff]
      %v737 = vld [vmem:[#allocation2 + $0x198] sm:$0xff]
      %v738 = vld [vmem:[#allocation2 + $0x1a0] sm:$0xff]
      %v739 = vld [vmem:[#allocation2 + $0x1a8] sm:$0xff]
      %v740 = vld [vmem:[#allocation2 + $0x1b0] sm:$0xff]
      %v741 = vld [vmem:[#allocation2 + $0x1b8] sm:$0xff]
      %v742 = vld [vmem:[#allocation2 + $0x1c0] sm:$0xff]
      %v743 = vld [vmem:[#allocation2 + $0x1c8] sm:$0xff]
      %v744 = vld [vmem:[#allocation2 + $0x1d0] sm:$0xff]
      %v745 = vld [vmem:[#allocation2 + $0x1d8] sm:$0xff]
      %v746 = vld [vmem:[#allocation2 + $0x1e0] sm:$0xff]
      %v747 = vld [vmem:[#allocation2 + $0x1e8] sm:$0xff]
      %v748 = vld [vmem:[#allocation2 + $0x1f0] sm:$0xff]
      %v749 = vld [vmem:[#allocation2 + $0x1f8] sm:$0xff]
      %v750 = vld [vmem:[#allocation2 + $0x200] sm:$0xff]
      %v751 = vld [vmem:[#allocation2 + $0x208] sm:$0xff]
      %v752 = vld [vmem:[#allocation2 + $0x210] sm:$0xff]
      %v753 = vld [vmem:[#allocation2 + $0x218] sm:$0xff]
      %v754 = vld [vmem:[#allocation2 + $0x220] sm:$0xff]
      %v755 = vld [vmem:[#allocation2 + $0x228] sm:$0xff]
      %v756 = vld [vmem:[#allocation2 + $0x230] sm:$0xff]
      %v757 = vld [vmem:[#allocation2 + $0x238] sm:$0xff]
      %v758 = vld [vmem:[#allocation2 + $0x240] sm:$0xff]
      %v759 = vld [vmem:[#allocation2 + $0x248] sm:$0xff]
      %v760 = vld [vmem:[#allocation2 + $0x250] sm:$0xff]
      %v761 = vld [vmem:[#allocation2 + $0x258] sm:$0xff]
      %v762 = vld [vmem:[#allocation2 + $0x260] sm:$0xff]
      %v763 = vld [vmem:[#allocation2 + $0x268] sm:$0xff]
      %v764 = vld [vmem:[#allocation2 + $0x270] sm:$0xff]
      %v765 = vld [vmem:[#allocation2 + $0x278] sm:$0xff]
      %v766 = vld [vmem:[#allocation2 + $0x280] sm:$0xff]
      %v767 = vld [vmem:[#allocation2 + $0x288] sm:$0xff]
      %v768 = vld [vmem:[#allocation2 + $0x290] sm:$0xff]
      %v769 = vld [vmem:[#allocation2 + $0x298] sm:$0xff]
      %v770 = vld [vmem:[#allocation2 + $0x2a0] sm:$0xff]
      %v771 = vld [vmem:[#allocation2 + $0x2a8] sm:$0xff]
      %v772 = vld [vmem:[#allocation2 + $0x2b0] sm:$0xff]
      %v773 = vld [vmem:[#allocation2 + $0x2b8] sm:$0xff]
      %v774 = vld [vmem:[#allocation2 + $0x2c0] sm:$0xff]
      %v775 = vld [vmem:[#allocation2 + $0x2c8] sm:$0xff]
      %v776 = vld [vmem:[#allocation2 + $0x2d0] sm:$0xff]
      %v777 = vld [vmem:[#allocation2 + $0x2d8] sm:$0xff]
      %v778 = vld [vmem:[#allocation2 + $0x2e0] sm:$0xff]
      %v779 = vld [vmem:[#allocation2 + $0x2e8] sm:$0xff]
      %v780 = vld [vmem:[#allocation2 + $0x2f0] sm:$0xff]
      %v781 = vld [vmem:[#allocation2 + $0x2f8] sm:$0xff]
      %v782 = vld [vmem:[#allocation2 + $0x300] sm:$0xff]
      %v783 = vld [vmem:[#allocation2 + $0x308] sm:$0xff]
      %v784 = vld [vmem:[#allocation2 + $0x310] sm:$0xff]
      %v785 = vld [vmem:[#allocation2 + $0x318] sm:$0xff]
      %v786 = vld [vmem:[#allocation2 + $0x320] sm:$0xff]
      %v787 = vld [vmem:[#allocation2 + $0x328] sm:$0xff]
      %v788 = vld [vmem:[#allocation2 + $0x330] sm:$0xff]
      %v789 = vld [vmem:[#allocation2 + $0x338] sm:$0xff]
      %v790 = vld [vmem:[#allocation2 + $0x340] sm:$0xff]
      %v791 = vld [vmem:[#allocation2 + $0x348] sm:$0xff]
      %v792 = vld [vmem:[#allocation2 + $0x350] sm:$0xff]
      %v793 = vld [vmem:[#allocation2 + $0x358] sm:$0xff]
      %v794 = vld [vmem:[#allocation2 + $0x360] sm:$0xff]
      %v795 = vld [vmem:[#allocation2 + $0x368] sm:$0xff]
      %v796 = vld [vmem:[#allocation2 + $0x370] sm:$0xff]
      %v797 = vld [vmem:[#allocation2 + $0x378] sm:$0xff]
      %v798 = vld [vmem:[#allocation2 + $0x380] sm:$0xff]
      %v799 = vld [vmem:[#allocation2 + $0x388] sm:$0xff]
      %v800 = vld [vmem:[#allocation2 + $0x390] sm:$0xff]
      %v801 = vld [vmem:[#allocation2 + $0x398] sm:$0xff]
      %v802 = vld [vmem:[#allocation2 + $0x3a0] sm:$0xff]
      %v803 = vld [vmem:[#allocation2 + $0x3a8] sm:$0xff]
      %v804 = vld [vmem:[#allocation2 + $0x3b0] sm:$0xff]
      %v805 = vld [vmem:[#allocation2 + $0x3b8] sm:$0xff]
      %v806 = vld [vmem:[#allocation2 + $0x3c0] sm:$0xff]
      %v807 = vld [vmem:[#allocation2 + $0x3c8] sm:$0xff]
      %v808 = vld [vmem:[#allocation2 + $0x3d0] sm:$0xff]
      %v809 = vld [vmem:[#allocation2 + $0x3d8] sm:$0xff]
      %v810 = vld [vmem:[#allocation2 + $0x3e0] sm:$0xff]
      %v811 = vld [vmem:[#allocation2 + $0x3e8] sm:$0xff]
      %v812 = vld [vmem:[#allocation2 + $0x3f0] sm:$0xff]
      %v813 = vld [vmem:[#allocation2 + $0x3f8] sm:$0xff]
      %v814 = vld [vmem:[#allocation2 + $0x400] sm:$0xff]
      %v815 = vld [vmem:[#allocation2 + $0x408] sm:$0xff]
      %v816 = vld [vmem:[#allocation2 + $0x410] sm:$0xff]
      %v817 = vld [vmem:[#allocation2 + $0x418] sm:$0xff]
      %v818 = vld [vmem:[#allocation2 + $0x420] sm:$0xff]
      %v819 = vld [vmem:[#allocation2 + $0x428] sm:$0xff]
      %v820 = vld [vmem:[#allocation2 + $0x430] sm:$0xff]
      %v821 = vld [vmem:[#allocation2 + $0x438] sm:$0xff]
      %v822 = vld [vmem:[#allocation2 + $0x440] sm:$0xff]
      %v823 = vld [vmem:[#allocation2 + $0x448] sm:$0xff]
      %v824 = vld [vmem:[#allocation2 + $0x450] sm:$0xff]
      %v825 = vld [vmem:[#allocation2 + $0x458] sm:$0xff]
      %v826 = vld [vmem:[#allocation2 + $0x460] sm:$0xff]
      %v827 = vld [vmem:[#allocation2 + $0x468] sm:$0xff]
      %v828 = vld [vmem:[#allocation2 + $0x470] sm:$0xff]
      %v829 = vld [vmem:[#allocation2 + $0x478] sm:$0xff]
      %v830 = vld [vmem:[%s1] sm:$0xf]
      %v831 = vld [vmem:[%s1 + $0x4] sm:$0xf]
      %v832 = vld [vmem:[%s1 + $0x8] sm:$0xf]
      %v833 = vld [vmem:[%s1 + $0xc] sm:$0xf]
      %v834 = vld [vmem:[%s1 + $0x10] sm:$0xf]
      %v835 = vld [vmem:[%s1 + $0x14] sm:$0xf]
      %v836 = vld [vmem:[%s1 + $0x18] sm:$0xf]
      %v837 = vld [vmem:[%s1 + $0x1c] sm:$0xf]
      %v838 = vld [vmem:[%s1 + $0x20] sm:$0xf]
      %v839 = vld [vmem:[%s1 + $0x24] sm:$0xf]
      %v840 = vld [vmem:[%s1 + $0x28] sm:$0xf]
      %v841 = vld [vmem:[%s1 + $0x2c] sm:$0xf]
      %v842 = vld [vmem:[%s1 + $0x30] sm:$0xf]
      %v843 = vld [vmem:[%s1 + $0x34] sm:$0xf]
      %v844 = vld [vmem:[%s1 + $0x38] sm:$0xf]
      %v845 = vld [vmem:[%s1 + $0x3c] sm:$0xf]
      %v846 = vld [vmem:[%s1 + $0x40] sm:$0xf]
      %v847 = vld [vmem:[%s1 + $0x44] sm:$0xf]
      %v848 = vld [vmem:[%s1 + $0x48] sm:$0xf]
      %v849 = vld [vmem:[%s1 + $0x4c] sm:$0xf]
      %v850 = vld [vmem:[%s1 + $0x50] sm:$0xf]
      %v851 = vld [vmem:[%s1 + $0x54] sm:$0xf]
      %v852 = vld [vmem:[%s1 + $0x58] sm:$0xf]
      %v853 = vld [vmem:[%s1 + $0x5c] sm:$0xf]
      %v854 = vld [vmem:[%s1 + $0x60] sm:$0xf]
      %v855 = vld [vmem:[%s1 + $0x64] sm:$0xf]
      %v856 = vld [vmem:[%s1 + $0x68] sm:$0xf]
      %v857 = vld [vmem:[%s1 + $0x6c] sm:$0xf]
      %v858 = vld [vmem:[%s1 + $0x70] sm:$0xf]
      %v859 = vld [vmem:[%s1 + $0x74] sm:$0xf]
      %v860 = vld [vmem:[%s1 + $0x78] sm:$0xf]
      %v861 = vld [vmem:[%s1 + $0x7c] sm:$0xf]
      %v862 = vld [vmem:[%s1 + $0x80] sm:$0xf]
      %v863 = vld [vmem:[%s1 + $0x84] sm:$0xf]
      %v864 = vld [vmem:[%s1 + $0x88] sm:$0xf]
      %v865 = vld [vmem:[%s1 + $0x8c] sm:$0xf]
      %v866 = vld [vmem:[%s1 + $0x90] sm:$0xf]
      %v867 = vld [vmem:[%s1 + $0x94] sm:$0xf]
      %v868 = vld [vmem:[%s1 + $0x98] sm:$0xf]
      %v869 = vld [vmem:[%s1 + $0x9c] sm:$0xf]
      %v870 = vld [vmem:[%s1 + $0xa0] sm:$0xf]
      %v871 = vld [vmem:[%s1 + $0xa4] sm:$0xf]
      %v872 = vld [vmem:[%s1 + $0xa8] sm:$0xf]
      %v873 = vld [vmem:[%s1 + $0xac] sm:$0xf]
      %v874 = vld [vmem:[%s1 + $0xb0] sm:$0xf]
      %v875 = vld [vmem:[%s1 + $0xb4] sm:$0xf]
      %v876 = vld [vmem:[%s1 + $0xb8] sm:$0xf]
      %v877 = vld [vmem:[%s1 + $0xbc] sm:$0xf]
      %v878 = vld [vmem:[%s1 + $0xc0] sm:$0xf]
      %v879 = vld [vmem:[%s1 + $0xc4] sm:$0xf]
      %v880 = vld [vmem:[%s1 + $0xc8] sm:$0xf]
      %v881 = vld [vmem:[%s1 + $0xcc] sm:$0xf]
      %v882 = vld [vmem:[%s1 + $0xd0] sm:$0xf]
      %v883 = vld [vmem:[%s1 + $0xd4] sm:$0xf]
      %v884 = vld [vmem:[%s1 + $0xd8] sm:$0xf]
      %v885 = vld [vmem:[%s1 + $0xdc] sm:$0xf]
      %v886 = vld [vmem:[%s1 + $0xe0] sm:$0xf]
      %v887 = vld [vmem:[%s1 + $0xe4] sm:$0xf]
      %v888 = vld [vmem:[%s1 + $0xe8] sm:$0xf]
      %v889 = vld [vmem:[%s1 + $0xec] sm:$0xf]
      %v890 = vld [vmem:[%s1 + $0xf0] sm:$0xf]
      %v891 = vld [vmem:[%s1 + $0xf4] sm:$0xf]
      %v892 = vld [vmem:[%s1 + $0xf8] sm:$0xf]
      %v893 = vld [vmem:[%s1 + $0xfc] sm:$0xf]
      %v894 = vld [vmem:[%s1 + $0x100] sm:$0xf]
      %v895 = vld [vmem:[%s1 + $0x104] sm:$0xf]
      %v896 = vld [vmem:[%s1 + $0x108] sm:$0xf]
      %v897 = vld [vmem:[%s1 + $0x10c] sm:$0xf]
      %v898 = vld [vmem:[%s1 + $0x110] sm:$0xf]
      %v899 = vld [vmem:[%s1 + $0x114] sm:$0xf]
      %v900 = vld [vmem:[%s1 + $0x118] sm:$0xf]
      %v901 = vld [vmem:[%s1 + $0x11c] sm:$0xf]
      %v902 = vld [vmem:[%s1 + $0x120] sm:$0xf]
      %v903 = vld [vmem:[%s1 + $0x124] sm:$0xf]
      %v904 = vld [vmem:[%s1 + $0x128] sm:$0xf]
      %v905 = vld [vmem:[%s1 + $0x12c] sm:$0xf]
      %v906 = vld [vmem:[%s1 + $0x130] sm:$0xf]
      %v907 = vld [vmem:[%s1 + $0x134] sm:$0xf]
      %v908 = vld [vmem:[%s1 + $0x138] sm:$0xf]
      %v909 = vld [vmem:[%s1 + $0x13c] sm:$0xf]
      %v910 = vld [vmem:[%s1 + $0x140] sm:$0xf]
      %v911 = vld [vmem:[%s1 + $0x144] sm:$0xf]
      %v912 = vld [vmem:[%s1 + $0x148] sm:$0xf]
      %v913 = vld [vmem:[%s1 + $0x14c] sm:$0xf]
      %v914 = vld [vmem:[%s1 + $0x150] sm:$0xf]
      %v915 = vld [vmem:[%s1 + $0x154] sm:$0xf]
      %v916 = vld [vmem:[%s1 + $0x158] sm:$0xf]
      %v917 = vld [vmem:[%s1 + $0x15c] sm:$0xf]
      %v918 = vld [vmem:[%s1 + $0x160] sm:$0xf]
      %v919 = vld [vmem:[%s1 + $0x164] sm:$0xf]
      %v920 = vld [vmem:[%s1 + $0x168] sm:$0xf]
      %v921 = vld [vmem:[%s1 + $0x16c] sm:$0xf]
      %v922 = vld [vmem:[%s1 + $0x170] sm:$0xf]
      %v923 = vld [vmem:[%s1 + $0x174] sm:$0xf]
      %v924 = vld [vmem:[%s1 + $0x178] sm:$0xf]
      %v925 = vld [vmem:[%s1 + $0x17c] sm:$0xf]
      %v926 = vld [vmem:[%s1 + $0x180] sm:$0xf]
      %v927 = vld [vmem:[%s1 + $0x184] sm:$0xf]
      %v928 = vld [vmem:[%s1 + $0x188] sm:$0xf]
      %v929 = vld [vmem:[%s1 + $0x18c] sm:$0xf]
      %v930 = vld [vmem:[%s1 + $0x190] sm:$0xf]
      %v931 = vld [vmem:[%s1 + $0x194] sm:$0xf]
      %v932 = vld [vmem:[%s1 + $0x198] sm:$0xf]
      %v933 = vld [vmem:[%s1 + $0x19c] sm:$0xf]
      %v934 = vld [vmem:[%s1 + $0x1a0] sm:$0xf]
      %v935 = vld [vmem:[%s1 + $0x1a4] sm:$0xf]
      %v936 = vld [vmem:[%s1 + $0x1a8] sm:$0xf]
      %v937 = vld [vmem:[%s1 + $0x1ac] sm:$0xf]
      %v938 = vld [vmem:[%s1 + $0x1b0] sm:$0xf]
      %v939 = vld [vmem:[%s1 + $0x1b4] sm:$0xf]
      %v940 = vld [vmem:[%s1 + $0x1b8] sm:$0xf]
      %v941 = vld [vmem:[%s1 + $0x1bc] sm:$0xf]
      %v942 = vld [vmem:[%s1 + $0x1c0] sm:$0xf]
      %v943 = vld [vmem:[%s1 + $0x1c4] sm:$0xf]
      %v944 = vld [vmem:[%s1 + $0x1c8] sm:$0xf]
      %v945 = vld [vmem:[%s1 + $0x1cc] sm:$0xf]
      %v946 = vld [vmem:[%s1 + $0x1d0] sm:$0xf]
      %v947 = vld [vmem:[%s1 + $0x1d4] sm:$0xf]
      %v948 = vld [vmem:[%s1 + $0x1d8] sm:$0xf]
      %v949 = vld [vmem:[%s1 + $0x1dc] sm:$0xf]
      %v950 = vld [vmem:[%s1 + $0x1e0] sm:$0xf]
      %v951 = vld [vmem:[%s1 + $0x1e4] sm:$0xf]
      %v952 = vld [vmem:[%s1 + $0x1e8] sm:$0xf]
      %v953 = vld [vmem:[%s1 + $0x1ec] sm:$0xf]
      %v954 = vld [vmem:[%s1 + $0x1f0] sm:$0xf]
      %v955 = vld [vmem:[%s1 + $0x1f4] sm:$0xf]
      %v956 = vld [vmem:[%s1 + $0x1f8] sm:$0xf]
      %v957 = vld [vmem:[%s1 + $0x1fc] sm:$0xf]
      %v958 = vld [vmem:[%s1 + $0x200] sm:$0xf]
      %v959 = vld [vmem:[%s1 + $0x204] sm:$0xf]
      %v960 = vld [vmem:[%s1 + $0x208] sm:$0xf]
      %v961 = vld [vmem:[%s1 + $0x20c] sm:$0xf]
      %v962 = vld [vmem:[%s1 + $0x210] sm:$0xf]
      %v963 = vld [vmem:[%s1 + $0x214] sm:$0xf]
      %v964 = vld [vmem:[%s1 + $0x218] sm:$0xf]
      %v965 = vld [vmem:[%s1 + $0x21c] sm:$0xf]
      %v966 = vld [vmem:[%s1 + $0x220] sm:$0xf]
      %v967 = vld [vmem:[%s1 + $0x224] sm:$0xf]
      %v968 = vld [vmem:[%s1 + $0x228] sm:$0xf]
      %v969 = vld [vmem:[%s1 + $0x22c] sm:$0xf]
      %v970 = vld [vmem:[%s1 + $0x230] sm:$0xf]
      %v971 = vld [vmem:[%s1 + $0x234] sm:$0xf]
      %v972 = vld [vmem:[%s1 + $0x238] sm:$0xf]
      %v973 = vld [vmem:[%s1 + $0x23c] sm:$0xf]
      %v1118 = vunpack.c.l.b16 %v830
      %v1119 = vunpack.c.l.b16 %v831
      %v1120 = vunpack.c.l.b16 %v832
      %v1121 = vunpack.c.l.b16 %v833
      %v1122 = vunpack.c.l.b16 %v834
      %v1123 = vunpack.c.l.b16 %v835
      %v1124 = vunpack.c.l.b16 %v836
      %v1125 = vunpack.c.l.b16 %v837
      %v1126 = vunpack.c.l.b16 %v838
      %v1127 = vunpack.c.l.b16 %v839
      %v1128 = vunpack.c.l.b16 %v840
      %v1129 = vunpack.c.l.b16 %v841
      %v1130 = vunpack.c.l.b16 %v842
      %v1131 = vunpack.c.l.b16 %v843
      %v1132 = vunpack.c.l.b16 %v844
      %v1133 = vunpack.c.l.b16 %v845
      %v1134 = vunpack.c.l.b16 %v846
      %v1135 = vunpack.c.l.b16 %v847
      %v1136 = vunpack.c.l.b16 %v848
      %v1137 = vunpack.c.l.b16 %v849
      %v1138 = vunpack.c.l.b16 %v850
      %v1139 = vunpack.c.l.b16 %v851
      %v1140 = vunpack.c.l.b16 %v852
      %v1141 = vunpack.c.l.b16 %v853
      %v1142 = vunpack.c.l.b16 %v854
      %v1143 = vunpack.c.l.b16 %v855
      %v1144 = vunpack.c.l.b16 %v856
      %v1145 = vunpack.c.l.b16 %v857
      %v1146 = vunpack.c.l.b16 %v858
      %v1147 = vunpack.c.l.b16 %v859
      %v1148 = vunpack.c.l.b16 %v860
      %v1149 = vunpack.c.l.b16 %v861
      %v1150 = vunpack.c.l.b16 %v862
      %v1151 = vunpack.c.l.b16 %v863
      %v1152 = vunpack.c.l.b16 %v864
      %v1153 = vunpack.c.l.b16 %v865
      %v1154 = vunpack.c.l.b16 %v866
      %v1155 = vunpack.c.l.b16 %v867
      %v1156 = vunpack.c.l.b16 %v868
      %v1157 = vunpack.c.l.b16 %v869
      %v1158 = vunpack.c.l.b16 %v870
      %v1159 = vunpack.c.l.b16 %v871
      %v1160 = vunpack.c.l.b16 %v872
      %v1161 = vunpack.c.l.b16 %v873
      %v1162 = vunpack.c.l.b16 %v874
      %v1163 = vunpack.c.l.b16 %v875
      %v1164 = vunpack.c.l.b16 %v876
      %v1165 = vunpack.c.l.b16 %v877
      %v1166 = vunpack.c.l.b16 %v878
      %v1167 = vunpack.c.l.b16 %v879
      %v1168 = vunpack.c.l.b16 %v880
      %v1169 = vunpack.c.l.b16 %v881
      %v1170 = vunpack.c.l.b16 %v882
      %v1171 = vunpack.c.l.b16 %v883
      %v1172 = vunpack.c.l.b16 %v884
      %v1173 = vunpack.c.l.b16 %v885
      %v1174 = vunpack.c.l.b16 %v886
      %v1175 = vunpack.c.l.b16 %v887
      %v1176 = vunpack.c.l.b16 %v888
      %v1177 = vunpack.c.l.b16 %v889
      %v1178 = vunpack.c.l.b16 %v890
      %v1179 = vunpack.c.l.b16 %v891
      %v1180 = vunpack.c.l.b16 %v892
      %v1181 = vunpack.c.l.b16 %v893
      %v1182 = vunpack.c.l.b16 %v894
      %v1183 = vunpack.c.l.b16 %v895
      %v1184 = vunpack.c.l.b16 %v896
      %v1185 = vunpack.c.l.b16 %v897
      %v1186 = vunpack.c.l.b16 %v898
      %v1187 = vunpack.c.l.b16 %v899
      %v1188 = vunpack.c.l.b16 %v900
      %v1189 = vunpack.c.l.b16 %v901
      %v1190 = vunpack.c.l.b16 %v902
      %v1191 = vunpack.c.l.b16 %v903
      %v1192 = vunpack.c.l.b16 %v904
      %v1193 = vunpack.c.l.b16 %v905
      %v1194 = vunpack.c.l.b16 %v906
      %v1195 = vunpack.c.l.b16 %v907
      %v1196 = vunpack.c.l.b16 %v908
      %v1197 = vunpack.c.l.b16 %v909
      %v1198 = vunpack.c.l.b16 %v910
      %v1199 = vunpack.c.l.b16 %v911
      %v1200 = vunpack.c.l.b16 %v912
      %v1201 = vunpack.c.l.b16 %v913
      %v1202 = vunpack.c.l.b16 %v914
      %v1203 = vunpack.c.l.b16 %v915
      %v1204 = vunpack.c.l.b16 %v916
      %v1205 = vunpack.c.l.b16 %v917
      %v1206 = vunpack.c.l.b16 %v918
      %v1207 = vunpack.c.l.b16 %v919
      %v1208 = vunpack.c.l.b16 %v920
      %v1209 = vunpack.c.l.b16 %v921
      %v1210 = vunpack.c.l.b16 %v922
      %v1211 = vunpack.c.l.b16 %v923
      %v1212 = vunpack.c.l.b16 %v924
      %v1213 = vunpack.c.l.b16 %v925
      %v1214 = vunpack.c.l.b16 %v926
      %v1215 = vunpack.c.l.b16 %v927
      %v1216 = vunpack.c.l.b16 %v928
      %v1217 = vunpack.c.l.b16 %v929
      %v1218 = vunpack.c.l.b16 %v930
      %v1219 = vunpack.c.l.b16 %v931
      %v1220 = vunpack.c.l.b16 %v932
      %v1221 = vunpack.c.l.b16 %v933
      %v1222 = vunpack.c.l.b16 %v934
      %v1223 = vunpack.c.l.b16 %v935
      %v1224 = vunpack.c.l.b16 %v936
      %v1225 = vunpack.c.l.b16 %v937
      %v1226 = vunpack.c.l.b16 %v938
      %v1227 = vunpack.c.l.b16 %v939
      %v1228 = vunpack.c.l.b16 %v940
      %v1229 = vunpack.c.l.b16 %v941
      %v1230 = vunpack.c.l.b16 %v942
      %v1231 = vunpack.c.l.b16 %v943
      %v1232 = vunpack.c.l.b16 %v944
      %v1233 = vunpack.c.l.b16 %v945
      %v1234 = vunpack.c.l.b16 %v946
      %v1235 = vunpack.c.l.b16 %v947
      %v1236 = vunpack.c.l.b16 %v948
      %v1237 = vunpack.c.l.b16 %v949
      %v1238 = vunpack.c.l.b16 %v950
      %v1239 = vunpack.c.l.b16 %v951
      %v1240 = vunpack.c.l.b16 %v952
      %v1241 = vunpack.c.l.b16 %v953
      %v1242 = vunpack.c.l.b16 %v954
      %v1243 = vunpack.c.l.b16 %v955
      %v1244 = vunpack.c.l.b16 %v956
      %v1245 = vunpack.c.l.b16 %v957
      %v1246 = vunpack.c.l.b16 %v958
      %v1247 = vunpack.c.l.b16 %v959
      %v1248 = vunpack.c.l.b16 %v960
      %v1249 = vunpack.c.l.b16 %v961
      %v1250 = vunpack.c.l.b16 %v962
      %v1251 = vunpack.c.l.b16 %v963
      %v1252 = vunpack.c.l.b16 %v964
      %v1253 = vunpack.c.l.b16 %v965
      %v1254 = vunpack.c.l.b16 %v966
      %v1255 = vunpack.c.l.b16 %v967
      %v1256 = vunpack.c.l.b16 %v968
      %v1257 = vunpack.c.l.b16 %v969
      %v1258 = vunpack.c.l.b16 %v970
      %v1259 = vunpack.c.l.b16 %v971
      %v1260 = vunpack.c.l.b16 %v972
      %v1261 = vunpack.c.l.b16 %v973
      %v1262 = vpack.c.b16 %v1119, %v1118
      %v1263 = vpack.c.b16 %v1121, %v1120
      %v1264 = vpack.c.b16 %v1123, %v1122
      %v1265 = vpack.c.b16 %v1125, %v1124
      %v1266 = vpack.c.b16 %v1127, %v1126
      %v1267 = vpack.c.b16 %v1129, %v1128
      %v1268 = vpack.c.b16 %v1131, %v1130
      %v1269 = vpack.c.b16 %v1133, %v1132
      %v1270 = vpack.c.b16 %v1135, %v1134
      %v1271 = vpack.c.b16 %v1137, %v1136
      %v1272 = vpack.c.b16 %v1139, %v1138
      %v1273 = vpack.c.b16 %v1141, %v1140
      %v1274 = vpack.c.b16 %v1143, %v1142
      %v1275 = vpack.c.b16 %v1145, %v1144
      %v1276 = vpack.c.b16 %v1147, %v1146
      %v1277 = vpack.c.b16 %v1149, %v1148
      %v1278 = vpack.c.b16 %v1151, %v1150
      %v1279 = vpack.c.b16 %v1153, %v1152
      %v1280 = vpack.c.b16 %v1155, %v1154
      %v1281 = vpack.c.b16 %v1157, %v1156
      %v1282 = vpack.c.b16 %v1159, %v1158
      %v1283 = vpack.c.b16 %v1161, %v1160
      %v1284 = vpack.c.b16 %v1163, %v1162
      %v1285 = vpack.c.b16 %v1165, %v1164
      %v1286 = vpack.c.b16 %v1167, %v1166
      %v1287 = vpack.c.b16 %v1169, %v1168
      %v1288 = vpack.c.b16 %v1171, %v1170
      %v1289 = vpack.c.b16 %v1173, %v1172
      %v1290 = vpack.c.b16 %v1175, %v1174
      %v1291 = vpack.c.b16 %v1177, %v1176
      %v1292 = vpack.c.b16 %v1179, %v1178
      %v1293 = vpack.c.b16 %v1181, %v1180
      %v1294 = vpack.c.b16 %v1183, %v1182
      %v1295 = vpack.c.b16 %v1185, %v1184
      %v1296 = vpack.c.b16 %v1187, %v1186
      %v1297 = vpack.c.b16 %v1189, %v1188
      %v1298 = vpack.c.b16 %v1191, %v1190
      %v1299 = vpack.c.b16 %v1193, %v1192
      %v1300 = vpack.c.b16 %v1195, %v1194
      %v1301 = vpack.c.b16 %v1197, %v1196
      %v1302 = vpack.c.b16 %v1199, %v1198
      %v1303 = vpack.c.b16 %v1201, %v1200
      %v1304 = vpack.c.b16 %v1203, %v1202
      %v1305 = vpack.c.b16 %v1205, %v1204
      %v1306 = vpack.c.b16 %v1207, %v1206
      %v1307 = vpack.c.b16 %v1209, %v1208
      %v1308 = vpack.c.b16 %v1211, %v1210
      %v1309 = vpack.c.b16 %v1213, %v1212
      %v1310 = vpack.c.b16 %v1215, %v1214
      %v1311 = vpack.c.b16 %v1217, %v1216
      %v1312 = vpack.c.b16 %v1219, %v1218
      %v1313 = vpack.c.b16 %v1221, %v1220
      %v1314 = vpack.c.b16 %v1223, %v1222
      %v1315 = vpack.c.b16 %v1225, %v1224
      %v1316 = vpack.c.b16 %v1227, %v1226
      %v1317 = vpack.c.b16 %v1229, %v1228
      %v1318 = vpack.c.b16 %v1231, %v1230
      %v1319 = vpack.c.b16 %v1233, %v1232
      %v1320 = vpack.c.b16 %v1235, %v1234
      %v1321 = vpack.c.b16 %v1237, %v1236
      %v1322 = vpack.c.b16 %v1239, %v1238
      %v1323 = vpack.c.b16 %v1241, %v1240
      %v1324 = vpack.c.b16 %v1243, %v1242
      %v1325 = vpack.c.b16 %v1245, %v1244
      %v1326 = vpack.c.b16 %v1247, %v1246
      %v1327 = vpack.c.b16 %v1249, %v1248
      %v1328 = vpack.c.b16 %v1251, %v1250
      %v1329 = vpack.c.b16 %v1253, %v1252
      %v1330 = vpack.c.b16 %v1255, %v1254
      %v1331 = vpack.c.b16 %v1257, %v1256
      %v1332 = vpack.c.b16 %v1259, %v1258
      %v1333 = vpack.c.b16 %v1261, %v1260
      %1406 = vmatprep.subr.bf16.mxu0 0
      %1407 = vmatpush1.bf16.msra.mxu0 %v1262
      %1408 = vmatprep.subr.bf16.mxu0 0
      %1409 = vmatpush1.bf16.msra.mxu0 %v1263
      %1410 = vmatprep.subr.bf16.mxu0 0
      %1411 = vmatpush1.bf16.msra.mxu0 %v1264
      %1412 = vmatprep.subr.bf16.mxu0 0
      %1413 = vmatpush1.bf16.msra.mxu0 %v1265
      %1414 = vmatprep.subr.bf16.mxu0 0
      %1415 = vmatpush1.bf16.msra.mxu0 %v1266
      %1416 = vmatprep.subr.bf16.mxu0 0
      %1417 = vmatpush1.bf16.msra.mxu0 %v1267
      %1418 = vmatprep.subr.bf16.mxu0 0
      %1419 = vmatpush1.bf16.msra.mxu0 %v1268
      %1420 = vmatprep.subr.bf16.mxu0 0
      %1421 = vmatpush1.bf16.msra.mxu0 %v1269
      %1422 = vmatprep.subr.bf16.mxu0 0
      %1423 = vmatpush1.bf16.msra.mxu0 %v1270
      %1424 = vmatprep.subr.bf16.mxu0 0
      %1425 = vmatpush1.bf16.msra.mxu0 %v1271
      %1426 = vmatprep.subr.bf16.mxu0 0
      %1427 = vmatpush1.bf16.msra.mxu0 %v1272
      %1428 = vmatprep.subr.bf16.mxu0 0
      %1429 = vmatpush1.bf16.msra.mxu0 %v1273
      %1430 = vmatprep.subr.bf16.mxu0 0
      %1431 = vmatpush1.bf16.msra.mxu0 %v1274
      %1432 = vmatprep.subr.bf16.mxu0 0
      %1433 = vmatpush1.bf16.msra.mxu0 %v1275
      %1434 = vmatprep.subr.bf16.mxu0 0
      %1435 = vmatpush1.bf16.msra.mxu0 %v1276
      %1436 = vmatprep.subr.bf16.mxu0 0
      %1437 = vmatpush1.bf16.msra.mxu0 %v1277
      %1438 = vmatprep.mubr.bf16.mxu0 %v687
      %1439 = vmatmul.mubr.bf16.gmra.mrb[0].mxu0 %v686
      %v1440 = vpop.f32.mrb[0].mxu0
      %v1441 = vadd.f32 0.0, %v1440
      %v1442 = vpop.f32.mrb[0].mxu0
      %v1443 = vpop.f32.mrb[0].mxu0
      %v1444 = vadd.f32 0.0, %v1443
      %v1445 = vpop.f32.mrb[0].mxu0
      %1446 = vmatprep.mubr.bf16.mxu0 %v696
      %1447 = vmatmul.mubr.bf16.gmra.mrb[0].mxu0 %v695
      %v1448 = vpop.f32.mrb[0].mxu0
      %v1449 = vadd.f32 0.0, %v1448
      %v1450 = vpop.f32.mrb[0].mxu0
      %v1451 = vpop.f32.mrb[0].mxu0
      %v1452 = vadd.f32 0.0, %v1451
      %v1453 = vpop.f32.mrb[0].mxu0
      %1454 = vmatprep.mubr.bf16.mxu0 %v705
      %1455 = vmatmul.mubr.bf16.gmra.mrb[0].mxu0 %v704
      %v1456 = vpop.f32.mrb[0].mxu0
      %v1457 = vadd.f32 0.0, %v1456
      %v1458 = vpop.f32.mrb[0].mxu0
      %v1459 = vpop.f32.mrb[0].mxu0
      %v1460 = vadd.f32 0.0, %v1459
      %v1461 = vpop.f32.mrb[0].mxu0
      %1462 = vmatprep.mubr.bf16.mxu0 %v714
      %1463 = vmatmul.mubr.bf16.gmra.mrb[0].mxu0 %v713
      %v1464 = vpop.f32.mrb[0].mxu0
      %v1465 = vadd.f32 0.0, %v1464
      %v1466 = vpop.f32.mrb[0].mxu0
      %v1467 = vpop.f32.mrb[0].mxu0
      %v1468 = vadd.f32 0.0, %v1467
      %v1469 = vpop.f32.mrb[0].mxu0
      %1470 = vmatprep.mubr.bf16.mxu0 %v723
      %1471 = vmatmul.mubr.bf16.gmra.mrb[0].mxu0 %v722
      %v1472 = vpop.f32.mrb[0].mxu0
      %v1473 = vadd.f32 0.0, %v1472
      %v1474 = vpop.f32.mrb[0].mxu0
      %v1475 = vpop.f32.mrb[0].mxu0
      %v1476 = vadd.f32 0.0, %v1475
      %v1477 = vpop.f32.mrb[0].mxu0
      %1478 = vmatprep.mubr.bf16.mxu0 %v732
      %1479 = vmatmul.mubr.bf16.gmra.mrb[0].mxu0 %v731
      %v1480 = vpop.f32.mrb[0].mxu0
      %v1481 = vadd.f32 0.0, %v1480
      %v1482 = vpop.f32.mrb[0].mxu0
      %v1483 = vpop.f32.mrb[0].mxu0
      %v1484 = vadd.f32 0.0, %v1483
      %v1485 = vpop.f32.mrb[0].mxu0
      %1486 = vmatprep.mubr.bf16.mxu0 %v741
      %1487 = vmatmul.mubr.bf16.gmra.mrb[0].mxu0 %v740
      %v1488 = vpop.f32.mrb[0].mxu0
      %v1489 = vadd.f32 0.0, %v1488
      %v1490 = vpop.f32.mrb[0].mxu0
      %v1491 = vpop.f32.mrb[0].mxu0
      %v1492 = vadd.f32 0.0, %v1491
      %v1493 = vpop.f32.mrb[0].mxu0
      %1494 = vmatprep.mubr.bf16.mxu0 %v750
      %1495 = vmatmul.mubr.bf16.gmra.mrb[0].mxu0 %v749
      %v1496 = vpop.f32.mrb[0].mxu0
      %v1497 = vadd.f32 0.0, %v1496
      %v1498 = vpop.f32.mrb[0].mxu0
      %v1499 = vpop.f32.mrb[0].mxu0
      %v1500 = vadd.f32 0.0, %v1499
      %v1501 = vpop.f32.mrb[0].mxu0
      %1502 = vmatprep.mubr.bf16.mxu0 %v759
      %1503 = vmatmul.mubr.bf16.gmra.mrb[0].mxu0 %v758
      %v1504 = vpop.f32.mrb[0].mxu0
      %v1505 = vadd.f32 0.0, %v1504
      %v1506 = vpop.f32.mrb[0].mxu0
      %v1507 = vpop.f32.mrb[0].mxu0
      %v1508 = vadd.f32 0.0, %v1507
      %v1509 = vpop.f32.mrb[0].mxu0
      %1510 = vmatprep.mubr.bf16.mxu0 %v768
      %1511 = vmatmul.mubr.bf16.gmra.mrb[0].mxu0 %v767
      %v1512 = vpop.f32.mrb[0].mxu0
      %v1513 = vadd.f32 0.0, %v1512
      %v1514 = vpop.f32.mrb[0].mxu0
      %v1515 = vpop.f32.mrb[0].mxu0
      %v1516 = vadd.f32 0.0, %v1515
      %v1517 = vpop.f32.mrb[0].mxu0
      %1518 = vmatprep.mubr.bf16.mxu0 %v777
      %1519 = vmatmul.mubr.bf16.gmra.mrb[0].mxu0 %v776
      %v1520 = vpop.f32.mrb[0].mxu0
      %v1521 = vadd.f32 0.0, %v1520
      %v1522 = vpop.f32.mrb[0].mxu0
      %v1523 = vpop.f32.mrb[0].mxu0
      %v1524 = vadd.f32 0.0, %v1523
      %v1525 = vpop.f32.mrb[0].mxu0
      %1526 = vmatprep.mubr.bf16.mxu0 %v786
      %1527 = vmatmul.mubr.bf16.gmra.mrb[0].mxu0 %v785
      %v1528 = vpop.f32.mrb[0].mxu0
      %v1529 = vadd.f32 0.0, %v1528
      %v1530 = vpop.f32.mrb[0].mxu0
      %v1531 = vpop.f32.mrb[0].mxu0
      %v1532 = vadd.f32 0.0, %v1531
      %v1533 = vpop.f32.mrb[0].mxu0
      %1534 = vmatprep.mubr.bf16.mxu0 %v795
      %1535 = vmatmul.mubr.bf16.gmra.mrb[0].mxu0 %v794
      %v1536 = vpop.f32.mrb[0].mxu0
      %v1537 = vadd.f32 0.0, %v1536
      %v1538 = vpop.f32.mrb[0].mxu0
      %v1539 = vpop.f32.mrb[0].mxu0
      %v1540 = vadd.f32 0.0, %v1539
      %v1541 = vpop.f32.mrb[0].mxu0
      %1542 = vmatprep.mubr.bf16.mxu0 %v804
      %1543 = vmatmul.mubr.bf16.gmra.mrb[0].mxu0 %v803
      %v1544 = vpop.f32.mrb[0].mxu0
      %v1545 = vadd.f32 0.0, %v1544
      %v1546 = vpop.f32.mrb[0].mxu0
      %v1547 = vpop.f32.mrb[0].mxu0
      %v1548 = vadd.f32 0.0, %v1547
      %v1549 = vpop.f32.mrb[0].mxu0
      %1550 = vmatprep.mubr.bf16.mxu0 %v813
      %1551 = vmatmul.mubr.bf16.gmra.mrb[0].mxu0 %v812
      %v1552 = vpop.f32.mrb[0].mxu0
      %v1553 = vadd.f32 0.0, %v1552
      %v1554 = vpop.f32.mrb[0].mxu0
      %v1555 = vpop.f32.mrb[0].mxu0
      %v1556 = vadd.f32 0.0, %v1555
      %v1557 = vpop.f32.mrb[0].mxu0
      %1558 = vmatprep.mubr.bf16.mxu0 %v822
      %1559 = vmatmul.mubr.bf16.gmra.mrb[0].mxu0 %v821
      %v1560 = vpop.f32.mrb[0].mxu0
      %v1561 = vadd.f32 0.0, %v1560
      %v1562 = vpop.f32.mrb[0].mxu0
      %v1563 = vpop.f32.mrb[0].mxu0
      %v1564 = vadd.f32 0.0, %v1563
      %v1565 = vpop.f32.mrb[0].mxu0
      %1566 = vdwg.mxu0
      %1567 = vmatprep.subr.bf16.mxu0 0
      %1568 = vmatpush1.bf16.msra.mxu0 %v1278
      %1569 = vmatprep.subr.bf16.mxu0 0
      %1570 = vmatpush1.bf16.msra.mxu0 %v1279
      %1571 = vmatprep.subr.bf16.mxu0 0
      %1572 = vmatpush1.bf16.msra.mxu0 %v1280
      %1573 = vmatprep.subr.bf16.mxu0 0
      %1574 = vmatpush1.bf16.msra.mxu0 %v1281
      %1575 = vmatprep.subr.bf16.mxu0 0
      %1576 = vmatpush1.bf16.msra.mxu0 %v1282
      %1577 = vmatprep.subr.bf16.mxu0 0
      %1578 = vmatpush1.bf16.msra.mxu0 %v1283
      %1579 = vmatprep.subr.bf16.mxu0 0
      %1580 = vmatpush1.bf16.msra.mxu0 %v1284
      %1581 = vmatprep.subr.bf16.mxu0 0
      %1582 = vmatpush1.bf16.msra.mxu0 %v1285
      %1583 = vmatprep.subr.bf16.mxu0 0
      %1584 = vmatpush1.bf16.msra.mxu0 %v1286
      %1585 = vmatprep.subr.bf16.mxu0 0
      %1586 = vmatpush1.bf16.msra.mxu0 %v1287
      %1587 = vmatprep.subr.bf16.mxu0 0
      %1588 = vmatpush1.bf16.msra.mxu0 %v1288
      %1589 = vmatprep.subr.bf16.mxu0 0
      %1590 = vmatpush1.bf16.msra.mxu0 %v1289
      %1591 = vmatprep.subr.bf16.mxu0 0
      %1592 = vmatpush1.bf16.msra.mxu0 %v1290
      %1593 = vmatprep.subr.bf16.mxu0 0
      %1594 = vmatpush1.bf16.msra.mxu0 %v1291
      %1595 = vmatprep.subr.bf16.mxu0 0
      %1596 = vmatpush1.bf16.msra.mxu0 %v1292
      %1597 = vmatprep.subr.bf16.mxu0 0
      %1598 = vmatpush1.bf16.msra.mxu0 %v1293
      %1599 = vmatprep.mubr.bf16.mxu0 %v689
      %1600 = vmatmul.mubr.bf16.gmra.mrb[0].mxu0 %v688
      %v1601 = vpop.f32.mrb[0].mxu0
      %v1602 = vadd.f32 %v1441, %v1601
      %v1603 = vpop.f32.mrb[0].mxu0
      %v1604 = vpop.f32.mrb[0].mxu0
      %v1605 = vadd.f32 %v1444, %v1604
      %v1606 = vpop.f32.mrb[0].mxu0
      %1607 = vmatprep.mubr.bf16.mxu0 %v698
      %1608 = vmatmul.mubr.bf16.gmra.mrb[0].mxu0 %v697
      %v1609 = vpop.f32.mrb[0].mxu0
      %v1610 = vadd.f32 %v1449, %v1609
      %v1611 = vpop.f32.mrb[0].mxu0
      %v1612 = vpop.f32.mrb[0].mxu0
      %v1613 = vadd.f32 %v1452, %v1612
      %v1614 = vpop.f32.mrb[0].mxu0
      %1615 = vmatprep.mubr.bf16.mxu0 %v707
      %1616 = vmatmul.mubr.bf16.gmra.mrb[0].mxu0 %v706
      %v1617 = vpop.f32.mrb[0].mxu0
      %v1618 = vadd.f32 %v1457, %v1617
      %v1619 = vpop.f32.mrb[0].mxu0
      %v1620 = vpop.f32.mrb[0].mxu0
      %v1621 = vadd.f32 %v1460, %v1620
      %v1622 = vpop.f32.mrb[0].mxu0
      %1623 = vmatprep.mubr.bf16.mxu0 %v716
      %1624 = vmatmul.mubr.bf16.gmra.mrb[0].mxu0 %v715
      %v1625 = vpop.f32.mrb[0].mxu0
      %v1626 = vadd.f32 %v1465, %v1625
      %v1627 = vpop.f32.mrb[0].mxu0
      %v1628 = vpop.f32.mrb[0].mxu0
      %v1629 = vadd.f32 %v1468, %v1628
      %v1630 = vpop.f32.mrb[0].mxu0
      %1631 = vmatprep.mubr.bf16.mxu0 %v725
      %1632 = vmatmul.mubr.bf16.gmra.mrb[0].mxu0 %v724
      %v1633 = vpop.f32.mrb[0].mxu0
      %v1634 = vadd.f32 %v1473, %v1633
      %v1635 = vpop.f32.mrb[0].mxu0
      %v1636 = vpop.f32.mrb[0].mxu0
      %v1637 = vadd.f32 %v1476, %v1636
      %v1638 = vpop.f32.mrb[0].mxu0
      %1639 = vmatprep.mubr.bf16.mxu0 %v734
      %1640 = vmatmul.mubr.bf16.gmra.mrb[0].mxu0 %v733
      %v1641 = vpop.f32.mrb[0].mxu0
      %v1642 = vadd.f32 %v1481, %v1641
      %v1643 = vpop.f32.mrb[0].mxu0
      %v1644 = vpop.f32.mrb[0].mxu0
      %v1645 = vadd.f32 %v1484, %v1644
      %v1646 = vpop.f32.mrb[0].mxu0
      %1647 = vmatprep.mubr.bf16.mxu0 %v743
      %1648 = vmatmul.mubr.bf16.gmra.mrb[0].mxu0 %v742
      %v1649 = vpop.f32.mrb[0].mxu0
      %v1650 = vadd.f32 %v1489, %v1649
      %v1651 = vpop.f32.mrb[0].mxu0
      %v1652 = vpop.f32.mrb[0].mxu0
      %v1653 = vadd.f32 %v1492, %v1652
      %v1654 = vpop.f32.mrb[0].mxu0
      %1655 = vmatprep.mubr.bf16.mxu0 %v752
      %1656 = vmatmul.mubr.bf16.gmra.mrb[0].mxu0 %v751
      %v1657 = vpop.f32.mrb[0].mxu0
      %v1658 = vadd.f32 %v1497, %v1657
      %v1659 = vpop.f32.mrb[0].mxu0
      %v1660 = vpop.f32.mrb[0].mxu0
      %v1661 = vadd.f32 %v1500, %v1660
      %v1662 = vpop.f32.mrb[0].mxu0
      %1663 = vmatprep.mubr.bf16.mxu0 %v761
      %1664 = vmatmul.mubr.bf16.gmra.mrb[0].mxu0 %v760
      %v1665 = vpop.f32.mrb[0].mxu0
      %v1666 = vadd.f32 %v1505, %v1665
      %v1667 = vpop.f32.mrb[0].mxu0
      %v1668 = vpop.f32.mrb[0].mxu0
      %v1669 = vadd.f32 %v1508, %v1668
      %v1670 = vpop.f32.mrb[0].mxu0
      %1671 = vmatprep.mubr.bf16.mxu0 %v770
      %1672 = vmatmul.mubr.bf16.gmra.mrb[0].mxu0 %v769
      %v1673 = vpop.f32.mrb[0].mxu0
      %v1674 = vadd.f32 %v1513, %v1673
      %v1675 = vpop.f32.mrb[0].mxu0
      %v1676 = vpop.f32.mrb[0].mxu0
      %v1677 = vadd.f32 %v1516, %v1676
      %v1678 = vpop.f32.mrb[0].mxu0
      %1679 = vmatprep.mubr.bf16.mxu0 %v779
      %1680 = vmatmul.mubr.bf16.gmra.mrb[0].mxu0 %v778
      %v1681 = vpop.f32.mrb[0].mxu0
      %v1682 = vadd.f32 %v1521, %v1681
      %v1683 = vpop.f32.mrb[0].mxu0
      %v1684 = vpop.f32.mrb[0].mxu0
      %v1685 = vadd.f32 %v1524, %v1684
      %v1686 = vpop.f32.mrb[0].mxu0
      %1687 = vmatprep.mubr.bf16.mxu0 %v788
      %1688 = vmatmul.mubr.bf16.gmra.mrb[0].mxu0 %v787
      %v1689 = vpop.f32.mrb[0].mxu0
      %v1690 = vadd.f32 %v1529, %v1689
      %v1691 = vpop.f32.mrb[0].mxu0
      %v1692 = vpop.f32.mrb[0].mxu0
      %v1693 = vadd.f32 %v1532, %v1692
      %v1694 = vpop.f32.mrb[0].mxu0
      %1695 = vmatprep.mubr.bf16.mxu0 %v797
      %1696 = vmatmul.mubr.bf16.gmra.mrb[0].mxu0 %v796
      %v1697 = vpop.f32.mrb[0].mxu0
      %v1698 = vadd.f32 %v1537, %v1697
      %v1699 = vpop.f32.mrb[0].mxu0
      %v1700 = vpop.f32.mrb[0].mxu0
      %v1701 = vadd.f32 %v1540, %v1700
      %v1702 = vpop.f32.mrb[0].mxu0
      %1703 = vmatprep.mubr.bf16.mxu0 %v806
      %1704 = vmatmul.mubr.bf16.gmra.mrb[0].mxu0 %v805
      %v1705 = vpop.f32.mrb[0].mxu0
      %v1706 = vadd.f32 %v1545, %v1705
      %v1707 = vpop.f32.mrb[0].mxu0
      %v1708 = vpop.f32.mrb[0].mxu0
      %v1709 = vadd.f32 %v1548, %v1708
      %v1710 = vpop.f32.mrb[0].mxu0
      %1711 = vmatprep.mubr.bf16.mxu0 %v815
      %1712 = vmatmul.mubr.bf16.gmra.mrb[0].mxu0 %v814
      %v1713 = vpop.f32.mrb[0].mxu0
      %v1714 = vadd.f32 %v1553, %v1713
      %v1715 = vpop.f32.mrb[0].mxu0
      %v1716 = vpop.f32.mrb[0].mxu0
      %v1717 = vadd.f32 %v1556, %v1716
      %v1718 = vpop.f32.mrb[0].mxu0
      %1719 = vmatprep.mubr.bf16.mxu0 %v824
      %1720 = vmatmul.mubr.bf16.gmra.mrb[0].mxu0 %v823
      %v1721 = vpop.f32.mrb[0].mxu0
      %v1722 = vadd.f32 %v1561, %v1721
      %v1723 = vpop.f32.mrb[0].mxu0
      %v1724 = vpop.f32.mrb[0].mxu0
      %v1725 = vadd.f32 %v1564, %v1724
      %v1726 = vpop.f32.mrb[0].mxu0
      %1727 = vdwg.mxu0
      %1728 = vmatprep.subr.bf16.mxu0 0
      %1729 = vmatpush1.bf16.msra.mxu0 %v1294
      %1730 = vmatprep.subr.bf16.mxu0 0
      %1731 = vmatpush1.bf16.msra.mxu0 %v1295
      %1732 = vmatprep.subr.bf16.mxu0 0
      %1733 = vmatpush1.bf16.msra.mxu0 %v1296
      %1734 = vmatprep.subr.bf16.mxu0 0
      %1735 = vmatpush1.bf16.msra.mxu0 %v1297
      %1736 = vmatprep.subr.bf16.mxu0 0
      %1737 = vmatpush1.bf16.msra.mxu0 %v1298
      %1738 = vmatprep.subr.bf16.mxu0 0
      %1739 = vmatpush1.bf16.msra.mxu0 %v1299
      %1740 = vmatprep.subr.bf16.mxu0 0
      %1741 = vmatpush1.bf16.msra.mxu0 %v1300
      %1742 = vmatprep.subr.bf16.mxu0 0
      %1743 = vmatpush1.bf16.msra.mxu0 %v1301
      %1744 = vmatprep.subr.bf16.mxu0 0
      %1745 = vmatpush1.bf16.msra.mxu0 %v1302
      %1746 = vmatprep.subr.bf16.mxu0 0
      %1747 = vmatpush1.bf16.msra.mxu0 %v1303
      %1748 = vmatprep.subr.bf16.mxu0 0
      %1749 = vmatpush1.bf16.msra.mxu0 %v1304
      %1750 = vmatprep.subr.bf16.mxu0 0
      %1751 = vmatpush1.bf16.msra.mxu0 %v1305
      %1752 = vmatprep.subr.bf16.mxu0 0
      %1753 = vmatpush1.bf16.msra.mxu0 %v1306
      %1754 = vmatprep.subr.bf16.mxu0 0
      %1755 = vmatpush1.bf16.msra.mxu0 %v1307
      %1756 = vmatprep.subr.bf16.mxu0 0
      %1757 = vmatpush1.bf16.msra.mxu0 %v1308
      %1758 = vmatprep.subr.bf16.mxu0 0
      %1759 = vmatpush1.bf16.msra.mxu0 %v1309
      %1760 = vmatprep.mubr.bf16.mxu0 %v691
      %1761 = vmatmul.mubr.bf16.gmra.mrb[0].mxu0 %v690
      %v1762 = vpop.f32.mrb[0].mxu0
      %v1763 = vadd.f32 %v1602, %v1762
      %v1764 = vpop.f32.mrb[0].mxu0
      %v1765 = vpop.f32.mrb[0].mxu0
      %v1766 = vadd.f32 %v1605, %v1765
      %v1767 = vpop.f32.mrb[0].mxu0
      %1768 = vmatprep.mubr.bf16.mxu0 %v700
      %1769 = vmatmul.mubr.bf16.gmra.mrb[0].mxu0 %v699
      %v1770 = vpop.f32.mrb[0].mxu0
      %v1771 = vadd.f32 %v1610, %v1770
      %v1772 = vpop.f32.mrb[0].mxu0
      %v1773 = vpop.f32.mrb[0].mxu0
      %v1774 = vadd.f32 %v1613, %v1773
      %v1775 = vpop.f32.mrb[0].mxu0
      %1776 = vmatprep.mubr.bf16.mxu0 %v709
      %1777 = vmatmul.mubr.bf16.gmra.mrb[0].mxu0 %v708
      %v1778 = vpop.f32.mrb[0].mxu0
      %v1779 = vadd.f32 %v1618, %v1778
      %v1780 = vpop.f32.mrb[0].mxu0
      %v1781 = vpop.f32.mrb[0].mxu0
      %v1782 = vadd.f32 %v1621, %v1781
      %v1783 = vpop.f32.mrb[0].mxu0
      %1784 = vmatprep.mubr.bf16.mxu0 %v718
      %1785 = vmatmul.mubr.bf16.gmra.mrb[0].mxu0 %v717
      %v1786 = vpop.f32.mrb[0].mxu0
      %v1787 = vadd.f32 %v1626, %v1786
      %v1788 = vpop.f32.mrb[0].mxu0
      %v1789 = vpop.f32.mrb[0].mxu0
      %v1790 = vadd.f32 %v1629, %v1789
      %v1791 = vpop.f32.mrb[0].mxu0
      %1792 = vmatprep.mubr.bf16.mxu0 %v727
      %1793 = vmatmul.mubr.bf16.gmra.mrb[0].mxu0 %v726
      %v1794 = vpop.f32.mrb[0].mxu0
      %v1795 = vadd.f32 %v1634, %v1794
      %v1796 = vpop.f32.mrb[0].mxu0
      %v1797 = vpop.f32.mrb[0].mxu0
      %v1798 = vadd.f32 %v1637, %v1797
      %v1799 = vpop.f32.mrb[0].mxu0
      %1800 = vmatprep.mubr.bf16.mxu0 %v736
      %1801 = vmatmul.mubr.bf16.gmra.mrb[0].mxu0 %v735
      %v1802 = vpop.f32.mrb[0].mxu0
      %v1803 = vadd.f32 %v1642, %v1802
      %v1804 = vpop.f32.mrb[0].mxu0
      %v1805 = vpop.f32.mrb[0].mxu0
      %v1806 = vadd.f32 %v1645, %v1805
      %v1807 = vpop.f32.mrb[0].mxu0
      %1808 = vmatprep.mubr.bf16.mxu0 %v745
      %1809 = vmatmul.mubr.bf16.gmra.mrb[0].mxu0 %v744
      %v1810 = vpop.f32.mrb[0].mxu0
      %v1811 = vadd.f32 %v1650, %v1810
      %v1812 = vpop.f32.mrb[0].mxu0
      %v1813 = vpop.f32.mrb[0].mxu0
      %v1814 = vadd.f32 %v1653, %v1813
      %v1815 = vpop.f32.mrb[0].mxu0
      %1816 = vmatprep.mubr.bf16.mxu0 %v754
      %1817 = vmatmul.mubr.bf16.gmra.mrb[0].mxu0 %v753
      %v1818 = vpop.f32.mrb[0].mxu0
      %v1819 = vadd.f32 %v1658, %v1818
      %v1820 = vpop.f32.mrb[0].mxu0
      %v1821 = vpop.f32.mrb[0].mxu0
      %v1822 = vadd.f32 %v1661, %v1821
      %v1823 = vpop.f32.mrb[0].mxu0
      %1824 = vmatprep.mubr.bf16.mxu0 %v763
      %1825 = vmatmul.mubr.bf16.gmra.mrb[0].mxu0 %v762
      %v1826 = vpop.f32.mrb[0].mxu0
      %v1827 = vadd.f32 %v1666, %v1826
      %v1828 = vpop.f32.mrb[0].mxu0
      %v1829 = vpop.f32.mrb[0].mxu0
      %v1830 = vadd.f32 %v1669, %v1829
      %v1831 = vpop.f32.mrb[0].mxu0
      %1832 = vmatprep.mubr.bf16.mxu0 %v772
      %1833 = vmatmul.mubr.bf16.gmra.mrb[0].mxu0 %v771
      %v1834 = vpop.f32.mrb[0].mxu0
      %v1835 = vadd.f32 %v1674, %v1834
      %v1836 = vpop.f32.mrb[0].mxu0
      %v1837 = vpop.f32.mrb[0].mxu0
      %v1838 = vadd.f32 %v1677, %v1837
      %v1839 = vpop.f32.mrb[0].mxu0
      %1840 = vmatprep.mubr.bf16.mxu0 %v781
      %1841 = vmatmul.mubr.bf16.gmra.mrb[0].mxu0 %v780
      %v1842 = vpop.f32.mrb[0].mxu0
      %v1843 = vadd.f32 %v1682, %v1842
      %v1844 = vpop.f32.mrb[0].mxu0
      %v1845 = vpop.f32.mrb[0].mxu0
      %v1846 = vadd.f32 %v1685, %v1845
      %v1847 = vpop.f32.mrb[0].mxu0
      %1848 = vmatprep.mubr.bf16.mxu0 %v790
      %1849 = vmatmul.mubr.bf16.gmra.mrb[0].mxu0 %v789
      %v1850 = vpop.f32.mrb[0].mxu0
      %v1851 = vadd.f32 %v1690, %v1850
      %v1852 = vpop.f32.mrb[0].mxu0
      %v1853 = vpop.f32.mrb[0].mxu0
      %v1854 = vadd.f32 %v1693, %v1853
      %v1855 = vpop.f32.mrb[0].mxu0
      %1856 = vmatprep.mubr.bf16.mxu0 %v799
      %1857 = vmatmul.mubr.bf16.gmra.mrb[0].mxu0 %v798
      %v1858 = vpop.f32.mrb[0].mxu0
      %v1859 = vadd.f32 %v1698, %v1858
      %v1860 = vpop.f32.mrb[0].mxu0
      %v1861 = vpop.f32.mrb[0].mxu0
      %v1862 = vadd.f32 %v1701, %v1861
      %v1863 = vpop.f32.mrb[0].mxu0
      %1864 = vmatprep.mubr.bf16.mxu0 %v808
      %1865 = vmatmul.mubr.bf16.gmra.mrb[0].mxu0 %v807
      %v1866 = vpop.f32.mrb[0].mxu0
      %v1867 = vadd.f32 %v1706, %v1866
      %v1868 = vpop.f32.mrb[0].mxu0
      %v1869 = vpop.f32.mrb[0].mxu0
      %v1870 = vadd.f32 %v1709, %v1869
      %v1871 = vpop.f32.mrb[0].mxu0
      %1872 = vmatprep.mubr.bf16.mxu0 %v817
      %1873 = vmatmul.mubr.bf16.gmra.mrb[0].mxu0 %v816
      %v1874 = vpop.f32.mrb[0].mxu0
      %v1875 = vadd.f32 %v1714, %v1874
      %v1876 = vpop.f32.mrb[0].mxu0
      %v1877 = vpop.f32.mrb[0].mxu0
      %v1878 = vadd.f32 %v1717, %v1877
      %v1879 = vpop.f32.mrb[0].mxu0
      %1880 = vmatprep.mubr.bf16.mxu0 %v826
      %1881 = vmatmul.mubr.bf16.gmra.mrb[0].mxu0 %v825
      %v1882 = vpop.f32.mrb[0].mxu0
      %v1883 = vadd.f32 %v1722, %v1882
      %v1884 = vpop.f32.mrb[0].mxu0
      %v1885 = vpop.f32.mrb[0].mxu0
      %v1886 = vadd.f32 %v1725, %v1885
      %v1887 = vpop.f32.mrb[0].mxu0
      %1888 = vdwg.mxu0
      %1889 = vmatprep.subr.bf16.mxu0 0
      %1890 = vmatpush1.bf16.msra.mxu0 %v1310
      %1891 = vmatprep.subr.bf16.mxu0 0
      %1892 = vmatpush1.bf16.msra.mxu0 %v1311
      %1893 = vmatprep.subr.bf16.mxu0 0
      %1894 = vmatpush1.bf16.msra.mxu0 %v1312
      %1895 = vmatprep.subr.bf16.mxu0 0
      %1896 = vmatpush1.bf16.msra.mxu0 %v1313
      %1897 = vmatprep.subr.bf16.mxu0 0
      %1898 = vmatpush1.bf16.msra.mxu0 %v1314
      %1899 = vmatprep.subr.bf16.mxu0 0
      %1900 = vmatpush1.bf16.msra.mxu0 %v1315
      %1901 = vmatprep.subr.bf16.mxu0 0
      %1902 = vmatpush1.bf16.msra.mxu0 %v1316
      %1903 = vmatprep.subr.bf16.mxu0 0
      %1904 = vmatpush1.bf16.msra.mxu0 %v1317
      %1905 = vmatprep.subr.bf16.mxu0 0
      %1906 = vmatpush1.bf16.msra.mxu0 %v1318
      %1907 = vmatprep.subr.bf16.mxu0 0
      %1908 = vmatpush1.bf16.msra.mxu0 %v1319
      %1909 = vmatprep.subr.bf16.mxu0 0
      %1910 = vmatpush1.bf16.msra.mxu0 %v1320
      %1911 = vmatprep.subr.bf16.mxu0 0
      %1912 = vmatpush1.bf16.msra.mxu0 %v1321
      %1913 = vmatprep.subr.bf16.mxu0 0
      %1914 = vmatpush1.bf16.msra.mxu0 %v1322
      %1915 = vmatprep.subr.bf16.mxu0 0
      %1916 = vmatpush1.bf16.msra.mxu0 %v1323
      %1917 = vmatprep.subr.bf16.mxu0 0
      %1918 = vmatpush1.bf16.msra.mxu0 %v1324
      %1919 = vmatprep.subr.bf16.mxu0 0
      %1920 = vmatpush1.bf16.msra.mxu0 %v1325
      %1921 = vmatprep.mubr.bf16.mxu0 %v693
      %1922 = vmatmul.mubr.bf16.gmra.mrb[0].mxu0 %v692
      %v1923 = vpop.f32.mrb[0].mxu0
      %v1924 = vadd.f32 %v1763, %v1923
      %v1925 = vpop.f32.mrb[0].mxu0
      %v1926 = vpop.f32.mrb[0].mxu0
      %v1927 = vadd.f32 %v1766, %v1926
      %v1928 = vpop.f32.mrb[0].mxu0
      %1929 = vmatprep.mubr.bf16.mxu0 %v702
      %1930 = vmatmul.mubr.bf16.gmra.mrb[0].mxu0 %v701
      %v1931 = vpop.f32.mrb[0].mxu0
      %v1932 = vadd.f32 %v1771, %v1931
      %v1933 = vpop.f32.mrb[0].mxu0
      %v1934 = vpop.f32.mrb[0].mxu0
      %v1935 = vadd.f32 %v1774, %v1934
      %v1936 = vpop.f32.mrb[0].mxu0
      %1937 = vmatprep.mubr.bf16.mxu0 %v711
      %1938 = vmatmul.mubr.bf16.gmra.mrb[0].mxu0 %v710
      %v1939 = vpop.f32.mrb[0].mxu0
      %v1940 = vadd.f32 %v1779, %v1939
      %v1941 = vpop.f32.mrb[0].mxu0
      %v1942 = vpop.f32.mrb[0].mxu0
      %v1943 = vadd.f32 %v1782, %v1942
      %v1944 = vpop.f32.mrb[0].mxu0
      %1945 = vmatprep.mubr.bf16.mxu0 %v720
      %1946 = vmatmul.mubr.bf16.gmra.mrb[0].mxu0 %v719
      %v1947 = vpop.f32.mrb[0].mxu0
      %v1948 = vadd.f32 %v1787, %v1947
      %v1949 = vpop.f32.mrb[0].mxu0
      %v1950 = vpop.f32.mrb[0].mxu0
      %v1951 = vadd.f32 %v1790, %v1950
      %v1952 = vpop.f32.mrb[0].mxu0
      %1953 = vmatprep.mubr.bf16.mxu0 %v729
      %1954 = vmatmul.mubr.bf16.gmra.mrb[0].mxu0 %v728
      %v1955 = vpop.f32.mrb[0].mxu0
      %v1956 = vadd.f32 %v1795, %v1955
      %v1957 = vpop.f32.mrb[0].mxu0
      %v1958 = vpop.f32.mrb[0].mxu0
      %v1959 = vadd.f32 %v1798, %v1958
      %v1960 = vpop.f32.mrb[0].mxu0
      %1961 = vmatprep.mubr.bf16.mxu0 %v738
      %1962 = vmatmul.mubr.bf16.gmra.mrb[0].mxu0 %v737
      %v1963 = vpop.f32.mrb[0].mxu0
      %v1964 = vadd.f32 %v1803, %v1963
      %v1965 = vpop.f32.mrb[0].mxu0
      %v1966 = vpop.f32.mrb[0].mxu0
      %v1967 = vadd.f32 %v1806, %v1966
      %v1968 = vpop.f32.mrb[0].mxu0
      %1969 = vmatprep.mubr.bf16.mxu0 %v747
      %1970 = vmatmul.mubr.bf16.gmra.mrb[0].mxu0 %v746
      %v1971 = vpop.f32.mrb[0].mxu0
      %v1972 = vadd.f32 %v1811, %v1971
      %v1973 = vpop.f32.mrb[0].mxu0
      %v1974 = vpop.f32.mrb[0].mxu0
      %v1975 = vadd.f32 %v1814, %v1974
      %v1976 = vpop.f32.mrb[0].mxu0
      %1977 = vmatprep.mubr.bf16.mxu0 %v756
      %1978 = vmatmul.mubr.bf16.gmra.mrb[0].mxu0 %v755
      %v1979 = vpop.f32.mrb[0].mxu0
      %v1980 = vadd.f32 %v1819, %v1979
      %v1981 = vpop.f32.mrb[0].mxu0
      %v1982 = vpop.f32.mrb[0].mxu0
      %v1983 = vadd.f32 %v1822, %v1982
      %v1984 = vpop.f32.mrb[0].mxu0
      %1985 = vmatprep.mubr.bf16.mxu0 %v765
      %1986 = vmatmul.mubr.bf16.gmra.mrb[0].mxu0 %v764
      %v1987 = vpop.f32.mrb[0].mxu0
      %v1988 = vadd.f32 %v1827, %v1987
      %v1989 = vpop.f32.mrb[0].mxu0
      %v1990 = vpop.f32.mrb[0].mxu0
      %v1991 = vadd.f32 %v1830, %v1990
      %v1992 = vpop.f32.mrb[0].mxu0
      %1993 = vmatprep.mubr.bf16.mxu0 %v774
      %1994 = vmatmul.mubr.bf16.gmra.mrb[0].mxu0 %v773
      %v1995 = vpop.f32.mrb[0].mxu0
      %v1996 = vadd.f32 %v1835, %v1995
      %v1997 = vpop.f32.mrb[0].mxu0
      %v1998 = vpop.f32.mrb[0].mxu0
      %v1999 = vadd.f32 %v1838, %v1998
      %v2000 = vpop.f32.mrb[0].mxu0
      %2001 = vmatprep.mubr.bf16.mxu0 %v783
      %2002 = vmatmul.mubr.bf16.gmra.mrb[0].mxu0 %v782
      %v2003 = vpop.f32.mrb[0].mxu0
      %v2004 = vadd.f32 %v1843, %v2003
      %v2005 = vpop.f32.mrb[0].mxu0
      %v2006 = vpop.f32.mrb[0].mxu0
      %v2007 = vadd.f32 %v1846, %v2006
      %v2008 = vpop.f32.mrb[0].mxu0
      %2009 = vmatprep.mubr.bf16.mxu0 %v792
      %2010 = vmatmul.mubr.bf16.gmra.mrb[0].mxu0 %v791
      %v2011 = vpop.f32.mrb[0].mxu0
      %v2012 = vadd.f32 %v1851, %v2011
      %v2013 = vpop.f32.mrb[0].mxu0
      %v2014 = vpop.f32.mrb[0].mxu0
      %v2015 = vadd.f32 %v1854, %v2014
      %v2016 = vpop.f32.mrb[0].mxu0
      %2017 = vmatprep.mubr.bf16.mxu0 %v801
      %2018 = vmatmul.mubr.bf16.gmra.mrb[0].mxu0 %v800
      %v2019 = vpop.f32.mrb[0].mxu0
      %v2020 = vadd.f32 %v1859, %v2019
      %v2021 = vpop.f32.mrb[0].mxu0
      %v2022 = vpop.f32.mrb[0].mxu0
      %v2023 = vadd.f32 %v1862, %v2022
      %v2024 = vpop.f32.mrb[0].mxu0
      %2025 = vmatprep.mubr.bf16.mxu0 %v810
      %2026 = vmatmul.mubr.bf16.gmra.mrb[0].mxu0 %v809
      %v2027 = vpop.f32.mrb[0].mxu0
      %v2028 = vadd.f32 %v1867, %v2027
      %v2029 = vpop.f32.mrb[0].mxu0
      %v2030 = vpop.f32.mrb[0].mxu0
      %v2031 = vadd.f32 %v1870, %v2030
      %v2032 = vpop.f32.mrb[0].mxu0
      %2033 = vmatprep.mubr.bf16.mxu0 %v819
      %2034 = vmatmul.mubr.bf16.gmra.mrb[0].mxu0 %v818
      %v2035 = vpop.f32.mrb[0].mxu0
      %v2036 = vadd.f32 %v1875, %v2035
      %v2037 = vpop.f32.mrb[0].mxu0
      %v2038 = vpop.f32.mrb[0].mxu0
      %v2039 = vadd.f32 %v1878, %v2038
      %v2040 = vpop.f32.mrb[0].mxu0
      %2041 = vmatprep.mubr.bf16.mxu0 %v828
      %2042 = vmatmul.mubr.bf16.gmra.mrb[0].mxu0 %v827
      %v2043 = vpop.f32.mrb[0].mxu0
      %v2044 = vadd.f32 %v1883, %v2043
      %v2045 = vpop.f32.mrb[0].mxu0
      %v2046 = vpop.f32.mrb[0].mxu0
      %v2047 = vadd.f32 %v1886, %v2046
      %v2048 = vpop.f32.mrb[0].mxu0
      %2049 = vdwg.mxu0
      %2050 = vmatprep.subr.bf16.mxu0 0
      %2051 = vmatpush1.bf16.msra.mxu0 %v1326
      %2052 = vmatprep.subr.bf16.mxu0 0
      %2053 = vmatpush1.bf16.msra.mxu0 %v1327
      %2054 = vmatprep.subr.bf16.mxu0 0
      %2055 = vmatpush1.bf16.msra.mxu0 %v1328
      %2056 = vmatprep.subr.bf16.mxu0 0
      %2057 = vmatpush1.bf16.msra.mxu0 %v1329
      %2058 = vmatprep.subr.bf16.mxu0 0
      %2059 = vmatpush1.bf16.msra.mxu0 %v1330
      %2060 = vmatprep.subr.bf16.mxu0 0
      %2061 = vmatpush1.bf16.msra.mxu0 %v1331
      %2062 = vmatprep.subr.bf16.mxu0 0
      %2063 = vmatpush1.bf16.msra.mxu0 %v1332
      %2064 = vmatprep.subr.bf16.mxu0 0
      %2065 = vmatpush1.bf16.msra.mxu0 %v1333
      %2066 = vmatprep.subr.bf16.mxu0 0
      %2067 = vmatpush1.bf16.msra.mxu0 0
      %2068 = vmatprep.subr.bf16.mxu0 0
      %2069 = vmatpush1.bf16.msra.mxu0 0
      %2070 = vmatprep.subr.bf16.mxu0 0
      %2071 = vmatpush1.bf16.msra.mxu0 0
      %2072 = vmatprep.subr.bf16.mxu0 0
      %2073 = vmatpush1.bf16.msra.mxu0 0
      %2074 = vmatprep.subr.bf16.mxu0 0
      %2075 = vmatpush1.bf16.msra.mxu0 0
      %2076 = vmatprep.subr.bf16.mxu0 0
      %2077 = vmatpush1.bf16.msra.mxu0 0
      %2078 = vmatprep.subr.bf16.mxu0 0
      %2079 = vmatpush1.bf16.msra.mxu0 0
      %2080 = vmatprep.subr.bf16.mxu0 0
      %2081 = vmatpush1.bf16.msra.mxu0 0
      %2082 = vmatprep.mubr.bf16.mxu0 0
      %2083 = vmatmul.mubr.bf16.gmra.mrb[0].mxu0 %v694
      %v2084 = vpop.f32.mrb[0].mxu0
      %v2085 = vadd.f32 %v1924, %v2084
      %v2086 = vpop.f32.mrb[0].mxu0
      %v2087 = vpop.f32.mrb[0].mxu0
      %v2088 = vadd.f32 %v1927, %v2087
      %v2089 = vpop.f32.mrb[0].mxu0
      %2090 = vmatprep.mubr.bf16.mxu0 0
      %2091 = vmatmul.mubr.bf16.gmra.mrb[0].mxu0 %v703
      %v2092 = vpop.f32.mrb[0].mxu0
      %v2093 = vadd.f32 %v1932, %v2092
      %v2094 = vpop.f32.mrb[0].mxu0
      %v2095 = vpop.f32.mrb[0].mxu0
      %v2096 = vadd.f32 %v1935, %v2095
      %v2097 = vpop.f32.mrb[0].mxu0
      %2098 = vmatprep.mubr.bf16.mxu0 0
      %2099 = vmatmul.mubr.bf16.gmra.mrb[0].mxu0 %v712
      %v2100 = vpop.f32.mrb[0].mxu0
      %v2101 = vadd.f32 %v1940, %v2100
      %v2102 = vpop.f32.mrb[0].mxu0
      %v2103 = vpop.f32.mrb[0].mxu0
      %v2104 = vadd.f32 %v1943, %v2103
      %v2105 = vpop.f32.mrb[0].mxu0
      %2106 = vmatprep.mubr.bf16.mxu0 0
      %2107 = vmatmul.mubr.bf16.gmra.mrb[0].mxu0 %v721
      %v2108 = vpop.f32.mrb[0].mxu0
      %v2109 = vadd.f32 %v1948, %v2108
      %v2110 = vpop.f32.mrb[0].mxu0
      %v2111 = vpop.f32.mrb[0].mxu0
      %v2112 = vadd.f32 %v1951, %v2111
      %v2113 = vpop.f32.mrb[0].mxu0
      %2114 = vmatprep.mubr.bf16.mxu0 0
      %2115 = vmatmul.mubr.bf16.gmra.mrb[0].mxu0 %v730
      %v2116 = vpop.f32.mrb[0].mxu0
      %v2117 = vadd.f32 %v1956, %v2116
      %v2118 = vpop.f32.mrb[0].mxu0
      %v2119 = vpop.f32.mrb[0].mxu0
      %v2120 = vadd.f32 %v1959, %v2119
      %v2121 = vpop.f32.mrb[0].mxu0
      %2122 = vmatprep.mubr.bf16.mxu0 0
      %2123 = vmatmul.mubr.bf16.gmra.mrb[0].mxu0 %v739
      %v2124 = vpop.f32.mrb[0].mxu0
      %v2125 = vadd.f32 %v1964, %v2124
      %v2126 = vpop.f32.mrb[0].mxu0
      %v2127 = vpop.f32.mrb[0].mxu0
      %v2128 = vadd.f32 %v1967, %v2127
      %v2129 = vpop.f32.mrb[0].mxu0
      %2130 = vmatprep.mubr.bf16.mxu0 0
      %2131 = vmatmul.mubr.bf16.gmra.mrb[0].mxu0 %v748
      %v2132 = vpop.f32.mrb[0].mxu0
      %v2133 = vadd.f32 %v1972, %v2132
      %v2134 = vpop.f32.mrb[0].mxu0
      %v2135 = vpop.f32.mrb[0].mxu0
      %v2136 = vadd.f32 %v1975, %v2135
      %v2137 = vpop.f32.mrb[0].mxu0
      %2138 = vmatprep.mubr.bf16.mxu0 0
      %2139 = vmatmul.mubr.bf16.gmra.mrb[0].mxu0 %v757
      %v2140 = vpop.f32.mrb[0].mxu0
      %v2141 = vadd.f32 %v1980, %v2140
      %v2142 = vpop.f32.mrb[0].mxu0
      %v2143 = vpop.f32.mrb[0].mxu0
      %v2144 = vadd.f32 %v1983, %v2143
      %v2145 = vpop.f32.mrb[0].mxu0
      %2146 = vmatprep.mubr.bf16.mxu0 0
      %2147 = vmatmul.mubr.bf16.gmra.mrb[0].mxu0 %v766
      %v2148 = vpop.f32.mrb[0].mxu0
      %v2149 = vadd.f32 %v1988, %v2148
      %v2150 = vpop.f32.mrb[0].mxu0
      %v2151 = vpop.f32.mrb[0].mxu0
      %v2152 = vadd.f32 %v1991, %v2151
      %v2153 = vpop.f32.mrb[0].mxu0
      %2154 = vmatprep.mubr.bf16.mxu0 0
      %2155 = vmatmul.mubr.bf16.gmra.mrb[0].mxu0 %v775
      %v2156 = vpop.f32.mrb[0].mxu0
      %v2157 = vadd.f32 %v1996, %v2156
      %v2158 = vpop.f32.mrb[0].mxu0
      %v2159 = vpop.f32.mrb[0].mxu0
      %v2160 = vadd.f32 %v1999, %v2159
      %v2161 = vpop.f32.mrb[0].mxu0
      %2162 = vmatprep.mubr.bf16.mxu0 0
      %2163 = vmatmul.mubr.bf16.gmra.mrb[0].mxu0 %v784
      %v2164 = vpop.f32.mrb[0].mxu0
      %v2165 = vadd.f32 %v2004, %v2164
      %v2166 = vpop.f32.mrb[0].mxu0
      %v2167 = vpop.f32.mrb[0].mxu0
      %v2168 = vadd.f32 %v2007, %v2167
      %v2169 = vpop.f32.mrb[0].mxu0
      %2170 = vmatprep.mubr.bf16.mxu0 0
      %2171 = vmatmul.mubr.bf16.gmra.mrb[0].mxu0 %v793
      %v2172 = vpop.f32.mrb[0].mxu0
      %v2173 = vadd.f32 %v2012, %v2172
      %v2174 = vpop.f32.mrb[0].mxu0
      %v2175 = vpop.f32.mrb[0].mxu0
      %v2176 = vadd.f32 %v2015, %v2175
      %v2177 = vpop.f32.mrb[0].mxu0
      %2178 = vmatprep.mubr.bf16.mxu0 0
      %2179 = vmatmul.mubr.bf16.gmra.mrb[0].mxu0 %v802
      %v2180 = vpop.f32.mrb[0].mxu0
      %v2181 = vadd.f32 %v2020, %v2180
      %v2182 = vpop.f32.mrb[0].mxu0
      %v2183 = vpop.f32.mrb[0].mxu0
      %v2184 = vadd.f32 %v2023, %v2183
      %v2185 = vpop.f32.mrb[0].mxu0
      %2186 = vmatprep.mubr.bf16.mxu0 0
      %2187 = vmatmul.mubr.bf16.gmra.mrb[0].mxu0 %v811
      %v2188 = vpop.f32.mrb[0].mxu0
      %v2189 = vadd.f32 %v2028, %v2188
      %v2190 = vpop.f32.mrb[0].mxu0
      %v2191 = vpop.f32.mrb[0].mxu0
      %v2192 = vadd.f32 %v2031, %v2191
      %v2193 = vpop.f32.mrb[0].mxu0
      %2194 = vmatprep.mubr.bf16.mxu0 0
      %2195 = vmatmul.mubr.bf16.gmra.mrb[0].mxu0 %v820
      %v2196 = vpop.f32.mrb[0].mxu0
      %v2197 = vadd.f32 %v2036, %v2196
      %v2198 = vpop.f32.mrb[0].mxu0
      %v2199 = vpop.f32.mrb[0].mxu0
      %v2200 = vadd.f32 %v2039, %v2199
      %v2201 = vpop.f32.mrb[0].mxu0
      %2202 = vmatprep.mubr.bf16.mxu0 0
      %2203 = vmatmul.mubr.bf16.gmra.mrb[0].mxu0 %v829
      %v2204 = vpop.f32.mrb[0].mxu0
      %v2205 = vadd.f32 %v2044, %v2204
      %v2206 = vpop.f32.mrb[0].mxu0
      %v2207 = vpop.f32.mrb[0].mxu0
      %v2208 = vadd.f32 %v2047, %v2207
      %v2209 = vpop.f32.mrb[0].mxu0
      %2210 = vdwg.mxu0
      %v2211 = vld [vmem:[%s2] sm:$0x1]
      %v2213 = vlaneseq
      %v2214 = vshrl.u32 %v2213, 7
      %v2215 = vsub.s32 0, %v2214
      %v2216 = vrot.slane %v2211, %v2215
      %v2218 = vmul.f32 %v2085, %v2216
      %v2219 = vmul.f32 %v2088, %v2216
      %v2220 = vmul.f32 %v2093, %v2216
      %v2221 = vmul.f32 %v2096, %v2216
      %v2222 = vmul.f32 %v2101, %v2216
      %v2223 = vmul.f32 %v2104, %v2216
      %v2224 = vmul.f32 %v2109, %v2216
      %v2225 = vmul.f32 %v2112, %v2216
      %v2226 = vmul.f32 %v2117, %v2216
      %v2227 = vmul.f32 %v2120, %v2216
      %v2228 = vmul.f32 %v2125, %v2216
      %v2229 = vmul.f32 %v2128, %v2216
      %v2230 = vmul.f32 %v2133, %v2216
      %v2231 = vmul.f32 %v2136, %v2216
      %v2232 = vmul.f32 %v2141, %v2216
      %v2233 = vmul.f32 %v2144, %v2216
      %v2234 = vmul.f32 %v2149, %v2216
      %v2235 = vmul.f32 %v2152, %v2216
      %v2236 = vmul.f32 %v2157, %v2216
      %v2237 = vmul.f32 %v2160, %v2216
      %v2238 = vmul.f32 %v2165, %v2216
      %v2239 = vmul.f32 %v2168, %v2216
      %v2240 = vmul.f32 %v2173, %v2216
      %v2241 = vmul.f32 %v2176, %v2216
      %v2242 = vmul.f32 %v2181, %v2216
      %v2243 = vmul.f32 %v2184, %v2216
      %v2244 = vmul.f32 %v2189, %v2216
      %v2245 = vmul.f32 %v2192, %v2216
      %v2246 = vmul.f32 %v2197, %v2216
      %v2247 = vmul.f32 %v2200, %v2216
      %v2248 = vmul.f32 %v2205, %v2216
      %v2249 = vmul.f32 %v2208, %v2216
      %v2250 = vld [vmem:[%s3] sm:$0x1]
      %v2252 = vlaneseq
      %v2253 = vshrl.u32 %v2252, 7
      %v2254 = vsub.s32 0, %v2253
      %v2255 = vrot.slane %v2250, %v2254
      %v2257 = vadd.f32 %v2218, %v2255
      %v2258 = vadd.f32 %v2219, %v2255
      %v2259 = vadd.f32 %v2220, %v2255
      %v2260 = vadd.f32 %v2221, %v2255
      %v2261 = vadd.f32 %v2222, %v2255
      %v2262 = vadd.f32 %v2223, %v2255
      %v2263 = vadd.f32 %v2224, %v2255
      %v2264 = vadd.f32 %v2225, %v2255
      %v2265 = vadd.f32 %v2226, %v2255
      %v2266 = vadd.f32 %v2227, %v2255
      %v2267 = vadd.f32 %v2228, %v2255
      %v2268 = vadd.f32 %v2229, %v2255
      %v2269 = vadd.f32 %v2230, %v2255
      %v2270 = vadd.f32 %v2231, %v2255
      %v2271 = vadd.f32 %v2232, %v2255
      %v2272 = vadd.f32 %v2233, %v2255
      %v2273 = vadd.f32 %v2234, %v2255
      %v2274 = vadd.f32 %v2235, %v2255
      %v2275 = vadd.f32 %v2236, %v2255
      %v2276 = vadd.f32 %v2237, %v2255
      %v2277 = vadd.f32 %v2238, %v2255
      %v2278 = vadd.f32 %v2239, %v2255
      %v2279 = vadd.f32 %v2240, %v2255
      %v2280 = vadd.f32 %v2241, %v2255
      %v2281 = vadd.f32 %v2242, %v2255
      %v2282 = vadd.f32 %v2243, %v2255
      %v2283 = vadd.f32 %v2244, %v2255
      %v2284 = vadd.f32 %v2245, %v2255
      %v2285 = vadd.f32 %v2246, %v2255
      %v2286 = vadd.f32 %v2247, %v2255
      %v2287 = vadd.f32 %v2248, %v2255
      %v2288 = vadd.f32 %v2249, %v2255
      %v2289 = vmax.f32 %v2257, 0.0
      %v2290 = vmax.f32 %v2258, 0.0
      %v2291 = vmax.f32 %v2259, 0.0
      %v2292 = vmax.f32 %v2260, 0.0
      %v2293 = vmax.f32 %v2261, 0.0
      %v2294 = vmax.f32 %v2262, 0.0
      %v2295 = vmax.f32 %v2263, 0.0
      %v2296 = vmax.f32 %v2264, 0.0
      %v2297 = vmax.f32 %v2265, 0.0
      %v2298 = vmax.f32 %v2266, 0.0
      %v2299 = vmax.f32 %v2267, 0.0
      %v2300 = vmax.f32 %v2268, 0.0
      %v2301 = vmax.f32 %v2269, 0.0
      %v2302 = vmax.f32 %v2270, 0.0
      %v2303 = vmax.f32 %v2271, 0.0
      %v2304 = vmax.f32 %v2272, 0.0
      %v2305 = vmax.f32 %v2273, 0.0
      %v2306 = vmax.f32 %v2274, 0.0
      %v2307 = vmax.f32 %v2275, 0.0
      %v2308 = vmax.f32 %v2276, 0.0
      %v2309 = vmax.f32 %v2277, 0.0
      %v2310 = vmax.f32 %v2278, 0.0
      %v2311 = vmax.f32 %v2279, 0.0
      %v2312 = vmax.f32 %v2280, 0.0
      %v2313 = vmax.f32 %v2281, 0.0
      %v2314 = vmax.f32 %v2282, 0.0
      %v2315 = vmax.f32 %v2283, 0.0
      %v2316 = vmax.f32 %v2284, 0.0
      %v2317 = vmax.f32 %v2285, 0.0
      %v2318 = vmax.f32 %v2286, 0.0
      %v2319 = vmax.f32 %v2287, 0.0
      %v2320 = vmax.f32 %v2288, 0.0
      %v2321 = vpack.c.bf16 %v2290, %v2289
      %v2322 = vpack.c.bf16 %v2292, %v2291
      %v2323 = vpack.c.bf16 %v2294, %v2293
      %v2324 = vpack.c.bf16 %v2296, %v2295
      %v2325 = vpack.c.bf16 %v2298, %v2297
      %v2326 = vpack.c.bf16 %v2300, %v2299
      %v2327 = vpack.c.bf16 %v2302, %v2301
      %v2328 = vpack.c.bf16 %v2304, %v2303
      %v2329 = vpack.c.bf16 %v2306, %v2305
      %v2330 = vpack.c.bf16 %v2308, %v2307
      %v2331 = vpack.c.bf16 %v2310, %v2309
      %v2332 = vpack.c.bf16 %v2312, %v2311
      %v2333 = vpack.c.bf16 %v2314, %v2313
      %v2334 = vpack.c.bf16 %v2316, %v2315
      %v2335 = vpack.c.bf16 %v2318, %v2317
      %v2336 = vpack.c.bf16 %v2320, %v2319
      %v2338 = vshrl.u32 %v2321, 16
      %v2340 = vrot.slane %v2338, 7
      %v2341 = vshll.u32 %v2321, 16
      %v2343 = vor.u32 %v2340, %v2341
      %v2345 = vshrl.u32 %v2322, 16
      %v2347 = vrot.slane %v2345, 7
      %v2348 = vshll.u32 %v2322, 16
      %v2350 = vor.u32 %v2347, %v2348
      %v2352 = vshrl.u32 %v2323, 16
      %v2354 = vrot.slane %v2352, 7
      %v2355 = vshll.u32 %v2323, 16
      %v2357 = vor.u32 %v2354, %v2355
      %v2359 = vshrl.u32 %v2324, 16
      %v2361 = vrot.slane %v2359, 7
      %v2362 = vshll.u32 %v2324, 16
      %v2364 = vor.u32 %v2361, %v2362
      %v2366 = vshrl.u32 %v2325, 16
      %v2368 = vrot.slane %v2366, 7
      %v2369 = vshll.u32 %v2325, 16
      %v2371 = vor.u32 %v2368, %v2369
      %v2373 = vshrl.u32 %v2326, 16
      %v2375 = vrot.slane %v2373, 7
      %v2376 = vshll.u32 %v2326, 16
      %v2378 = vor.u32 %v2375, %v2376
      %v2380 = vshrl.u32 %v2327, 16
      %v2382 = vrot.slane %v2380, 7
      %v2383 = vshll.u32 %v2327, 16
      %v2385 = vor.u32 %v2382, %v2383
      %v2387 = vshrl.u32 %v2328, 16
      %v2389 = vrot.slane %v2387, 7
      %v2390 = vshll.u32 %v2328, 16
      %v2392 = vor.u32 %v2389, %v2390
      %v2394 = vshrl.u32 %v2329, 16
      %v2396 = vrot.slane %v2394, 7
      %v2397 = vshll.u32 %v2329, 16
      %v2399 = vor.u32 %v2396, %v2397
      %v2401 = vshrl.u32 %v2330, 16
      %v2403 = vrot.slane %v2401, 7
      %v2404 = vshll.u32 %v2330, 16
      %v2406 = vor.u32 %v2403, %v2404
      %v2408 = vshrl.u32 %v2331, 16
      %v2410 = vrot.slane %v2408, 7
      %v2411 = vshll.u32 %v2331, 16
      %v2413 = vor.u32 %v2410, %v2411
      %v2415 = vshrl.u32 %v2332, 16
      %v2417 = vrot.slane %v2415, 7
      %v2418 = vshll.u32 %v2332, 16
      %v2420 = vor.u32 %v2417, %v2418
      %v2422 = vshrl.u32 %v2333, 16
      %v2424 = vrot.slane %v2422, 7
      %v2425 = vshll.u32 %v2333, 16
      %v2427 = vor.u32 %v2424, %v2425
      %v2429 = vshrl.u32 %v2334, 16
      %v2431 = vrot.slane %v2429, 7
      %v2432 = vshll.u32 %v2334, 16
      %v2434 = vor.u32 %v2431, %v2432
      %v2436 = vshrl.u32 %v2335, 16
      %v2438 = vrot.slane %v2436, 7
      %v2439 = vshll.u32 %v2335, 16
      %v2441 = vor.u32 %v2438, %v2439
      %v2443 = vshrl.u32 %v2336, 16
      %v2445 = vrot.slane %v2443, 7
      %v2446 = vshll.u32 %v2336, 16
      %v2448 = vor.u32 %v2445, %v2446
      %v2465 = vsel %vm458, 0, %v2343
      %v2466 = vsel %vm458, 0, %v2350
      %v2467 = vsel %vm458, 0, %v2357
      %v2468 = vsel %vm458, 0, %v2364
      %v2469 = vsel %vm458, 0, %v2371
      %v2470 = vsel %vm458, 0, %v2378
      %v2471 = vsel %vm458, 0, %v2385
      %v2472 = vsel %vm458, 0, %v2392
      %v2473 = vsel %vm458, 0, %v2399
      %v2474 = vsel %vm458, 0, %v2406
      %v2475 = vsel %vm458, 0, %v2413
      %v2476 = vsel %vm458, 0, %v2420
      %v2477 = vsel %vm458, 0, %v2427
      %v2478 = vsel %vm458, 0, %v2434
      %v2479 = vsel %vm458, 0, %v2441
      %v2480 = vsel %vm458, 0, %v2448
      %2481 = vst [vmem:[#allocation2 + $0x48] sm:$0xff] %v2465
      %2482 = vst [vmem:[#allocation2 + $0x90] sm:$0xff] %v2466
      %2483 = vst [vmem:[#allocation2 + $0xd8] sm:$0xff] %v2467
      %2484 = vst [vmem:[#allocation2 + $0x120] sm:$0xff] %v2468
      %2485 = vst [vmem:[#allocation2 + $0x168] sm:$0xff] %v2469
      %2486 = vst [vmem:[#allocation2 + $0x1b0] sm:$0xff] %v2470
      %2487 = vst [vmem:[#allocation2 + $0x1f8] sm:$0xff] %v2471
      %2488 = vst [vmem:[#allocation2 + $0x240] sm:$0xff] %v2472
      %2489 = vst [vmem:[#allocation2 + $0x288] sm:$0xff] %v2473
      %2490 = vst [vmem:[#allocation2 + $0x2d0] sm:$0xff] %v2474
      %2491 = vst [vmem:[#allocation2 + $0x318] sm:$0xff] %v2475
      %2492 = vst [vmem:[#allocation2 + $0x360] sm:$0xff] %v2476
      %2493 = vst [vmem:[#allocation2 + $0x3a8] sm:$0xff] %v2477
      %2494 = vst [vmem:[#allocation2 + $0x3f0] sm:$0xff] %v2478
      %2495 = vst [vmem:[#allocation2 + $0x438] sm:$0xff] %v2479
      %2496 = vst [vmem:[#allocation2] sm:$0xff] 0
      %2497 = vst [vmem:[#allocation2 + $0x18] sm:$0xff] %v2465
      %2498 = vst [vmem:[#allocation2 + $0x60] sm:$0xff] %v2466
      %2499 = vst [vmem:[#allocation2 + $0xa8] sm:$0xff] %v2467
      %2500 = vst [vmem:[#allocation2 + $0xf0] sm:$0xff] %v2468
      %2501 = vst [vmem:[#allocation2 + $0x138] sm:$0xff] %v2469
      %2502 = vst [vmem:[#allocation2 + $0x180] sm:$0xff] %v2470
      %2503 = vst [vmem:[#allocation2 + $0x1c8] sm:$0xff] %v2471
      %2504 = vst [vmem:[#allocation2 + $0x210] sm:$0xff] %v2472
      %2505 = vst [vmem:[#allocation2 + $0x258] sm:$0xff] %v2473
      %2506 = vst [vmem:[#allocation2 + $0x2a0] sm:$0xff] %v2474
      %2507 = vst [vmem:[#allocation2 + $0x2e8] sm:$0xff] %v2475
      %2508 = vst [vmem:[#allocation2 + $0x330] sm:$0xff] %v2476
      %2509 = vst [vmem:[#allocation2 + $0x378] sm:$0xff] %v2477
      %2510 = vst [vmem:[#allocation2 + $0x3c0] sm:$0xff] %v2478
      %2511 = vst [vmem:[#allocation2 + $0x408] sm:$0xff] %v2479
      %2512 = vst [vmem:[#allocation2 + $0x450] sm:$0xff] %v2480
      %2513 = vst [vmem:[#allocation2 + $0x30] sm:$0xff] %v2466
      %2514 = vst [vmem:[#allocation2 + $0x78] sm:$0xff] %v2467
      %2515 = vst [vmem:[#allocation2 + $0xc0] sm:$0xff] %v2468
      %2516 = vst [vmem:[#allocation2 + $0x108] sm:$0xff] %v2469
      %2517 = vst [vmem:[#allocation2 + $0x150] sm:$0xff] %v2470
      %2518 = vst [vmem:[#allocation2 + $0x198] sm:$0xff] %v2471
      %2519 = vst [vmem:[#allocation2 + $0x1e0] sm:$0xff] %v2472
      %2520 = vst [vmem:[#allocation2 + $0x228] sm:$0xff] %v2473
      %2521 = vst [vmem:[#allocation2 + $0x270] sm:$0xff] %v2474
      %2522 = vst [vmem:[#allocation2 + $0x2b8] sm:$0xff] %v2475
      %2523 = vst [vmem:[#allocation2 + $0x300] sm:$0xff] %v2476
      %2524 = vst [vmem:[#allocation2 + $0x348] sm:$0xff] %v2477
      %2525 = vst [vmem:[#allocation2 + $0x390] sm:$0xff] %v2478
      %2526 = vst [vmem:[#allocation2 + $0x3d8] sm:$0xff] %v2479
      %2527 = vst [vmem:[#allocation2 + $0x420] sm:$0xff] %v2480
      %2528 = vst [vmem:[#allocation2 + $0x468] sm:$0xff] 0
      %2529 = vst [vmem:[#allocation2 + $0x50] sm:$0xff] %v2321
      %2530 = vst [vmem:[#allocation2 + $0x98] sm:$0xff] %v2322
      %2531 = vst [vmem:[#allocation2 + $0xe0] sm:$0xff] %v2323
      %2532 = vst [vmem:[#allocation2 + $0x128] sm:$0xff] %v2324
      %2533 = vst [vmem:[#allocation2 + $0x170] sm:$0xff] %v2325
      %2534 = vst [vmem:[#allocation2 + $0x1b8] sm:$0xff] %v2326
      %2535 = vst [vmem:[#allocation2 + $0x200] sm:$0xff] %v2327
      %2536 = vst [vmem:[#allocation2 + $0x248] sm:$0xff] %v2328
      %2537 = vst [vmem:[#allocation2 + $0x290] sm:$0xff] %v2329
      %2538 = vst [vmem:[#allocation2 + $0x2d8] sm:$0xff] %v2330
      %2539 = vst [vmem:[#allocation2 + $0x320] sm:$0xff] %v2331
      %2540 = vst [vmem:[#allocation2 + $0x368] sm:$0xff] %v2332
      %2541 = vst [vmem:[#allocation2 + $0x3b0] sm:$0xff] %v2333
      %2542 = vst [vmem:[#allocation2 + $0x3f8] sm:$0xff] %v2334
      %2543 = vst [vmem:[#allocation2 + $0x440] sm:$0xff] %v2335
      %2544 = vst [vmem:[#allocation2 + $0x8] sm:$0xff] 0
      %2545 = vst [vmem:[#allocation2 + $0x20] sm:$0xff] %v2321
      %2546 = vst [vmem:[#allocation2 + $0x68] sm:$0xff] %v2322
      %2547 = vst [vmem:[#allocation2 + $0xb0] sm:$0xff] %v2323
      %2548 = vst [vmem:[#allocation2 + $0xf8] sm:$0xff] %v2324
      %2549 = vst [vmem:[#allocation2 + $0x140] sm:$0xff] %v2325
      %2550 = vst [vmem:[#allocation2 + $0x188] sm:$0xff] %v2326
      %2551 = vst [vmem:[#allocation2 + $0x1d0] sm:$0xff] %v2327
      %2552 = vst [vmem:[#allocation2 + $0x218] sm:$0xff] %v2328
      %2553 = vst [vmem:[#allocation2 + $0x260] sm:$0xff] %v2329
      %2554 = vst [vmem:[#allocation2 + $0x2a8] sm:$0xff] %v2330
      %2555 = vst [vmem:[#allocation2 + $0x2f0] sm:$0xff] %v2331
      %2556 = vst [vmem:[#allocation2 + $0x338] sm:$0xff] %v2332
      %2557 = vst [vmem:[#allocation2 + $0x380] sm:$0xff] %v2333
      %2558 = vst [vmem:[#allocation2 + $0x3c8] sm:$0xff] %v2334
      %2559 = vst [vmem:[#allocation2 + $0x410] sm:$0xff] %v2335
      %2560 = vst [vmem:[#allocation2 + $0x458] sm:$0xff] %v2336
      %2561 = vst [vmem:[#allocation2 + $0x38] sm:$0xff] %v2322
      %2562 = vst [vmem:[#allocation2 + $0x80] sm:$0xff] %v2323
      %2563 = vst [vmem:[#allocation2 + $0xc8] sm:$0xff] %v2324
      %2564 = vst [vmem:[#allocation2 + $0x110] sm:$0xff] %v2325
      %2565 = vst [vmem:[#allocation2 + $0x158] sm:$0xff] %v2326
      %2566 = vst [vmem:[#allocation2 + $0x1a0] sm:$0xff] %v2327
      %2567 = vst [vmem:[#allocation2 + $0x1e8] sm:$0xff] %v2328
      %2568 = vst [vmem:[#allocation2 + $0x230] sm:$0xff] %v2329
      %2569 = vst [vmem:[#allocation2 + $0x278] sm:$0xff] %v2330
      %2570 = vst [vmem:[#allocation2 + $0x2c0] sm:$0xff] %v2331
      %2571 = vst [vmem:[#allocation2 + $0x308] sm:$0xff] %v2332
      %2572 = vst [vmem:[#allocation2 + $0x350] sm:$0xff] %v2333
      %2573 = vst [vmem:[#allocation2 + $0x398] sm:$0xff] %v2334
      %2574 = vst [vmem:[#allocation2 + $0x3e0] sm:$0xff] %v2335
      %2575 = vst [vmem:[#allocation2 + $0x428] sm:$0xff] %v2336
      %2576 = vst [vmem:[#allocation2 + $0x470] sm:$0xff] 0
      %v2577 = vrot.slane %v2341, 1
      %v2578 = vor.u32 %v2338, %v2577
      %v2579 = vrot.slane %v2348, 1
      %v2580 = vor.u32 %v2345, %v2579
      %v2581 = vrot.slane %v2355, 1
      %v2582 = vor.u32 %v2352, %v2581
      %v2583 = vrot.slane %v2362, 1
      %v2584 = vor.u32 %v2359, %v2583
      %v2585 = vrot.slane %v2369, 1
      %v2586 = vor.u32 %v2366, %v2585
      %v2587 = vrot.slane %v2376, 1
      %v2588 = vor.u32 %v2373, %v2587
      %v2589 = vrot.slane %v2383, 1
      %v2590 = vor.u32 %v2380, %v2589
      %v2591 = vrot.slane %v2390, 1
      %v2592 = vor.u32 %v2387, %v2591
      %v2593 = vrot.slane %v2397, 1
      %v2594 = vor.u32 %v2394, %v2593
      %v2595 = vrot.slane %v2404, 1
      %v2596 = vor.u32 %v2401, %v2595
      %v2597 = vrot.slane %v2411, 1
      %v2598 = vor.u32 %v2408, %v2597
      %v2599 = vrot.slane %v2418, 1
      %v2600 = vor.u32 %v2415, %v2599
      %v2601 = vrot.slane %v2425, 1
      %v2602 = vor.u32 %v2422, %v2601
      %v2603 = vrot.slane %v2432, 1
      %v2604 = vor.u32 %v2429, %v2603
      %v2605 = vrot.slane %v2439, 1
      %v2606 = vor.u32 %v2436, %v2605
      %v2607 = vrot.slane %v2446, 1
      %v2608 = vor.u32 %v2443, %v2607
      %v2625 = vsel %vm621, %v2578, 0
      %v2626 = vsel %vm621, %v2580, 0
      %v2627 = vsel %vm621, %v2582, 0
      %v2628 = vsel %vm621, %v2584, 0
      %v2629 = vsel %vm621, %v2586, 0
      %v2630 = vsel %vm621, %v2588, 0
      %v2631 = vsel %vm621, %v2590, 0
      %v2632 = vsel %vm621, %v2592, 0
      %v2633 = vsel %vm621, %v2594, 0
      %v2634 = vsel %vm621, %v2596, 0
      %v2635 = vsel %vm621, %v2598, 0
      %v2636 = vsel %vm621, %v2600, 0
      %v2637 = vsel %vm621, %v2602, 0
      %v2638 = vsel %vm621, %v2604, 0
      %v2639 = vsel %vm621, %v2606, 0
      %v2640 = vsel %vm621, %v2608, 0
      %2641 = vst [vmem:[#allocation2 + $0x58] sm:$0xff] %v2625
      %2642 = vst [vmem:[#allocation2 + $0xa0] sm:$0xff] %v2626
      %2643 = vst [vmem:[#allocation2 + $0xe8] sm:$0xff] %v2627
      %2644 = vst [vmem:[#allocation2 + $0x130] sm:$0xff] %v2628
      %2645 = vst [vmem:[#allocation2 + $0x178] sm:$0xff] %v2629
      %2646 = vst [vmem:[#allocation2 + $0x1c0] sm:$0xff] %v2630
      %2647 = vst [vmem:[#allocation2 + $0x208] sm:$0xff] %v2631
      %2648 = vst [vmem:[#allocation2 + $0x250] sm:$0xff] %v2632
      %2649 = vst [vmem:[#allocation2 + $0x298] sm:$0xff] %v2633
      %2650 = vst [vmem:[#allocation2 + $0x2e0] sm:$0xff] %v2634
      %2651 = vst [vmem:[#allocation2 + $0x328] sm:$0xff] %v2635
      %2652 = vst [vmem:[#allocation2 + $0x370] sm:$0xff] %v2636
      %2653 = vst [vmem:[#allocation2 + $0x3b8] sm:$0xff] %v2637
      %2654 = vst [vmem:[#allocation2 + $0x400] sm:$0xff] %v2638
      %2655 = vst [vmem:[#allocation2 + $0x448] sm:$0xff] %v2639
      %2656 = vst [vmem:[#allocation2 + $0x10] sm:$0xff] 0
      %2657 = vst [vmem:[#allocation2 + $0x28] sm:$0xff] %v2625
      %2658 = vst [vmem:[#allocation2 + $0x70] sm:$0xff] %v2626
      %2659 = vst [vmem:[#allocation2 + $0xb8] sm:$0xff] %v2627
      %2660 = vst [vmem:[#allocation2 + $0x100] sm:$0xff] %v2628
      %2661 = vst [vmem:[#allocation2 + $0x148] sm:$0xff] %v2629
      %2662 = vst [vmem:[#allocation2 + $0x190] sm:$0xff] %v2630
      %2663 = vst [vmem:[#allocation2 + $0x1d8] sm:$0xff] %v2631
      %2664 = vst [vmem:[#allocation2 + $0x220] sm:$0xff] %v2632
      %2665 = vst [vmem:[#allocation2 + $0x268] sm:$0xff] %v2633
      %2666 = vst [vmem:[#allocation2 + $0x2b0] sm:$0xff] %v2634
      %2667 = vst [vmem:[#allocation2 + $0x2f8] sm:$0xff] %v2635
      %2668 = vst [vmem:[#allocation2 + $0x340] sm:$0xff] %v2636
      %2669 = vst [vmem:[#allocation2 + $0x388] sm:$0xff] %v2637
      %2670 = vst [vmem:[#allocation2 + $0x3d0] sm:$0xff] %v2638
      %2671 = vst [vmem:[#allocation2 + $0x418] sm:$0xff] %v2639
      %2672 = vst [vmem:[#allocation2 + $0x460] sm:$0xff] %v2640
      %2673 = vst [vmem:[#allocation2 + $0x40] sm:$0xff] %v2626
      %2674 = vst [vmem:[#allocation2 + $0x88] sm:$0xff] %v2627
      %2675 = vst [vmem:[#allocation2 + $0xd0] sm:$0xff] %v2628
      %2676 = vst [vmem:[#allocation2 + $0x118] sm:$0xff] %v2629
      %2677 = vst [vmem:[#allocation2 + $0x160] sm:$0xff] %v2630
      %2678 = vst [vmem:[#allocation2 + $0x1a8] sm:$0xff] %v2631
      %2679 = vst [vmem:[#allocation2 + $0x1f0] sm:$0xff] %v2632
      %2680 = vst [vmem:[#allocation2 + $0x238] sm:$0xff] %v2633
      %2681 = vst [vmem:[#allocation2 + $0x280] sm:$0xff] %v2634
      %2682 = vst [vmem:[#allocation2 + $0x2c8] sm:$0xff] %v2635
      %2683 = vst [vmem:[#allocation2 + $0x310] sm:$0xff] %v2636
      %2684 = vst [vmem:[#allocation2 + $0x358] sm:$0xff] %v2637
      %2685 = vst [vmem:[#allocation2 + $0x3a0] sm:$0xff] %v2638
      %2686 = vst [vmem:[#allocation2 + $0x3e8] sm:$0xff] %v2639
      %2687 = vst [vmem:[#allocation2 + $0x430] sm:$0xff] %v2640
      %2688 = vst [vmem:[#allocation2 + $0x478] sm:$0xff] 0
      %v2689 = vld [vmem:[#allocation2] sm:$0xff]
      %v2690 = vld [vmem:[#allocation2 + $0x8] sm:$0xff]
      %v2691 = vld [vmem:[#allocation2 + $0x10] sm:$0xff]
      %v2692 = vld [vmem:[#allocation2 + $0x18] sm:$0xff]
      %v2693 = vld [vmem:[#allocation2 + $0x20] sm:$0xff]
      %v2694 = vld [vmem:[#allocation2 + $0x28] sm:$0xff]
      %v2695 = vld [vmem:[#allocation2 + $0x30] sm:$0xff]
      %v2696 = vld [vmem:[#allocation2 + $0x38] sm:$0xff]
      %v2697 = vld [vmem:[#allocation2 + $0x40] sm:$0xff]
      %v2698 = vld [vmem:[#allocation2 + $0x48] sm:$0xff]
      %v2699 = vld [vmem:[#allocation2 + $0x50] sm:$0xff]
      %v2700 = vld [vmem:[#allocation2 + $0x58] sm:$0xff]
      %v2701 = vld [vmem:[#allocation2 + $0x60] sm:$0xff]
      %v2702 = vld [vmem:[#allocation2 + $0x68] sm:$0xff]
      %v2703 = vld [vmem:[#allocation2 + $0x70] sm:$0xff]
      %v2704 = vld [vmem:[#allocation2 + $0x78] sm:$0xff]
      %v2705 = vld [vmem:[#allocation2 + $0x80] sm:$0xff]
      %v2706 = vld [vmem:[#allocation2 + $0x88] sm:$0xff]
      %v2707 = vld [vmem:[#allocation2 + $0x90] sm:$0xff]
      %v2708 = vld [vmem:[#allocation2 + $0x98] sm:$0xff]
      %v2709 = vld [vmem:[#allocation2 + $0xa0] sm:$0xff]
      %v2710 = vld [vmem:[#allocation2 + $0xa8] sm:$0xff]
      %v2711 = vld [vmem:[#allocation2 + $0xb0] sm:$0xff]
      %v2712 = vld [vmem:[#allocation2 + $0xb8] sm:$0xff]
      %v2713 = vld [vmem:[#allocation2 + $0xc0] sm:$0xff]
      %v2714 = vld [vmem:[#allocation2 + $0xc8] sm:$0xff]
      %v2715 = vld [vmem:[#allocation2 + $0xd0] sm:$0xff]
      %v2716 = vld [vmem:[#allocation2 + $0xd8] sm:$0xff]
      %v2717 = vld [vmem:[#allocation2 + $0xe0] sm:$0xff]
      %v2718 = vld [vmem:[#allocation2 + $0xe8] sm:$0xff]
      %v2719 = vld [vmem:[#allocation2 + $0xf0] sm:$0xff]
      %v2720 = vld [vmem:[#allocation2 + $0xf8] sm:$0xff]
      %v2721 = vld [vmem:[#allocation2 + $0x100] sm:$0xff]
      %v2722 = vld [vmem:[#allocation2 + $0x108] sm:$0xff]
      %v2723 = vld [vmem:[#allocation2 + $0x110] sm:$0xff]
      %v2724 = vld [vmem:[#allocation2 + $0x118] sm:$0xff]
      %v2725 = vld [vmem:[#allocation2 + $0x120] sm:$0xff]
      %v2726 = vld [vmem:[#allocation2 + $0x128] sm:$0xff]
      %v2727 = vld [vmem:[#allocation2 + $0x130] sm:$0xff]
      %v2728 = vld [vmem:[#allocation2 + $0x138] sm:$0xff]
      %v2729 = vld [vmem:[#allocation2 + $0x140] sm:$0xff]
      %v2730 = vld [vmem:[#allocation2 + $0x148] sm:$0xff]
      %v2731 = vld [vmem:[#allocation2 + $0x150] sm:$0xff]
      %v2732 = vld [vmem:[#allocation2 + $0x158] sm:$0xff]
      %v2733 = vld [vmem:[#allocation2 + $0x160] sm:$0xff]
      %v2734 = vld [vmem:[#allocation2 + $0x168] sm:$0xff]
      %v2735 = vld [vmem:[#allocation2 + $0x170] sm:$0xff]
      %v2736 = vld [vmem:[#allocation2 + $0x178] sm:$0xff]
      %v2737 = vld [vmem:[#allocation2 + $0x180] sm:$0xff]
      %v2738 = vld [vmem:[#allocation2 + $0x188] sm:$0xff]
      %v2739 = vld [vmem:[#allocation2 + $0x190] sm:$0xff]
      %v2740 = vld [vmem:[#allocation2 + $0x198] sm:$0xff]
      %v2741 = vld [vmem:[#allocation2 + $0x1a0] sm:$0xff]
      %v2742 = vld [vmem:[#allocation2 + $0x1a8] sm:$0xff]
      %v2743 = vld [vmem:[#allocation2 + $0x1b0] sm:$0xff]
      %v2744 = vld [vmem:[#allocation2 + $0x1b8] sm:$0xff]
      %v2745 = vld [vmem:[#allocation2 + $0x1c0] sm:$0xff]
      %v2746 = vld [vmem:[#allocation2 + $0x1c8] sm:$0xff]
      %v2747 = vld [vmem:[#allocation2 + $0x1d0] sm:$0xff]
      %v2748 = vld [vmem:[#allocation2 + $0x1d8] sm:$0xff]
      %v2749 = vld [vmem:[#allocation2 + $0x1e0] sm:$0xff]
      %v2750 = vld [vmem:[#allocation2 + $0x1e8] sm:$0xff]
      %v2751 = vld [vmem:[#allocation2 + $0x1f0] sm:$0xff]
      %v2752 = vld [vmem:[#allocation2 + $0x1f8] sm:$0xff]
      %v2753 = vld [vmem:[#allocation2 + $0x200] sm:$0xff]
      %v2754 = vld [vmem:[#allocation2 + $0x208] sm:$0xff]
      %v2755 = vld [vmem:[#allocation2 + $0x210] sm:$0xff]
      %v2756 = vld [vmem:[#allocation2 + $0x218] sm:$0xff]
      %v2757 = vld [vmem:[#allocation2 + $0x220] sm:$0xff]
      %v2758 = vld [vmem:[#allocation2 + $0x228] sm:$0xff]
      %v2759 = vld [vmem:[#allocation2 + $0x230] sm:$0xff]
      %v2760 = vld [vmem:[#allocation2 + $0x238] sm:$0xff]
      %v2761 = vld [vmem:[#allocation2 + $0x240] sm:$0xff]
      %v2762 = vld [vmem:[#allocation2 + $0x248] sm:$0xff]
      %v2763 = vld [vmem:[#allocation2 + $0x250] sm:$0xff]
      %v2764 = vld [vmem:[#allocation2 + $0x258] sm:$0xff]
      %v2765 = vld [vmem:[#allocation2 + $0x260] sm:$0xff]
      %v2766 = vld [vmem:[#allocation2 + $0x268] sm:$0xff]
      %v2767 = vld [vmem:[#allocation2 + $0x270] sm:$0xff]
      %v2768 = vld [vmem:[#allocation2 + $0x278] sm:$0xff]
      %v2769 = vld [vmem:[#allocation2 + $0x280] sm:$0xff]
      %v2770 = vld [vmem:[#allocation2 + $0x288] sm:$0xff]
      %v2771 = vld [vmem:[#allocation2 + $0x290] sm:$0xff]
      %v2772 = vld [vmem:[#allocation2 + $0x298] sm:$0xff]
      %v2773 = vld [vmem:[#allocation2 + $0x2a0] sm:$0xff]
      %v2774 = vld [vmem:[#allocation2 + $0x2a8] sm:$0xff]
      %v2775 = vld [vmem:[#allocation2 + $0x2b0] sm:$0xff]
      %v2776 = vld [vmem:[#allocation2 + $0x2b8] sm:$0xff]
      %v2777 = vld [vmem:[#allocation2 + $0x2c0] sm:$0xff]
      %v2778 = vld [vmem:[#allocation2 + $0x2c8] sm:$0xff]
      %v2779 = vld [vmem:[#allocation2 + $0x2d0] sm:$0xff]
      %v2780 = vld [vmem:[#allocation2 + $0x2d8] sm:$0xff]
      %v2781 = vld [vmem:[#allocation2 + $0x2e0] sm:$0xff]
      %v2782 = vld [vmem:[#allocation2 + $0x2e8] sm:$0xff]
      %v2783 = vld [vmem:[#allocation2 + $0x2f0] sm:$0xff]
      %v2784 = vld [vmem:[#allocation2 + $0x2f8] sm:$0xff]
      %v2785 = vld [vmem:[#allocation2 + $0x300] sm:$0xff]
      %v2786 = vld [vmem:[#allocation2 + $0x308] sm:$0xff]
      %v2787 = vld [vmem:[#allocation2 + $0x310] sm:$0xff]
      %v2788 = vld [vmem:[#allocation2 + $0x318] sm:$0xff]
      %v2789 = vld [vmem:[#allocation2 + $0x320] sm:$0xff]
      %v2790 = vld [vmem:[#allocation2 + $0x328] sm:$0xff]
      %v2791 = vld [vmem:[#allocation2 + $0x330] sm:$0xff]
      %v2792 = vld [vmem:[#allocation2 + $0x338] sm:$0xff]
      %v2793 = vld [vmem:[#allocation2 + $0x340] sm:$0xff]
      %v2794 = vld [vmem:[#allocation2 + $0x348] sm:$0xff]
      %v2795 = vld [vmem:[#allocation2 + $0x350] sm:$0xff]
      %v2796 = vld [vmem:[#allocation2 + $0x358] sm:$0xff]
      %v2797 = vld [vmem:[#allocation2 + $0x360] sm:$0xff]
      %v2798 = vld [vmem:[#allocation2 + $0x368] sm:$0xff]
      %v2799 = vld [vmem:[#allocation2 + $0x370] sm:$0xff]
      %v2800 = vld [vmem:[#allocation2 + $0x378] sm:$0xff]
      %v2801 = vld [vmem:[#allocation2 + $0x380] sm:$0xff]
      %v2802 = vld [vmem:[#allocation2 + $0x388] sm:$0xff]
      %v2803 = vld [vmem:[#allocation2 + $0x390] sm:$0xff]
      %v2804 = vld [vmem:[#allocation2 + $0x398] sm:$0xff]
      %v2805 = vld [vmem:[#allocation2 + $0x3a0] sm:$0xff]
      %v2806 = vld [vmem:[#allocation2 + $0x3a8] sm:$0xff]
      %v2807 = vld [vmem:[#allocation2 + $0x3b0] sm:$0xff]
      %v2808 = vld [vmem:[#allocation2 + $0x3b8] sm:$0xff]
      %v2809 = vld [vmem:[#allocation2 + $0x3c0] sm:$0xff]
      %v2810 = vld [vmem:[#allocation2 + $0x3c8] sm:$0xff]
      %v2811 = vld [vmem:[#allocation2 + $0x3d0] sm:$0xff]
      %v2812 = vld [vmem:[#allocation2 + $0x3d8] sm:$0xff]
      %v2813 = vld [vmem:[#allocation2 + $0x3e0] sm:$0xff]
      %v2814 = vld [vmem:[#allocation2 + $0x3e8] sm:$0xff]
      %v2815 = vld [vmem:[#allocation2 + $0x3f0] sm:$0xff]
      %v2816 = vld [vmem:[#allocation2 + $0x3f8] sm:$0xff]
      %v2817 = vld [vmem:[#allocation2 + $0x400] sm:$0xff]
      %v2818 = vld [vmem:[#allocation2 + $0x408] sm:$0xff]
      %v2819 = vld [vmem:[#allocation2 + $0x410] sm:$0xff]
      %v2820 = vld [vmem:[#allocation2 + $0x418] sm:$0xff]
      %v2821 = vld [vmem:[#allocation2 + $0x420] sm:$0xff]
      %v2822 = vld [vmem:[#allocation2 + $0x428] sm:$0xff]
      %v2823 = vld [vmem:[#allocation2 + $0x430] sm:$0xff]
      %v2824 = vld [vmem:[#allocation2 + $0x438] sm:$0xff]
      %v2825 = vld [vmem:[#allocation2 + $0x440] sm:$0xff]
      %v2826 = vld [vmem:[#allocation2 + $0x448] sm:$0xff]
      %v2827 = vld [vmem:[#allocation2 + $0x450] sm:$0xff]
      %v2828 = vld [vmem:[#allocation2 + $0x458] sm:$0xff]
      %v2829 = vld [vmem:[#allocation2 + $0x460] sm:$0xff]
      %v2830 = vld [vmem:[#allocation2 + $0x468] sm:$0xff]
      %v2831 = vld [vmem:[#allocation2 + $0x470] sm:$0xff]
      %v2832 = vld [vmem:[#allocation2 + $0x478] sm:$0xff]
      %v2833 = vld [vmem:[%s4] sm:$0xf]
      %v2834 = vld [vmem:[%s4 + $0x4] sm:$0xf]
      %v2835 = vld [vmem:[%s4 + $0x8] sm:$0xf]
      %v2836 = vld [vmem:[%s4 + $0xc] sm:$0xf]
      %v2837 = vld [vmem:[%s4 + $0x10] sm:$0xf]
      %v2838 = vld [vmem:[%s4 + $0x14] sm:$0xf]
      %v2839 = vld [vmem:[%s4 + $0x18] sm:$0xf]
      %v2840 = vld [vmem:[%s4 + $0x1c] sm:$0xf]
      %v2841 = vld [vmem:[%s4 + $0x20] sm:$0xf]
      %v2842 = vld [vmem:[%s4 + $0x24] sm:$0xf]
      %v2843 = vld [vmem:[%s4 + $0x28] sm:$0xf]
      %v2844 = vld [vmem:[%s4 + $0x2c] sm:$0xf]
      %v2845 = vld [vmem:[%s4 + $0x30] sm:$0xf]
      %v2846 = vld [vmem:[%s4 + $0x34] sm:$0xf]
      %v2847 = vld [vmem:[%s4 + $0x38] sm:$0xf]
      %v2848 = vld [vmem:[%s4 + $0x3c] sm:$0xf]
      %v2849 = vld [vmem:[%s4 + $0x40] sm:$0xf]
      %v2850 = vld [vmem:[%s4 + $0x44] sm:$0xf]
      %v2851 = vld [vmem:[%s4 + $0x48] sm:$0xf]
      %v2852 = vld [vmem:[%s4 + $0x4c] sm:$0xf]
      %v2853 = vld [vmem:[%s4 + $0x50] sm:$0xf]
      %v2854 = vld [vmem:[%s4 + $0x54] sm:$0xf]
      %v2855 = vld [vmem:[%s4 + $0x58] sm:$0xf]
      %v2856 = vld [vmem:[%s4 + $0x5c] sm:$0xf]
      %v2857 = vld [vmem:[%s4 + $0x60] sm:$0xf]
      %v2858 = vld [vmem:[%s4 + $0x64] sm:$0xf]
      %v2859 = vld [vmem:[%s4 + $0x68] sm:$0xf]
      %v2860 = vld [vmem:[%s4 + $0x6c] sm:$0xf]
      %v2861 = vld [vmem:[%s4 + $0x70] sm:$0xf]
      %v2862 = vld [vmem:[%s4 + $0x74] sm:$0xf]
      %v2863 = vld [vmem:[%s4 + $0x78] sm:$0xf]
      %v2864 = vld [vmem:[%s4 + $0x7c] sm:$0xf]
      %v2865 = vld [vmem:[%s4 + $0x80] sm:$0xf]
      %v2866 = vld [vmem:[%s4 + $0x84] sm:$0xf]
      %v2867 = vld [vmem:[%s4 + $0x88] sm:$0xf]
      %v2868 = vld [vmem:[%s4 + $0x8c] sm:$0xf]
      %v2869 = vld [vmem:[%s4 + $0x90] sm:$0xf]
      %v2870 = vld [vmem:[%s4 + $0x94] sm:$0xf]
      %v2871 = vld [vmem:[%s4 + $0x98] sm:$0xf]
      %v2872 = vld [vmem:[%s4 + $0x9c] sm:$0xf]
      %v2873 = vld [vmem:[%s4 + $0xa0] sm:$0xf]
      %v2874 = vld [vmem:[%s4 + $0xa4] sm:$0xf]
      %v2875 = vld [vmem:[%s4 + $0xa8] sm:$0xf]
      %v2876 = vld [vmem:[%s4 + $0xac] sm:$0xf]
      %v2877 = vld [vmem:[%s4 + $0xb0] sm:$0xf]
      %v2878 = vld [vmem:[%s4 + $0xb4] sm:$0xf]
      %v2879 = vld [vmem:[%s4 + $0xb8] sm:$0xf]
      %v2880 = vld [vmem:[%s4 + $0xbc] sm:$0xf]
      %v2881 = vld [vmem:[%s4 + $0xc0] sm:$0xf]
      %v2882 = vld [vmem:[%s4 + $0xc4] sm:$0xf]
      %v2883 = vld [vmem:[%s4 + $0xc8] sm:$0xf]
      %v2884 = vld [vmem:[%s4 + $0xcc] sm:$0xf]
      %v2885 = vld [vmem:[%s4 + $0xd0] sm:$0xf]
      %v2886 = vld [vmem:[%s4 + $0xd4] sm:$0xf]
      %v2887 = vld [vmem:[%s4 + $0xd8] sm:$0xf]
      %v2888 = vld [vmem:[%s4 + $0xdc] sm:$0xf]
      %v2889 = vld [vmem:[%s4 + $0xe0] sm:$0xf]
      %v2890 = vld [vmem:[%s4 + $0xe4] sm:$0xf]
      %v2891 = vld [vmem:[%s4 + $0xe8] sm:$0xf]
      %v2892 = vld [vmem:[%s4 + $0xec] sm:$0xf]
      %v2893 = vld [vmem:[%s4 + $0xf0] sm:$0xf]
      %v2894 = vld [vmem:[%s4 + $0xf4] sm:$0xf]
      %v2895 = vld [vmem:[%s4 + $0xf8] sm:$0xf]
      %v2896 = vld [vmem:[%s4 + $0xfc] sm:$0xf]
      %v2897 = vld [vmem:[%s4 + $0x100] sm:$0xf]
      %v2898 = vld [vmem:[%s4 + $0x104] sm:$0xf]
      %v2899 = vld [vmem:[%s4 + $0x108] sm:$0xf]
      %v2900 = vld [vmem:[%s4 + $0x10c] sm:$0xf]
      %v2901 = vld [vmem:[%s4 + $0x110] sm:$0xf]
      %v2902 = vld [vmem:[%s4 + $0x114] sm:$0xf]
      %v2903 = vld [vmem:[%s4 + $0x118] sm:$0xf]
      %v2904 = vld [vmem:[%s4 + $0x11c] sm:$0xf]
      %v2905 = vld [vmem:[%s4 + $0x120] sm:$0xf]
      %v2906 = vld [vmem:[%s4 + $0x124] sm:$0xf]
      %v2907 = vld [vmem:[%s4 + $0x128] sm:$0xf]
      %v2908 = vld [vmem:[%s4 + $0x12c] sm:$0xf]
      %v2909 = vld [vmem:[%s4 + $0x130] sm:$0xf]
      %v2910 = vld [vmem:[%s4 + $0x134] sm:$0xf]
      %v2911 = vld [vmem:[%s4 + $0x138] sm:$0xf]
      %v2912 = vld [vmem:[%s4 + $0x13c] sm:$0xf]
      %v2913 = vld [vmem:[%s4 + $0x140] sm:$0xf]
      %v2914 = vld [vmem:[%s4 + $0x144] sm:$0xf]
      %v2915 = vld [vmem:[%s4 + $0x148] sm:$0xf]
      %v2916 = vld [vmem:[%s4 + $0x14c] sm:$0xf]
      %v2917 = vld [vmem:[%s4 + $0x150] sm:$0xf]
      %v2918 = vld [vmem:[%s4 + $0x154] sm:$0xf]
      %v2919 = vld [vmem:[%s4 + $0x158] sm:$0xf]
      %v2920 = vld [vmem:[%s4 + $0x15c] sm:$0xf]
      %v2921 = vld [vmem:[%s4 + $0x160] sm:$0xf]
      %v2922 = vld [vmem:[%s4 + $0x164] sm:$0xf]
      %v2923 = vld [vmem:[%s4 + $0x168] sm:$0xf]
      %v2924 = vld [vmem:[%s4 + $0x16c] sm:$0xf]
      %v2925 = vld [vmem:[%s4 + $0x170] sm:$0xf]
      %v2926 = vld [vmem:[%s4 + $0x174] sm:$0xf]
      %v2927 = vld [vmem:[%s4 + $0x178] sm:$0xf]
      %v2928 = vld [vmem:[%s4 + $0x17c] sm:$0xf]
      %v2929 = vld [vmem:[%s4 + $0x180] sm:$0xf]
      %v2930 = vld [vmem:[%s4 + $0x184] sm:$0xf]
      %v2931 = vld [vmem:[%s4 + $0x188] sm:$0xf]
      %v2932 = vld [vmem:[%s4 + $0x18c] sm:$0xf]
      %v2933 = vld [vmem:[%s4 + $0x190] sm:$0xf]
      %v2934 = vld [vmem:[%s4 + $0x194] sm:$0xf]
      %v2935 = vld [vmem:[%s4 + $0x198] sm:$0xf]
      %v2936 = vld [vmem:[%s4 + $0x19c] sm:$0xf]
      %v2937 = vld [vmem:[%s4 + $0x1a0] sm:$0xf]
      %v2938 = vld [vmem:[%s4 + $0x1a4] sm:$0xf]
      %v2939 = vld [vmem:[%s4 + $0x1a8] sm:$0xf]
      %v2940 = vld [vmem:[%s4 + $0x1ac] sm:$0xf]
      %v2941 = vld [vmem:[%s4 + $0x1b0] sm:$0xf]
      %v2942 = vld [vmem:[%s4 + $0x1b4] sm:$0xf]
      %v2943 = vld [vmem:[%s4 + $0x1b8] sm:$0xf]
      %v2944 = vld [vmem:[%s4 + $0x1bc] sm:$0xf]
      %v2945 = vld [vmem:[%s4 + $0x1c0] sm:$0xf]
      %v2946 = vld [vmem:[%s4 + $0x1c4] sm:$0xf]
      %v2947 = vld [vmem:[%s4 + $0x1c8] sm:$0xf]
      %v2948 = vld [vmem:[%s4 + $0x1cc] sm:$0xf]
      %v2949 = vld [vmem:[%s4 + $0x1d0] sm:$0xf]
      %v2950 = vld [vmem:[%s4 + $0x1d4] sm:$0xf]
      %v2951 = vld [vmem:[%s4 + $0x1d8] sm:$0xf]
      %v2952 = vld [vmem:[%s4 + $0x1dc] sm:$0xf]
      %v2953 = vld [vmem:[%s4 + $0x1e0] sm:$0xf]
      %v2954 = vld [vmem:[%s4 + $0x1e4] sm:$0xf]
      %v2955 = vld [vmem:[%s4 + $0x1e8] sm:$0xf]
      %v2956 = vld [vmem:[%s4 + $0x1ec] sm:$0xf]
      %v2957 = vld [vmem:[%s4 + $0x1f0] sm:$0xf]
      %v2958 = vld [vmem:[%s4 + $0x1f4] sm:$0xf]
      %v2959 = vld [vmem:[%s4 + $0x1f8] sm:$0xf]
      %v2960 = vld [vmem:[%s4 + $0x1fc] sm:$0xf]
      %v2961 = vld [vmem:[%s4 + $0x200] sm:$0xf]
      %v2962 = vld [vmem:[%s4 + $0x204] sm:$0xf]
      %v2963 = vld [vmem:[%s4 + $0x208] sm:$0xf]
      %v2964 = vld [vmem:[%s4 + $0x20c] sm:$0xf]
      %v2965 = vld [vmem:[%s4 + $0x210] sm:$0xf]
      %v2966 = vld [vmem:[%s4 + $0x214] sm:$0xf]
      %v2967 = vld [vmem:[%s4 + $0x218] sm:$0xf]
      %v2968 = vld [vmem:[%s4 + $0x21c] sm:$0xf]
      %v2969 = vld [vmem:[%s4 + $0x220] sm:$0xf]
      %v2970 = vld [vmem:[%s4 + $0x224] sm:$0xf]
      %v2971 = vld [vmem:[%s4 + $0x228] sm:$0xf]
      %v2972 = vld [vmem:[%s4 + $0x22c] sm:$0xf]
      %v2973 = vld [vmem:[%s4 + $0x230] sm:$0xf]
      %v2974 = vld [vmem:[%s4 + $0x234] sm:$0xf]
      %v2975 = vld [vmem:[%s4 + $0x238] sm:$0xf]
      %v2976 = vld [vmem:[%s4 + $0x23c] sm:$0xf]
      %v3121 = vunpack.c.l.b16 %v2833
      %v3122 = vunpack.c.l.b16 %v2834
      %v3123 = vunpack.c.l.b16 %v2835
      %v3124 = vunpack.c.l.b16 %v2836
      %v3125 = vunpack.c.l.b16 %v2837
      %v3126 = vunpack.c.l.b16 %v2838
      %v3127 = vunpack.c.l.b16 %v2839
      %v3128 = vunpack.c.l.b16 %v2840
      %v3129 = vunpack.c.l.b16 %v2841
      %v3130 = vunpack.c.l.b16 %v2842
      %v3131 = vunpack.c.l.b16 %v2843
      %v3132 = vunpack.c.l.b16 %v2844
      %v3133 = vunpack.c.l.b16 %v2845
      %v3134 = vunpack.c.l.b16 %v2846
      %v3135 = vunpack.c.l.b16 %v2847
      %v3136 = vunpack.c.l.b16 %v2848
      %v3137 = vunpack.c.l.b16 %v2849
      %v3138 = vunpack.c.l.b16 %v2850
      %v3139 = vunpack.c.l.b16 %v2851
      %v3140 = vunpack.c.l.b16 %v2852
      %v3141 = vunpack.c.l.b16 %v2853
      %v3142 = vunpack.c.l.b16 %v2854
      %v3143 = vunpack.c.l.b16 %v2855
      %v3144 = vunpack.c.l.b16 %v2856
      %v3145 = vunpack.c.l.b16 %v2857
      %v3146 = vunpack.c.l.b16 %v2858
      %v3147 = vunpack.c.l.b16 %v2859
      %v3148 = vunpack.c.l.b16 %v2860
      %v3149 = vunpack.c.l.b16 %v2861
      %v3150 = vunpack.c.l.b16 %v2862
      %v3151 = vunpack.c.l.b16 %v2863
      %v3152 = vunpack.c.l.b16 %v2864
      %v3153 = vunpack.c.l.b16 %v2865
      %v3154 = vunpack.c.l.b16 %v2866
      %v3155 = vunpack.c.l.b16 %v2867
      %v3156 = vunpack.c.l.b16 %v2868
      %v3157 = vunpack.c.l.b16 %v2869
      %v3158 = vunpack.c.l.b16 %v2870
      %v3159 = vunpack.c.l.b16 %v2871
      %v3160 = vunpack.c.l.b16 %v2872
      %v3161 = vunpack.c.l.b16 %v2873
      %v3162 = vunpack.c.l.b16 %v2874
      %v3163 = vunpack.c.l.b16 %v2875
      %v3164 = vunpack.c.l.b16 %v2876
      %v3165 = vunpack.c.l.b16 %v2877
      %v3166 = vunpack.c.l.b16 %v2878
      %v3167 = vunpack.c.l.b16 %v2879
      %v3168 = vunpack.c.l.b16 %v2880
      %v3169 = vunpack.c.l.b16 %v2881
      %v3170 = vunpack.c.l.b16 %v2882
      %v3171 = vunpack.c.l.b16 %v2883
      %v3172 = vunpack.c.l.b16 %v2884
      %v3173 = vunpack.c.l.b16 %v2885
      %v3174 = vunpack.c.l.b16 %v2886
      %v3175 = vunpack.c.l.b16 %v2887
      %v3176 = vunpack.c.l.b16 %v2888
      %v3177 = vunpack.c.l.b16 %v2889
      %v3178 = vunpack.c.l.b16 %v2890
      %v3179 = vunpack.c.l.b16 %v2891
      %v3180 = vunpack.c.l.b16 %v2892
      %v3181 = vunpack.c.l.b16 %v2893
      %v3182 = vunpack.c.l.b16 %v2894
      %v3183 = vunpack.c.l.b16 %v2895
      %v3184 = vunpack.c.l.b16 %v2896
      %v3185 = vunpack.c.l.b16 %v2897
      %v3186 = vunpack.c.l.b16 %v2898
      %v3187 = vunpack.c.l.b16 %v2899
      %v3188 = vunpack.c.l.b16 %v2900
      %v3189 = vunpack.c.l.b16 %v2901
      %v3190 = vunpack.c.l.b16 %v2902
      %v3191 = vunpack.c.l.b16 %v2903
      %v3192 = vunpack.c.l.b16 %v2904
      %v3193 = vunpack.c.l.b16 %v2905
      %v3194 = vunpack.c.l.b16 %v2906
      %v3195 = vunpack.c.l.b16 %v2907
      %v3196 = vunpack.c.l.b16 %v2908
      %v3197 = vunpack.c.l.b16 %v2909
      %v3198 = vunpack.c.l.b16 %v2910
      %v3199 = vunpack.c.l.b16 %v2911
      %v3200 = vunpack.c.l.b16 %v2912
      %v3201 = vunpack.c.l.b16 %v2913
      %v3202 = vunpack.c.l.b16 %v2914
      %v3203 = vunpack.c.l.b16 %v2915
      %v3204 = vunpack.c.l.b16 %v2916
      %v3205 = vunpack.c.l.b16 %v2917
      %v3206 = vunpack.c.l.b16 %v2918
      %v3207 = vunpack.c.l.b16 %v2919
      %v3208 = vunpack.c.l.b16 %v2920
      %v3209 = vunpack.c.l.b16 %v2921
      %v3210 = vunpack.c.l.b16 %v2922
      %v3211 = vunpack.c.l.b16 %v2923
      %v3212 = vunpack.c.l.b16 %v2924
      %v3213 = vunpack.c.l.b16 %v2925
      %v3214 = vunpack.c.l.b16 %v2926
      %v3215 = vunpack.c.l.b16 %v2927
      %v3216 = vunpack.c.l.b16 %v2928
      %v3217 = vunpack.c.l.b16 %v2929
      %v3218 = vunpack.c.l.b16 %v2930
      %v3219 = vunpack.c.l.b16 %v2931
      %v3220 = vunpack.c.l.b16 %v2932
      %v3221 = vunpack.c.l.b16 %v2933
      %v3222 = vunpack.c.l.b16 %v2934
      %v3223 = vunpack.c.l.b16 %v2935
      %v3224 = vunpack.c.l.b16 %v2936
      %v3225 = vunpack.c.l.b16 %v2937
      %v3226 = vunpack.c.l.b16 %v2938
      %v3227 = vunpack.c.l.b16 %v2939
      %v3228 = vunpack.c.l.b16 %v2940
      %v3229 = vunpack.c.l.b16 %v2941
      %v3230 = vunpack.c.l.b16 %v2942
      %v3231 = vunpack.c.l.b16 %v2943
      %v3232 = vunpack.c.l.b16 %v2944
      %v3233 = vunpack.c.l.b16 %v2945
      %v3234 = vunpack.c.l.b16 %v2946
      %v3235 = vunpack.c.l.b16 %v2947
      %v3236 = vunpack.c.l.b16 %v2948
      %v3237 = vunpack.c.l.b16 %v2949
      %v3238 = vunpack.c.l.b16 %v2950
      %v3239 = vunpack.c.l.b16 %v2951
      %v3240 = vunpack.c.l.b16 %v2952
      %v3241 = vunpack.c.l.b16 %v2953
      %v3242 = vunpack.c.l.b16 %v2954
      %v3243 = vunpack.c.l.b16 %v2955
      %v3244 = vunpack.c.l.b16 %v2956
      %v3245 = vunpack.c.l.b16 %v2957
      %v3246 = vunpack.c.l.b16 %v2958
      %v3247 = vunpack.c.l.b16 %v2959
      %v3248 = vunpack.c.l.b16 %v2960
      %v3249 = vunpack.c.l.b16 %v2961
      %v3250 = vunpack.c.l.b16 %v2962
      %v3251 = vunpack.c.l.b16 %v2963
      %v3252 = vunpack.c.l.b16 %v2964
      %v3253 = vunpack.c.l.b16 %v2965
      %v3254 = vunpack.c.l.b16 %v2966
      %v3255 = vunpack.c.l.b16 %v2967
      %v3256 = vunpack.c.l.b16 %v2968
      %v3257 = vunpack.c.l.b16 %v2969
      %v3258 = vunpack.c.l.b16 %v2970
      %v3259 = vunpack.c.l.b16 %v2971
      %v3260 = vunpack.c.l.b16 %v2972
      %v3261 = vunpack.c.l.b16 %v2973
      %v3262 = vunpack.c.l.b16 %v2974
      %v3263 = vunpack.c.l.b16 %v2975
      %v3264 = vunpack.c.l.b16 %v2976
      %v3265 = vpack.c.b16 %v3122, %v3121
      %v3266 = vpack.c.b16 %v3124, %v3123
      %v3267 = vpack.c.b16 %v3126, %v3125
      %v3268 = vpack.c.b16 %v3128, %v3127
      %v3269 = vpack.c.b16 %v3130, %v3129
      %v3270 = vpack.c.b16 %v3132, %v3131
      %v3271 = vpack.c.b16 %v3134, %v3133
      %v3272 = vpack.c.b16 %v3136, %v3135
      %v3273 = vpack.c.b16 %v3138, %v3137
      %v3274 = vpack.c.b16 %v3140, %v3139
      %v3275 = vpack.c.b16 %v3142, %v3141
      %v3276 = vpack.c.b16 %v3144, %v3143
      %v3277 = vpack.c.b16 %v3146, %v3145
      %v3278 = vpack.c.b16 %v3148, %v3147
      %v3279 = vpack.c.b16 %v3150, %v3149
      %v3280 = vpack.c.b16 %v3152, %v3151
      %v3281 = vpack.c.b16 %v3154, %v3153
      %v3282 = vpack.c.b16 %v3156, %v3155
      %v3283 = vpack.c.b16 %v3158, %v3157
      %v3284 = vpack.c.b16 %v3160, %v3159
      %v3285 = vpack.c.b16 %v3162, %v3161
      %v3286 = vpack.c.b16 %v3164, %v3163
      %v3287 = vpack.c.b16 %v3166, %v3165
      %v3288 = vpack.c.b16 %v3168, %v3167
      %v3289 = vpack.c.b16 %v3170, %v3169
      %v3290 = vpack.c.b16 %v3172, %v3171
      %v3291 = vpack.c.b16 %v3174, %v3173
      %v3292 = vpack.c.b16 %v3176, %v3175
      %v3293 = vpack.c.b16 %v3178, %v3177
      %v3294 = vpack.c.b16 %v3180, %v3179
      %v3295 = vpack.c.b16 %v3182, %v3181
      %v3296 = vpack.c.b16 %v3184, %v3183
      %v3297 = vpack.c.b16 %v3186, %v3185
      %v3298 = vpack.c.b16 %v3188, %v3187
      %v3299 = vpack.c.b16 %v3190, %v3189
      %v3300 = vpack.c.b16 %v3192, %v3191
      %v3301 = vpack.c.b16 %v3194, %v3193
      %v3302 = vpack.c.b16 %v3196, %v3195
      %v3303 = vpack.c.b16 %v3198, %v3197
      %v3304 = vpack.c.b16 %v3200, %v3199
      %v3305 = vpack.c.b16 %v3202, %v3201
      %v3306 = vpack.c.b16 %v3204, %v3203
      %v3307 = vpack.c.b16 %v3206, %v3205
      %v3308 = vpack.c.b16 %v3208, %v3207
      %v3309 = vpack.c.b16 %v3210, %v3209
      %v3310 = vpack.c.b16 %v3212, %v3211
      %v3311 = vpack.c.b16 %v3214, %v3213
      %v3312 = vpack.c.b16 %v3216, %v3215
      %v3313 = vpack.c.b16 %v3218, %v3217
      %v3314 = vpack.c.b16 %v3220, %v3219
      %v3315 = vpack.c.b16 %v3222, %v3221
      %v3316 = vpack.c.b16 %v3224, %v3223
      %v3317 = vpack.c.b16 %v3226, %v3225
      %v3318 = vpack.c.b16 %v3228, %v3227
      %v3319 = vpack.c.b16 %v3230, %v3229
      %v3320 = vpack.c.b16 %v3232, %v3231
      %v3321 = vpack.c.b16 %v3234, %v3233
      %v3322 = vpack.c.b16 %v3236, %v3235
      %v3323 = vpack.c.b16 %v3238, %v3237
      %v3324 = vpack.c.b16 %v3240, %v3239
      %v3325 = vpack.c.b16 %v3242, %v3241
      %v3326 = vpack.c.b16 %v3244, %v3243
      %v3327 = vpack.c.b16 %v3246, %v3245
      %v3328 = vpack.c.b16 %v3248, %v3247
      %v3329 = vpack.c.b16 %v3250, %v3249
      %v3330 = vpack.c.b16 %v3252, %v3251
      %v3331 = vpack.c.b16 %v3254, %v3253
      %v3332 = vpack.c.b16 %v3256, %v3255
      %v3333 = vpack.c.b16 %v3258, %v3257
      %v3334 = vpack.c.b16 %v3260, %v3259
      %v3335 = vpack.c.b16 %v3262, %v3261
      %v3336 = vpack.c.b16 %v3264, %v3263
      %3409 = vmatprep.subr.bf16.mxu0 0
      %3410 = vmatpush1.bf16.msra.mxu0 %v3265
      %3411 = vmatprep.subr.bf16.mxu0 0
      %3412 = vmatpush1.bf16.msra.mxu0 %v3266
      %3413 = vmatprep.subr.bf16.mxu0 0
      %3414 = vmatpush1.bf16.msra.mxu0 %v3267
      %3415 = vmatprep.subr.bf16.mxu0 0
      %3416 = vmatpush1.bf16.msra.mxu0 %v3268
      %3417 = vmatprep.subr.bf16.mxu0 0
      %3418 = vmatpush1.bf16.msra.mxu0 %v3269
      %3419 = vmatprep.subr.bf16.mxu0 0
      %3420 = vmatpush1.bf16.msra.mxu0 %v3270
      %3421 = vmatprep.subr.bf16.mxu0 0
      %3422 = vmatpush1.bf16.msra.mxu0 %v3271
      %3423 = vmatprep.subr.bf16.mxu0 0
      %3424 = vmatpush1.bf16.msra.mxu0 %v3272
      %3425 = vmatprep.subr.bf16.mxu0 0
      %3426 = vmatpush1.bf16.msra.mxu0 %v3273
      %3427 = vmatprep.subr.bf16.mxu0 0
      %3428 = vmatpush1.bf16.msra.mxu0 %v3274
      %3429 = vmatprep.subr.bf16.mxu0 0
      %3430 = vmatpush1.bf16.msra.mxu0 %v3275
      %3431 = vmatprep.subr.bf16.mxu0 0
      %3432 = vmatpush1.bf16.msra.mxu0 %v3276
      %3433 = vmatprep.subr.bf16.mxu0 0
      %3434 = vmatpush1.bf16.msra.mxu0 %v3277
      %3435 = vmatprep.subr.bf16.mxu0 0
      %3436 = vmatpush1.bf16.msra.mxu0 %v3278
      %3437 = vmatprep.subr.bf16.mxu0 0
      %3438 = vmatpush1.bf16.msra.mxu0 %v3279
      %3439 = vmatprep.subr.bf16.mxu0 0
      %3440 = vmatpush1.bf16.msra.mxu0 %v3280
      %3441 = vmatprep.mubr.bf16.mxu0 %v2690
      %3442 = vmatmul.mubr.bf16.gmra.mrb[0].mxu0 %v2689
      %v3443 = vpop.f32.mrb[0].mxu0
      %v3444 = vadd.f32 0.0, %v3443
      %v3445 = vpop.f32.mrb[0].mxu0
      %v3446 = vpop.f32.mrb[0].mxu0
      %v3447 = vadd.f32 0.0, %v3446
      %v3448 = vpop.f32.mrb[0].mxu0
      %3449 = vmatprep.mubr.bf16.mxu0 %v2699
      %3450 = vmatmul.mubr.bf16.gmra.mrb[0].mxu0 %v2698
      %v3451 = vpop.f32.mrb[0].mxu0
      %v3452 = vadd.f32 0.0, %v3451
      %v3453 = vpop.f32.mrb[0].mxu0
      %v3454 = vpop.f32.mrb[0].mxu0
      %v3455 = vadd.f32 0.0, %v3454
      %v3456 = vpop.f32.mrb[0].mxu0
      %3457 = vmatprep.mubr.bf16.mxu0 %v2708
      %3458 = vmatmul.mubr.bf16.gmra.mrb[0].mxu0 %v2707
      %v3459 = vpop.f32.mrb[0].mxu0
      %v3460 = vadd.f32 0.0, %v3459
      %v3461 = vpop.f32.mrb[0].mxu0
      %v3462 = vpop.f32.mrb[0].mxu0
      %v3463 = vadd.f32 0.0, %v3462
      %v3464 = vpop.f32.mrb[0].mxu0
      %3465 = vmatprep.mubr.bf16.mxu0 %v2717
      %3466 = vmatmul.mubr.bf16.gmra.mrb[0].mxu0 %v2716
      %v3467 = vpop.f32.mrb[0].mxu0
      %v3468 = vadd.f32 0.0, %v3467
      %v3469 = vpop.f32.mrb[0].mxu0
      %v3470 = vpop.f32.mrb[0].mxu0
      %v3471 = vadd.f32 0.0, %v3470
      %v3472 = vpop.f32.mrb[0].mxu0
      %3473 = vmatprep.mubr.bf16.mxu0 %v2726
      %3474 = vmatmul.mubr.bf16.gmra.mrb[0].mxu0 %v2725
      %v3475 = vpop.f32.mrb[0].mxu0
      %v3476 = vadd.f32 0.0, %v3475
      %v3477 = vpop.f32.mrb[0].mxu0
      %v3478 = vpop.f32.mrb[0].mxu0
      %v3479 = vadd.f32 0.0, %v3478
      %v3480 = vpop.f32.mrb[0].mxu0
      %3481 = vmatprep.mubr.bf16.mxu0 %v2735
      %3482 = vmatmul.mubr.bf16.gmra.mrb[0].mxu0 %v2734
      %v3483 = vpop.f32.mrb[0].mxu0
      %v3484 = vadd.f32 0.0, %v3483
      %v3485 = vpop.f32.mrb[0].mxu0
      %v3486 = vpop.f32.mrb[0].mxu0
      %v3487 = vadd.f32 0.0, %v3486
      %v3488 = vpop.f32.mrb[0].mxu0
      %3489 = vmatprep.mubr.bf16.mxu0 %v2744
      %3490 = vmatmul.mubr.bf16.gmra.mrb[0].mxu0 %v2743
      %v3491 = vpop.f32.mrb[0].mxu0
      %v3492 = vadd.f32 0.0, %v3491
      %v3493 = vpop.f32.mrb[0].mxu0
      %v3494 = vpop.f32.mrb[0].mxu0
      %v3495 = vadd.f32 0.0, %v3494
      %v3496 = vpop.f32.mrb[0].mxu0
      %3497 = vmatprep.mubr.bf16.mxu0 %v2753
      %3498 = vmatmul.mubr.bf16.gmra.mrb[0].mxu0 %v2752
      %v3499 = vpop.f32.mrb[0].mxu0
      %v3500 = vadd.f32 0.0, %v3499
      %v3501 = vpop.f32.mrb[0].mxu0
      %v3502 = vpop.f32.mrb[0].mxu0
      %v3503 = vadd.f32 0.0, %v3502
      %v3504 = vpop.f32.mrb[0].mxu0
      %3505 = vmatprep.mubr.bf16.mxu0 %v2762
      %3506 = vmatmul.mubr.bf16.gmra.mrb[0].mxu0 %v2761
      %v3507 = vpop.f32.mrb[0].mxu0
      %v3508 = vadd.f32 0.0, %v3507
      %v3509 = vpop.f32.mrb[0].mxu0
      %v3510 = vpop.f32.mrb[0].mxu0
      %v3511 = vadd.f32 0.0, %v3510
      %v3512 = vpop.f32.mrb[0].mxu0
      %3513 = vmatprep.mubr.bf16.mxu0 %v2771
      %3514 = vmatmul.mubr.bf16.gmra.mrb[0].mxu0 %v2770
      %v3515 = vpop.f32.mrb[0].mxu0
      %v3516 = vadd.f32 0.0, %v3515
      %v3517 = vpop.f32.mrb[0].mxu0
      %v3518 = vpop.f32.mrb[0].mxu0
      %v3519 = vadd.f32 0.0, %v3518
      %v3520 = vpop.f32.mrb[0].mxu0
      %3521 = vmatprep.mubr.bf16.mxu0 %v2780
      %3522 = vmatmul.mubr.bf16.gmra.mrb[0].mxu0 %v2779
      %v3523 = vpop.f32.mrb[0].mxu0
      %v3524 = vadd.f32 0.0, %v3523
      %v3525 = vpop.f32.mrb[0].mxu0
      %v3526 = vpop.f32.mrb[0].mxu0
      %v3527 = vadd.f32 0.0, %v3526
      %v3528 = vpop.f32.mrb[0].mxu0
      %3529 = vmatprep.mubr.bf16.mxu0 %v2789
      %3530 = vmatmul.mubr.bf16.gmra.mrb[0].mxu0 %v2788
      %v3531 = vpop.f32.mrb[0].mxu0
      %v3532 = vadd.f32 0.0, %v3531
      %v3533 = vpop.f32.mrb[0].mxu0
      %v3534 = vpop.f32.mrb[0].mxu0
      %v3535 = vadd.f32 0.0, %v3534
      %v3536 = vpop.f32.mrb[0].mxu0
      %3537 = vmatprep.mubr.bf16.mxu0 %v2798
      %3538 = vmatmul.mubr.bf16.gmra.mrb[0].mxu0 %v2797
      %v3539 = vpop.f32.mrb[0].mxu0
      %v3540 = vadd.f32 0.0, %v3539
      %v3541 = vpop.f32.mrb[0].mxu0
      %v3542 = vpop.f32.mrb[0].mxu0
      %v3543 = vadd.f32 0.0, %v3542
      %v3544 = vpop.f32.mrb[0].mxu0
      %3545 = vmatprep.mubr.bf16.mxu0 %v2807
      %3546 = vmatmul.mubr.bf16.gmra.mrb[0].mxu0 %v2806
      %v3547 = vpop.f32.mrb[0].mxu0
      %v3548 = vadd.f32 0.0, %v3547
      %v3549 = vpop.f32.mrb[0].mxu0
      %v3550 = vpop.f32.mrb[0].mxu0
      %v3551 = vadd.f32 0.0, %v3550
      %v3552 = vpop.f32.mrb[0].mxu0
      %3553 = vmatprep.mubr.bf16.mxu0 %v2816
      %3554 = vmatmul.mubr.bf16.gmra.mrb[0].mxu0 %v2815
      %v3555 = vpop.f32.mrb[0].mxu0
      %v3556 = vadd.f32 0.0, %v3555
      %v3557 = vpop.f32.mrb[0].mxu0
      %v3558 = vpop.f32.mrb[0].mxu0
      %v3559 = vadd.f32 0.0, %v3558
      %v3560 = vpop.f32.mrb[0].mxu0
      %3561 = vmatprep.mubr.bf16.mxu0 %v2825
      %3562 = vmatmul.mubr.bf16.gmra.mrb[0].mxu0 %v2824
      %v3563 = vpop.f32.mrb[0].mxu0
      %v3564 = vadd.f32 0.0, %v3563
      %v3565 = vpop.f32.mrb[0].mxu0
      %v3566 = vpop.f32.mrb[0].mxu0
      %v3567 = vadd.f32 0.0, %v3566
      %v3568 = vpop.f32.mrb[0].mxu0
      %3569 = vdwg.mxu0
      %3570 = vmatprep.subr.bf16.mxu0 0
      %3571 = vmatpush1.bf16.msra.mxu0 %v3281
      %3572 = vmatprep.subr.bf16.mxu0 0
      %3573 = vmatpush1.bf16.msra.mxu0 %v3282
      %3574 = vmatprep.subr.bf16.mxu0 0
      %3575 = vmatpush1.bf16.msra.mxu0 %v3283
      %3576 = vmatprep.subr.bf16.mxu0 0
      %3577 = vmatpush1.bf16.msra.mxu0 %v3284
      %3578 = vmatprep.subr.bf16.mxu0 0
      %3579 = vmatpush1.bf16.msra.mxu0 %v3285
      %3580 = vmatprep.subr.bf16.mxu0 0
      %3581 = vmatpush1.bf16.msra.mxu0 %v3286
      %3582 = vmatprep.subr.bf16.mxu0 0
      %3583 = vmatpush1.bf16.msra.mxu0 %v3287
      %3584 = vmatprep.subr.bf16.mxu0 0
      %3585 = vmatpush1.bf16.msra.mxu0 %v3288
      %3586 = vmatprep.subr.bf16.mxu0 0
      %3587 = vmatpush1.bf16.msra.mxu0 %v3289
      %3588 = vmatprep.subr.bf16.mxu0 0
      %3589 = vmatpush1.bf16.msra.mxu0 %v3290
      %3590 = vmatprep.subr.bf16.mxu0 0
      %3591 = vmatpush1.bf16.msra.mxu0 %v3291
      %3592 = vmatprep.subr.bf16.mxu0 0
      %3593 = vmatpush1.bf16.msra.mxu0 %v3292
      %3594 = vmatprep.subr.bf16.mxu0 0
      %3595 = vmatpush1.bf16.msra.mxu0 %v3293
      %3596 = vmatprep.subr.bf16.mxu0 0
      %3597 = vmatpush1.bf16.msra.mxu0 %v3294
      %3598 = vmatprep.subr.bf16.mxu0 0
      %3599 = vmatpush1.bf16.msra.mxu0 %v3295
      %3600 = vmatprep.subr.bf16.mxu0 0
      %3601 = vmatpush1.bf16.msra.mxu0 %v3296
      %3602 = vmatprep.mubr.bf16.mxu0 %v2692
      %3603 = vmatmul.mubr.bf16.gmra.mrb[0].mxu0 %v2691
      %v3604 = vpop.f32.mrb[0].mxu0
      %v3605 = vadd.f32 %v3444, %v3604
      %v3606 = vpop.f32.mrb[0].mxu0
      %v3607 = vpop.f32.mrb[0].mxu0
      %v3608 = vadd.f32 %v3447, %v3607
      %v3609 = vpop.f32.mrb[0].mxu0
      %3610 = vmatprep.mubr.bf16.mxu0 %v2701
      %3611 = vmatmul.mubr.bf16.gmra.mrb[0].mxu0 %v2700
      %v3612 = vpop.f32.mrb[0].mxu0
      %v3613 = vadd.f32 %v3452, %v3612
      %v3614 = vpop.f32.mrb[0].mxu0
      %v3615 = vpop.f32.mrb[0].mxu0
      %v3616 = vadd.f32 %v3455, %v3615
      %v3617 = vpop.f32.mrb[0].mxu0
      %3618 = vmatprep.mubr.bf16.mxu0 %v2710
      %3619 = vmatmul.mubr.bf16.gmra.mrb[0].mxu0 %v2709
      %v3620 = vpop.f32.mrb[0].mxu0
      %v3621 = vadd.f32 %v3460, %v3620
      %v3622 = vpop.f32.mrb[0].mxu0
      %v3623 = vpop.f32.mrb[0].mxu0
      %v3624 = vadd.f32 %v3463, %v3623
      %v3625 = vpop.f32.mrb[0].mxu0
      %3626 = vmatprep.mubr.bf16.mxu0 %v2719
      %3627 = vmatmul.mubr.bf16.gmra.mrb[0].mxu0 %v2718
      %v3628 = vpop.f32.mrb[0].mxu0
      %v3629 = vadd.f32 %v3468, %v3628
      %v3630 = vpop.f32.mrb[0].mxu0
      %v3631 = vpop.f32.mrb[0].mxu0
      %v3632 = vadd.f32 %v3471, %v3631
      %v3633 = vpop.f32.mrb[0].mxu0
      %3634 = vmatprep.mubr.bf16.mxu0 %v2728
      %3635 = vmatmul.mubr.bf16.gmra.mrb[0].mxu0 %v2727
      %v3636 = vpop.f32.mrb[0].mxu0
      %v3637 = vadd.f32 %v3476, %v3636
      %v3638 = vpop.f32.mrb[0].mxu0
      %v3639 = vpop.f32.mrb[0].mxu0
      %v3640 = vadd.f32 %v3479, %v3639
      %v3641 = vpop.f32.mrb[0].mxu0
      %3642 = vmatprep.mubr.bf16.mxu0 %v2737
      %3643 = vmatmul.mubr.bf16.gmra.mrb[0].mxu0 %v2736
      %v3644 = vpop.f32.mrb[0].mxu0
      %v3645 = vadd.f32 %v3484, %v3644
      %v3646 = vpop.f32.mrb[0].mxu0
      %v3647 = vpop.f32.mrb[0].mxu0
      %v3648 = vadd.f32 %v3487, %v3647
      %v3649 = vpop.f32.mrb[0].mxu0
      %3650 = vmatprep.mubr.bf16.mxu0 %v2746
      %3651 = vmatmul.mubr.bf16.gmra.mrb[0].mxu0 %v2745
      %v3652 = vpop.f32.mrb[0].mxu0
      %v3653 = vadd.f32 %v3492, %v3652
      %v3654 = vpop.f32.mrb[0].mxu0
      %v3655 = vpop.f32.mrb[0].mxu0
      %v3656 = vadd.f32 %v3495, %v3655
      %v3657 = vpop.f32.mrb[0].mxu0
      %3658 = vmatprep.mubr.bf16.mxu0 %v2755
      %3659 = vmatmul.mubr.bf16.gmra.mrb[0].mxu0 %v2754
      %v3660 = vpop.f32.mrb[0].mxu0
      %v3661 = vadd.f32 %v3500, %v3660
      %v3662 = vpop.f32.mrb[0].mxu0
      %v3663 = vpop.f32.mrb[0].mxu0
      %v3664 = vadd.f32 %v3503, %v3663
      %v3665 = vpop.f32.mrb[0].mxu0
      %3666 = vmatprep.mubr.bf16.mxu0 %v2764
      %3667 = vmatmul.mubr.bf16.gmra.mrb[0].mxu0 %v2763
      %v3668 = vpop.f32.mrb[0].mxu0
      %v3669 = vadd.f32 %v3508, %v3668
      %v3670 = vpop.f32.mrb[0].mxu0
      %v3671 = vpop.f32.mrb[0].mxu0
      %v3672 = vadd.f32 %v3511, %v3671
      %v3673 = vpop.f32.mrb[0].mxu0
      %3674 = vmatprep.mubr.bf16.mxu0 %v2773
      %3675 = vmatmul.mubr.bf16.gmra.mrb[0].mxu0 %v2772
      %v3676 = vpop.f32.mrb[0].mxu0
      %v3677 = vadd.f32 %v3516, %v3676
      %v3678 = vpop.f32.mrb[0].mxu0
      %v3679 = vpop.f32.mrb[0].mxu0
      %v3680 = vadd.f32 %v3519, %v3679
      %v3681 = vpop.f32.mrb[0].mxu0
      %3682 = vmatprep.mubr.bf16.mxu0 %v2782
      %3683 = vmatmul.mubr.bf16.gmra.mrb[0].mxu0 %v2781
      %v3684 = vpop.f32.mrb[0].mxu0
      %v3685 = vadd.f32 %v3524, %v3684
      %v3686 = vpop.f32.mrb[0].mxu0
      %v3687 = vpop.f32.mrb[0].mxu0
      %v3688 = vadd.f32 %v3527, %v3687
      %v3689 = vpop.f32.mrb[0].mxu0
      %3690 = vmatprep.mubr.bf16.mxu0 %v2791
      %3691 = vmatmul.mubr.bf16.gmra.mrb[0].mxu0 %v2790
      %v3692 = vpop.f32.mrb[0].mxu0
      %v3693 = vadd.f32 %v3532, %v3692
      %v3694 = vpop.f32.mrb[0].mxu0
      %v3695 = vpop.f32.mrb[0].mxu0
      %v3696 = vadd.f32 %v3535, %v3695
      %v3697 = vpop.f32.mrb[0].mxu0
      %3698 = vmatprep.mubr.bf16.mxu0 %v2800
      %3699 = vmatmul.mubr.bf16.gmra.mrb[0].mxu0 %v2799
      %v3700 = vpop.f32.mrb[0].mxu0
      %v3701 = vadd.f32 %v3540, %v3700
      %v3702 = vpop.f32.mrb[0].mxu0
      %v3703 = vpop.f32.mrb[0].mxu0
      %v3704 = vadd.f32 %v3543, %v3703
      %v3705 = vpop.f32.mrb[0].mxu0
      %3706 = vmatprep.mubr.bf16.mxu0 %v2809
      %3707 = vmatmul.mubr.bf16.gmra.mrb[0].mxu0 %v2808
      %v3708 = vpop.f32.mrb[0].mxu0
      %v3709 = vadd.f32 %v3548, %v3708
      %v3710 = vpop.f32.mrb[0].mxu0
      %v3711 = vpop.f32.mrb[0].mxu0
      %v3712 = vadd.f32 %v3551, %v3711
      %v3713 = vpop.f32.mrb[0].mxu0
      %3714 = vmatprep.mubr.bf16.mxu0 %v2818
      %3715 = vmatmul.mubr.bf16.gmra.mrb[0].mxu0 %v2817
      %v3716 = vpop.f32.mrb[0].mxu0
      %v3717 = vadd.f32 %v3556, %v3716
      %v3718 = vpop.f32.mrb[0].mxu0
      %v3719 = vpop.f32.mrb[0].mxu0
      %v3720 = vadd.f32 %v3559, %v3719
      %v3721 = vpop.f32.mrb[0].mxu0
      %3722 = vmatprep.mubr.bf16.mxu0 %v2827
      %3723 = vmatmul.mubr.bf16.gmra.mrb[0].mxu0 %v2826
      %v3724 = vpop.f32.mrb[0].mxu0
      %v3725 = vadd.f32 %v3564, %v3724
      %v3726 = vpop.f32.mrb[0].mxu0
      %v3727 = vpop.f32.mrb[0].mxu0
      %v3728 = vadd.f32 %v3567, %v3727
      %v3729 = vpop.f32.mrb[0].mxu0
      %3730 = vdwg.mxu0
      %3731 = vmatprep.subr.bf16.mxu0 0
      %3732 = vmatpush1.bf16.msra.mxu0 %v3297
      %3733 = vmatprep.subr.bf16.mxu0 0
      %3734 = vmatpush1.bf16.msra.mxu0 %v3298
      %3735 = vmatprep.subr.bf16.mxu0 0
      %3736 = vmatpush1.bf16.msra.mxu0 %v3299
      %3737 = vmatprep.subr.bf16.mxu0 0
      %3738 = vmatpush1.bf16.msra.mxu0 %v3300
      %3739 = vmatprep.subr.bf16.mxu0 0
      %3740 = vmatpush1.bf16.msra.mxu0 %v3301
      %3741 = vmatprep.subr.bf16.mxu0 0
      %3742 = vmatpush1.bf16.msra.mxu0 %v3302
      %3743 = vmatprep.subr.bf16.mxu0 0
      %3744 = vmatpush1.bf16.msra.mxu0 %v3303
      %3745 = vmatprep.subr.bf16.mxu0 0
      %3746 = vmatpush1.bf16.msra.mxu0 %v3304
      %3747 = vmatprep.subr.bf16.mxu0 0
      %3748 = vmatpush1.bf16.msra.mxu0 %v3305
      %3749 = vmatprep.subr.bf16.mxu0 0
      %3750 = vmatpush1.bf16.msra.mxu0 %v3306
      %3751 = vmatprep.subr.bf16.mxu0 0
      %3752 = vmatpush1.bf16.msra.mxu0 %v3307
      %3753 = vmatprep.subr.bf16.mxu0 0
      %3754 = vmatpush1.bf16.msra.mxu0 %v3308
      %3755 = vmatprep.subr.bf16.mxu0 0
      %3756 = vmatpush1.bf16.msra.mxu0 %v3309
      %3757 = vmatprep.subr.bf16.mxu0 0
      %3758 = vmatpush1.bf16.msra.mxu0 %v3310
      %3759 = vmatprep.subr.bf16.mxu0 0
      %3760 = vmatpush1.bf16.msra.mxu0 %v3311
      %3761 = vmatprep.subr.bf16.mxu0 0
      %3762 = vmatpush1.bf16.msra.mxu0 %v3312
      %3763 = vmatprep.mubr.bf16.mxu0 %v2694
      %3764 = vmatmul.mubr.bf16.gmra.mrb[0].mxu0 %v2693
      %v3765 = vpop.f32.mrb[0].mxu0
      %v3766 = vadd.f32 %v3605, %v3765
      %v3767 = vpop.f32.mrb[0].mxu0
      %v3768 = vpop.f32.mrb[0].mxu0
      %v3769 = vadd.f32 %v3608, %v3768
      %v3770 = vpop.f32.mrb[0].mxu0
      %3771 = vmatprep.mubr.bf16.mxu0 %v2703
      %3772 = vmatmul.mubr.bf16.gmra.mrb[0].mxu0 %v2702
      %v3773 = vpop.f32.mrb[0].mxu0
      %v3774 = vadd.f32 %v3613, %v3773
      %v3775 = vpop.f32.mrb[0].mxu0
      %v3776 = vpop.f32.mrb[0].mxu0
      %v3777 = vadd.f32 %v3616, %v3776
      %v3778 = vpop.f32.mrb[0].mxu0
      %3779 = vmatprep.mubr.bf16.mxu0 %v2712
      %3780 = vmatmul.mubr.bf16.gmra.mrb[0].mxu0 %v2711
      %v3781 = vpop.f32.mrb[0].mxu0
      %v3782 = vadd.f32 %v3621, %v3781
      %v3783 = vpop.f32.mrb[0].mxu0
      %v3784 = vpop.f32.mrb[0].mxu0
      %v3785 = vadd.f32 %v3624, %v3784
      %v3786 = vpop.f32.mrb[0].mxu0
      %3787 = vmatprep.mubr.bf16.mxu0 %v2721
      %3788 = vmatmul.mubr.bf16.gmra.mrb[0].mxu0 %v2720
      %v3789 = vpop.f32.mrb[0].mxu0
      %v3790 = vadd.f32 %v3629, %v3789
      %v3791 = vpop.f32.mrb[0].mxu0
      %v3792 = vpop.f32.mrb[0].mxu0
      %v3793 = vadd.f32 %v3632, %v3792
      %v3794 = vpop.f32.mrb[0].mxu0
      %3795 = vmatprep.mubr.bf16.mxu0 %v2730
      %3796 = vmatmul.mubr.bf16.gmra.mrb[0].mxu0 %v2729
      %v3797 = vpop.f32.mrb[0].mxu0
      %v3798 = vadd.f32 %v3637, %v3797
      %v3799 = vpop.f32.mrb[0].mxu0
      %v3800 = vpop.f32.mrb[0].mxu0
      %v3801 = vadd.f32 %v3640, %v3800
      %v3802 = vpop.f32.mrb[0].mxu0
      %3803 = vmatprep.mubr.bf16.mxu0 %v2739
      %3804 = vmatmul.mubr.bf16.gmra.mrb[0].mxu0 %v2738
      %v3805 = vpop.f32.mrb[0].mxu0
      %v3806 = vadd.f32 %v3645, %v3805
      %v3807 = vpop.f32.mrb[0].mxu0
      %v3808 = vpop.f32.mrb[0].mxu0
      %v3809 = vadd.f32 %v3648, %v3808
      %v3810 = vpop.f32.mrb[0].mxu0
      %3811 = vmatprep.mubr.bf16.mxu0 %v2748
      %3812 = vmatmul.mubr.bf16.gmra.mrb[0].mxu0 %v2747
      %v3813 = vpop.f32.mrb[0].mxu0
      %v3814 = vadd.f32 %v3653, %v3813
      %v3815 = vpop.f32.mrb[0].mxu0
      %v3816 = vpop.f32.mrb[0].mxu0
      %v3817 = vadd.f32 %v3656, %v3816
      %v3818 = vpop.f32.mrb[0].mxu0
      %3819 = vmatprep.mubr.bf16.mxu0 %v2757
      %3820 = vmatmul.mubr.bf16.gmra.mrb[0].mxu0 %v2756
      %v3821 = vpop.f32.mrb[0].mxu0
      %v3822 = vadd.f32 %v3661, %v3821
      %v3823 = vpop.f32.mrb[0].mxu0
      %v3824 = vpop.f32.mrb[0].mxu0
      %v3825 = vadd.f32 %v3664, %v3824
      %v3826 = vpop.f32.mrb[0].mxu0
      %3827 = vmatprep.mubr.bf16.mxu0 %v2766
      %3828 = vmatmul.mubr.bf16.gmra.mrb[0].mxu0 %v2765
      %v3829 = vpop.f32.mrb[0].mxu0
      %v3830 = vadd.f32 %v3669, %v3829
      %v3831 = vpop.f32.mrb[0].mxu0
      %v3832 = vpop.f32.mrb[0].mxu0
      %v3833 = vadd.f32 %v3672, %v3832
      %v3834 = vpop.f32.mrb[0].mxu0
      %3835 = vmatprep.mubr.bf16.mxu0 %v2775
      %3836 = vmatmul.mubr.bf16.gmra.mrb[0].mxu0 %v2774
      %v3837 = vpop.f32.mrb[0].mxu0
      %v3838 = vadd.f32 %v3677, %v3837
      %v3839 = vpop.f32.mrb[0].mxu0
      %v3840 = vpop.f32.mrb[0].mxu0
      %v3841 = vadd.f32 %v3680, %v3840
      %v3842 = vpop.f32.mrb[0].mxu0
      %3843 = vmatprep.mubr.bf16.mxu0 %v2784
      %3844 = vmatmul.mubr.bf16.gmra.mrb[0].mxu0 %v2783
      %v3845 = vpop.f32.mrb[0].mxu0
      %v3846 = vadd.f32 %v3685, %v3845
      %v3847 = vpop.f32.mrb[0].mxu0
      %v3848 = vpop.f32.mrb[0].mxu0
      %v3849 = vadd.f32 %v3688, %v3848
      %v3850 = vpop.f32.mrb[0].mxu0
      %3851 = vmatprep.mubr.bf16.mxu0 %v2793
      %3852 = vmatmul.mubr.bf16.gmra.mrb[0].mxu0 %v2792
      %v3853 = vpop.f32.mrb[0].mxu0
      %v3854 = vadd.f32 %v3693, %v3853
      %v3855 = vpop.f32.mrb[0].mxu0
      %v3856 = vpop.f32.mrb[0].mxu0
      %v3857 = vadd.f32 %v3696, %v3856
      %v3858 = vpop.f32.mrb[0].mxu0
      %3859 = vmatprep.mubr.bf16.mxu0 %v2802
      %3860 = vmatmul.mubr.bf16.gmra.mrb[0].mxu0 %v2801
      %v3861 = vpop.f32.mrb[0].mxu0
      %v3862 = vadd.f32 %v3701, %v3861
      %v3863 = vpop.f32.mrb[0].mxu0
      %v3864 = vpop.f32.mrb[0].mxu0
      %v3865 = vadd.f32 %v3704, %v3864
      %v3866 = vpop.f32.mrb[0].mxu0
      %3867 = vmatprep.mubr.bf16.mxu0 %v2811
      %3868 = vmatmul.mubr.bf16.gmra.mrb[0].mxu0 %v2810
      %v3869 = vpop.f32.mrb[0].mxu0
      %v3870 = vadd.f32 %v3709, %v3869
      %v3871 = vpop.f32.mrb[0].mxu0
      %v3872 = vpop.f32.mrb[0].mxu0
      %v3873 = vadd.f32 %v3712, %v3872
      %v3874 = vpop.f32.mrb[0].mxu0
      %3875 = vmatprep.mubr.bf16.mxu0 %v2820
      %3876 = vmatmul.mubr.bf16.gmra.mrb[0].mxu0 %v2819
      %v3877 = vpop.f32.mrb[0].mxu0
      %v3878 = vadd.f32 %v3717, %v3877
      %v3879 = vpop.f32.mrb[0].mxu0
      %v3880 = vpop.f32.mrb[0].mxu0
      %v3881 = vadd.f32 %v3720, %v3880
      %v3882 = vpop.f32.mrb[0].mxu0
      %3883 = vmatprep.mubr.bf16.mxu0 %v2829
      %3884 = vmatmul.mubr.bf16.gmra.mrb[0].mxu0 %v2828
      %v3885 = vpop.f32.mrb[0].mxu0
      %v3886 = vadd.f32 %v3725, %v3885
      %v3887 = vpop.f32.mrb[0].mxu0
      %v3888 = vpop.f32.mrb[0].mxu0
      %v3889 = vadd.f32 %v3728, %v3888
      %v3890 = vpop.f32.mrb[0].mxu0
      %3891 = vdwg.mxu0
      %3892 = vmatprep.subr.bf16.mxu0 0
      %3893 = vmatpush1.bf16.msra.mxu0 %v3313
      %3894 = vmatprep.subr.bf16.mxu0 0
      %3895 = vmatpush1.bf16.msra.mxu0 %v3314
      %3896 = vmatprep.subr.bf16.mxu0 0
      %3897 = vmatpush1.bf16.msra.mxu0 %v3315
      %3898 = vmatprep.subr.bf16.mxu0 0
      %3899 = vmatpush1.bf16.msra.mxu0 %v3316
      %3900 = vmatprep.subr.bf16.mxu0 0
      %3901 = vmatpush1.bf16.msra.mxu0 %v3317
      %3902 = vmatprep.subr.bf16.mxu0 0
      %3903 = vmatpush1.bf16.msra.mxu0 %v3318
      %3904 = vmatprep.subr.bf16.mxu0 0
      %3905 = vmatpush1.bf16.msra.mxu0 %v3319
      %3906 = vmatprep.subr.bf16.mxu0 0
      %3907 = vmatpush1.bf16.msra.mxu0 %v3320
      %3908 = vmatprep.subr.bf16.mxu0 0
      %3909 = vmatpush1.bf16.msra.mxu0 %v3321
      %3910 = vmatprep.subr.bf16.mxu0 0
      %3911 = vmatpush1.bf16.msra.mxu0 %v3322
      %3912 = vmatprep.subr.bf16.mxu0 0
      %3913 = vmatpush1.bf16.msra.mxu0 %v3323
      %3914 = vmatprep.subr.bf16.mxu0 0
      %3915 = vmatpush1.bf16.msra.mxu0 %v3324
      %3916 = vmatprep.subr.bf16.mxu0 0
      %3917 = vmatpush1.bf16.msra.mxu0 %v3325
      %3918 = vmatprep.subr.bf16.mxu0 0
      %3919 = vmatpush1.bf16.msra.mxu0 %v3326
      %3920 = vmatprep.subr.bf16.mxu0 0
      %3921 = vmatpush1.bf16.msra.mxu0 %v3327
      %3922 = vmatprep.subr.bf16.mxu0 0
      %3923 = vmatpush1.bf16.msra.mxu0 %v3328
      %3924 = vmatprep.mubr.bf16.mxu0 %v2696
      %3925 = vmatmul.mubr.bf16.gmra.mrb[0].mxu0 %v2695
      %v3926 = vpop.f32.mrb[0].mxu0
      %v3927 = vadd.f32 %v3766, %v3926
      %v3928 = vpop.f32.mrb[0].mxu0
      %v3929 = vpop.f32.mrb[0].mxu0
      %v3930 = vadd.f32 %v3769, %v3929
      %v3931 = vpop.f32.mrb[0].mxu0
      %3932 = vmatprep.mubr.bf16.mxu0 %v2705
      %3933 = vmatmul.mubr.bf16.gmra.mrb[0].mxu0 %v2704
      %v3934 = vpop.f32.mrb[0].mxu0
      %v3935 = vadd.f32 %v3774, %v3934
      %v3936 = vpop.f32.mrb[0].mxu0
      %v3937 = vpop.f32.mrb[0].mxu0
      %v3938 = vadd.f32 %v3777, %v3937
      %v3939 = vpop.f32.mrb[0].mxu0
      %3940 = vmatprep.mubr.bf16.mxu0 %v2714
      %3941 = vmatmul.mubr.bf16.gmra.mrb[0].mxu0 %v2713
      %v3942 = vpop.f32.mrb[0].mxu0
      %v3943 = vadd.f32 %v3782, %v3942
      %v3944 = vpop.f32.mrb[0].mxu0
      %v3945 = vpop.f32.mrb[0].mxu0
      %v3946 = vadd.f32 %v3785, %v3945
      %v3947 = vpop.f32.mrb[0].mxu0
      %3948 = vmatprep.mubr.bf16.mxu0 %v2723
      %3949 = vmatmul.mubr.bf16.gmra.mrb[0].mxu0 %v2722
      %v3950 = vpop.f32.mrb[0].mxu0
      %v3951 = vadd.f32 %v3790, %v3950
      %v3952 = vpop.f32.mrb[0].mxu0
      %v3953 = vpop.f32.mrb[0].mxu0
      %v3954 = vadd.f32 %v3793, %v3953
      %v3955 = vpop.f32.mrb[0].mxu0
      %3956 = vmatprep.mubr.bf16.mxu0 %v2732
      %3957 = vmatmul.mubr.bf16.gmra.mrb[0].mxu0 %v2731
      %v3958 = vpop.f32.mrb[0].mxu0
      %v3959 = vadd.f32 %v3798, %v3958
      %v3960 = vpop.f32.mrb[0].mxu0
      %v3961 = vpop.f32.mrb[0].mxu0
      %v3962 = vadd.f32 %v3801, %v3961
      %v3963 = vpop.f32.mrb[0].mxu0
      %3964 = vmatprep.mubr.bf16.mxu0 %v2741
      %3965 = vmatmul.mubr.bf16.gmra.mrb[0].mxu0 %v2740
      %v3966 = vpop.f32.mrb[0].mxu0
      %v3967 = vadd.f32 %v3806, %v3966
      %v3968 = vpop.f32.mrb[0].mxu0
      %v3969 = vpop.f32.mrb[0].mxu0
      %v3970 = vadd.f32 %v3809, %v3969
      %v3971 = vpop.f32.mrb[0].mxu0
      %3972 = vmatprep.mubr.bf16.mxu0 %v2750
      %3973 = vmatmul.mubr.bf16.gmra.mrb[0].mxu0 %v2749
      %v3974 = vpop.f32.mrb[0].mxu0
      %v3975 = vadd.f32 %v3814, %v3974
      %v3976 = vpop.f32.mrb[0].mxu0
      %v3977 = vpop.f32.mrb[0].mxu0
      %v3978 = vadd.f32 %v3817, %v3977
      %v3979 = vpop.f32.mrb[0].mxu0
      %3980 = vmatprep.mubr.bf16.mxu0 %v2759
      %3981 = vmatmul.mubr.bf16.gmra.mrb[0].mxu0 %v2758
      %v3982 = vpop.f32.mrb[0].mxu0
      %v3983 = vadd.f32 %v3822, %v3982
      %v3984 = vpop.f32.mrb[0].mxu0
      %v3985 = vpop.f32.mrb[0].mxu0
      %v3986 = vadd.f32 %v3825, %v3985
      %v3987 = vpop.f32.mrb[0].mxu0
      %3988 = vmatprep.mubr.bf16.mxu0 %v2768
      %3989 = vmatmul.mubr.bf16.gmra.mrb[0].mxu0 %v2767
      %v3990 = vpop.f32.mrb[0].mxu0
      %v3991 = vadd.f32 %v3830, %v3990
      %v3992 = vpop.f32.mrb[0].mxu0
      %v3993 = vpop.f32.mrb[0].mxu0
      %v3994 = vadd.f32 %v3833, %v3993
      %v3995 = vpop.f32.mrb[0].mxu0
      %3996 = vmatprep.mubr.bf16.mxu0 %v2777
      %3997 = vmatmul.mubr.bf16.gmra.mrb[0].mxu0 %v2776
      %v3998 = vpop.f32.mrb[0].mxu0
      %v3999 = vadd.f32 %v3838, %v3998
      %v4000 = vpop.f32.mrb[0].mxu0
      %v4001 = vpop.f32.mrb[0].mxu0
      %v4002 = vadd.f32 %v3841, %v4001
      %v4003 = vpop.f32.mrb[0].mxu0
      %4004 = vmatprep.mubr.bf16.mxu0 %v2786
      %4005 = vmatmul.mubr.bf16.gmra.mrb[0].mxu0 %v2785
      %v4006 = vpop.f32.mrb[0].mxu0
      %v4007 = vadd.f32 %v3846, %v4006
      %v4008 = vpop.f32.mrb[0].mxu0
      %v4009 = vpop.f32.mrb[0].mxu0
      %v4010 = vadd.f32 %v3849, %v4009
      %v4011 = vpop.f32.mrb[0].mxu0
      %4012 = vmatprep.mubr.bf16.mxu0 %v2795
      %4013 = vmatmul.mubr.bf16.gmra.mrb[0].mxu0 %v2794
      %v4014 = vpop.f32.mrb[0].mxu0
      %v4015 = vadd.f32 %v3854, %v4014
      %v4016 = vpop.f32.mrb[0].mxu0
      %v4017 = vpop.f32.mrb[0].mxu0
      %v4018 = vadd.f32 %v3857, %v4017
      %v4019 = vpop.f32.mrb[0].mxu0
      %4020 = vmatprep.mubr.bf16.mxu0 %v2804
      %4021 = vmatmul.mubr.bf16.gmra.mrb[0].mxu0 %v2803
      %v4022 = vpop.f32.mrb[0].mxu0
      %v4023 = vadd.f32 %v3862, %v4022
      %v4024 = vpop.f32.mrb[0].mxu0
      %v4025 = vpop.f32.mrb[0].mxu0
      %v4026 = vadd.f32 %v3865, %v4025
      %v4027 = vpop.f32.mrb[0].mxu0
      %4028 = vmatprep.mubr.bf16.mxu0 %v2813
      %4029 = vmatmul.mubr.bf16.gmra.mrb[0].mxu0 %v2812
      %v4030 = vpop.f32.mrb[0].mxu0
      %v4031 = vadd.f32 %v3870, %v4030
      %v4032 = vpop.f32.mrb[0].mxu0
      %v4033 = vpop.f32.mrb[0].mxu0
      %v4034 = vadd.f32 %v3873, %v4033
      %v4035 = vpop.f32.mrb[0].mxu0
      %4036 = vmatprep.mubr.bf16.mxu0 %v2822
      %4037 = vmatmul.mubr.bf16.gmra.mrb[0].mxu0 %v2821
      %v4038 = vpop.f32.mrb[0].mxu0
      %v4039 = vadd.f32 %v3878, %v4038
      %v4040 = vpop.f32.mrb[0].mxu0
      %v4041 = vpop.f32.mrb[0].mxu0
      %v4042 = vadd.f32 %v3881, %v4041
      %v4043 = vpop.f32.mrb[0].mxu0
      %4044 = vmatprep.mubr.bf16.mxu0 %v2831
      %4045 = vmatmul.mubr.bf16.gmra.mrb[0].mxu0 %v2830
      %v4046 = vpop.f32.mrb[0].mxu0
      %v4047 = vadd.f32 %v3886, %v4046
      %v4048 = vpop.f32.mrb[0].mxu0
      %v4049 = vpop.f32.mrb[0].mxu0
      %v4050 = vadd.f32 %v3889, %v4049
      %v4051 = vpop.f32.mrb[0].mxu0
      %4052 = vdwg.mxu0
      %4053 = vmatprep.subr.bf16.mxu0 0
      %4054 = vmatpush1.bf16.msra.mxu0 %v3329
      %4055 = vmatprep.subr.bf16.mxu0 0
      %4056 = vmatpush1.bf16.msra.mxu0 %v3330
      %4057 = vmatprep.subr.bf16.mxu0 0
      %4058 = vmatpush1.bf16.msra.mxu0 %v3331
      %4059 = vmatprep.subr.bf16.mxu0 0
      %4060 = vmatpush1.bf16.msra.mxu0 %v3332
      %4061 = vmatprep.subr.bf16.mxu0 0
      %4062 = vmatpush1.bf16.msra.mxu0 %v3333
      %4063 = vmatprep.subr.bf16.mxu0 0
      %4064 = vmatpush1.bf16.msra.mxu0 %v3334
      %4065 = vmatprep.subr.bf16.mxu0 0
      %4066 = vmatpush1.bf16.msra.mxu0 %v3335
      %4067 = vmatprep.subr.bf16.mxu0 0
      %4068 = vmatpush1.bf16.msra.mxu0 %v3336
      %4069 = vmatprep.subr.bf16.mxu0 0
      %4070 = vmatpush1.bf16.msra.mxu0 0
      %4071 = vmatprep.subr.bf16.mxu0 0
      %4072 = vmatpush1.bf16.msra.mxu0 0
      %4073 = vmatprep.subr.bf16.mxu0 0
      %4074 = vmatpush1.bf16.msra.mxu0 0
      %4075 = vmatprep.subr.bf16.mxu0 0
      %4076 = vmatpush1.bf16.msra.mxu0 0
      %4077 = vmatprep.subr.bf16.mxu0 0
      %4078 = vmatpush1.bf16.msra.mxu0 0
      %4079 = vmatprep.subr.bf16.mxu0 0
      %4080 = vmatpush1.bf16.msra.mxu0 0
      %4081 = vmatprep.subr.bf16.mxu0 0
      %4082 = vmatpush1.bf16.msra.mxu0 0
      %4083 = vmatprep.subr.bf16.mxu0 0
      %4084 = vmatpush1.bf16.msra.mxu0 0
      %4085 = vmatprep.mubr.bf16.mxu0 0
      %4086 = vmatmul.mubr.bf16.gmra.mrb[0].mxu0 %v2697
      %v4087 = vpop.f32.mrb[0].mxu0
      %v4088 = vadd.f32 %v3927, %v4087
      %v4089 = vpop.f32.mrb[0].mxu0
      %v4090 = vpop.f32.mrb[0].mxu0
      %v4091 = vadd.f32 %v3930, %v4090
      %v4092 = vpop.f32.mrb[0].mxu0
      %4093 = vmatprep.mubr.bf16.mxu0 0
      %4094 = vmatmul.mubr.bf16.gmra.mrb[0].mxu0 %v2706
      %v4095 = vpop.f32.mrb[0].mxu0
      %v4096 = vadd.f32 %v3935, %v4095
      %v4097 = vpop.f32.mrb[0].mxu0
      %v4098 = vpop.f32.mrb[0].mxu0
      %v4099 = vadd.f32 %v3938, %v4098
      %v4100 = vpop.f32.mrb[0].mxu0
      %4101 = vmatprep.mubr.bf16.mxu0 0
      %4102 = vmatmul.mubr.bf16.gmra.mrb[0].mxu0 %v2715
      %v4103 = vpop.f32.mrb[0].mxu0
      %v4104 = vadd.f32 %v3943, %v4103
      %v4105 = vpop.f32.mrb[0].mxu0
      %v4106 = vpop.f32.mrb[0].mxu0
      %v4107 = vadd.f32 %v3946, %v4106
      %v4108 = vpop.f32.mrb[0].mxu0
      %4109 = vmatprep.mubr.bf16.mxu0 0
      %4110 = vmatmul.mubr.bf16.gmra.mrb[0].mxu0 %v2724
      %v4111 = vpop.f32.mrb[0].mxu0
      %v4112 = vadd.f32 %v3951, %v4111
      %v4113 = vpop.f32.mrb[0].mxu0
      %v4114 = vpop.f32.mrb[0].mxu0
      %v4115 = vadd.f32 %v3954, %v4114
      %v4116 = vpop.f32.mrb[0].mxu0
      %4117 = vmatprep.mubr.bf16.mxu0 0
      %4118 = vmatmul.mubr.bf16.gmra.mrb[0].mxu0 %v2733
      %v4119 = vpop.f32.mrb[0].mxu0
      %v4120 = vadd.f32 %v3959, %v4119
      %v4121 = vpop.f32.mrb[0].mxu0
      %v4122 = vpop.f32.mrb[0].mxu0
      %v4123 = vadd.f32 %v3962, %v4122
      %v4124 = vpop.f32.mrb[0].mxu0
      %4125 = vmatprep.mubr.bf16.mxu0 0
      %4126 = vmatmul.mubr.bf16.gmra.mrb[0].mxu0 %v2742
      %v4127 = vpop.f32.mrb[0].mxu0
      %v4128 = vadd.f32 %v3967, %v4127
      %v4129 = vpop.f32.mrb[0].mxu0
      %v4130 = vpop.f32.mrb[0].mxu0
      %v4131 = vadd.f32 %v3970, %v4130
      %v4132 = vpop.f32.mrb[0].mxu0
      %4133 = vmatprep.mubr.bf16.mxu0 0
      %4134 = vmatmul.mubr.bf16.gmra.mrb[0].mxu0 %v2751
      %v4135 = vpop.f32.mrb[0].mxu0
      %v4136 = vadd.f32 %v3975, %v4135
      %v4137 = vpop.f32.mrb[0].mxu0
      %v4138 = vpop.f32.mrb[0].mxu0
      %v4139 = vadd.f32 %v3978, %v4138
      %v4140 = vpop.f32.mrb[0].mxu0
      %4141 = vmatprep.mubr.bf16.mxu0 0
      %4142 = vmatmul.mubr.bf16.gmra.mrb[0].mxu0 %v2760
      %v4143 = vpop.f32.mrb[0].mxu0
      %v4144 = vadd.f32 %v3983, %v4143
      %v4145 = vpop.f32.mrb[0].mxu0
      %v4146 = vpop.f32.mrb[0].mxu0
      %v4147 = vadd.f32 %v3986, %v4146
      %v4148 = vpop.f32.mrb[0].mxu0
      %4149 = vmatprep.mubr.bf16.mxu0 0
      %4150 = vmatmul.mubr.bf16.gmra.mrb[0].mxu0 %v2769
      %v4151 = vpop.f32.mrb[0].mxu0
      %v4152 = vadd.f32 %v3991, %v4151
      %v4153 = vpop.f32.mrb[0].mxu0
      %v4154 = vpop.f32.mrb[0].mxu0
      %v4155 = vadd.f32 %v3994, %v4154
      %v4156 = vpop.f32.mrb[0].mxu0
      %4157 = vmatprep.mubr.bf16.mxu0 0
      %4158 = vmatmul.mubr.bf16.gmra.mrb[0].mxu0 %v2778
      %v4159 = vpop.f32.mrb[0].mxu0
      %v4160 = vadd.f32 %v3999, %v4159
      %v4161 = vpop.f32.mrb[0].mxu0
      %v4162 = vpop.f32.mrb[0].mxu0
      %v4163 = vadd.f32 %v4002, %v4162
      %v4164 = vpop.f32.mrb[0].mxu0
      %4165 = vmatprep.mubr.bf16.mxu0 0
      %4166 = vmatmul.mubr.bf16.gmra.mrb[0].mxu0 %v2787
      %v4167 = vpop.f32.mrb[0].mxu0
      %v4168 = vadd.f32 %v4007, %v4167
      %v4169 = vpop.f32.mrb[0].mxu0
      %v4170 = vpop.f32.mrb[0].mxu0
      %v4171 = vadd.f32 %v4010, %v4170
      %v4172 = vpop.f32.mrb[0].mxu0
      %4173 = vmatprep.mubr.bf16.mxu0 0
      %4174 = vmatmul.mubr.bf16.gmra.mrb[0].mxu0 %v2796
      %v4175 = vpop.f32.mrb[0].mxu0
      %v4176 = vadd.f32 %v4015, %v4175
      %v4177 = vpop.f32.mrb[0].mxu0
      %v4178 = vpop.f32.mrb[0].mxu0
      %v4179 = vadd.f32 %v4018, %v4178
      %v4180 = vpop.f32.mrb[0].mxu0
      %4181 = vmatprep.mubr.bf16.mxu0 0
      %4182 = vmatmul.mubr.bf16.gmra.mrb[0].mxu0 %v2805
      %v4183 = vpop.f32.mrb[0].mxu0
      %v4184 = vadd.f32 %v4023, %v4183
      %v4185 = vpop.f32.mrb[0].mxu0
      %v4186 = vpop.f32.mrb[0].mxu0
      %v4187 = vadd.f32 %v4026, %v4186
      %v4188 = vpop.f32.mrb[0].mxu0
      %4189 = vmatprep.mubr.bf16.mxu0 0
      %4190 = vmatmul.mubr.bf16.gmra.mrb[0].mxu0 %v2814
      %v4191 = vpop.f32.mrb[0].mxu0
      %v4192 = vadd.f32 %v4031, %v4191
      %v4193 = vpop.f32.mrb[0].mxu0
      %v4194 = vpop.f32.mrb[0].mxu0
      %v4195 = vadd.f32 %v4034, %v4194
      %v4196 = vpop.f32.mrb[0].mxu0
      %4197 = vmatprep.mubr.bf16.mxu0 0
      %4198 = vmatmul.mubr.bf16.gmra.mrb[0].mxu0 %v2823
      %v4199 = vpop.f32.mrb[0].mxu0
      %v4200 = vadd.f32 %v4039, %v4199
      %v4201 = vpop.f32.mrb[0].mxu0
      %v4202 = vpop.f32.mrb[0].mxu0
      %v4203 = vadd.f32 %v4042, %v4202
      %v4204 = vpop.f32.mrb[0].mxu0
      %4205 = vmatprep.mubr.bf16.mxu0 0
      %4206 = vmatmul.mubr.bf16.gmra.mrb[0].mxu0 %v2832
      %v4207 = vpop.f32.mrb[0].mxu0
      %v4208 = vadd.f32 %v4047, %v4207
      %v4209 = vpop.f32.mrb[0].mxu0
      %v4210 = vpop.f32.mrb[0].mxu0
      %v4211 = vadd.f32 %v4050, %v4210
      %v4212 = vpop.f32.mrb[0].mxu0
      %4213 = vdwg.mxu0
      %v4214 = vld [vmem:[%s5] sm:$0x1]
      %v4216 = vlaneseq
      %v4217 = vshrl.u32 %v4216, 7
      %v4218 = vsub.s32 0, %v4217
      %v4219 = vrot.slane %v4214, %v4218
      %v4221 = vmul.f32 %v4088, %v4219
      %v4222 = vmul.f32 %v4091, %v4219
      %v4223 = vmul.f32 %v4096, %v4219
      %v4224 = vmul.f32 %v4099, %v4219
      %v4225 = vmul.f32 %v4104, %v4219
      %v4226 = vmul.f32 %v4107, %v4219
      %v4227 = vmul.f32 %v4112, %v4219
      %v4228 = vmul.f32 %v4115, %v4219
      %v4229 = vmul.f32 %v4120, %v4219
      %v4230 = vmul.f32 %v4123, %v4219
      %v4231 = vmul.f32 %v4128, %v4219
      %v4232 = vmul.f32 %v4131, %v4219
      %v4233 = vmul.f32 %v4136, %v4219
      %v4234 = vmul.f32 %v4139, %v4219
      %v4235 = vmul.f32 %v4144, %v4219
      %v4236 = vmul.f32 %v4147, %v4219
      %v4237 = vmul.f32 %v4152, %v4219
      %v4238 = vmul.f32 %v4155, %v4219
      %v4239 = vmul.f32 %v4160, %v4219
      %v4240 = vmul.f32 %v4163, %v4219
      %v4241 = vmul.f32 %v4168, %v4219
      %v4242 = vmul.f32 %v4171, %v4219
      %v4243 = vmul.f32 %v4176, %v4219
      %v4244 = vmul.f32 %v4179, %v4219
      %v4245 = vmul.f32 %v4184, %v4219
      %v4246 = vmul.f32 %v4187, %v4219
      %v4247 = vmul.f32 %v4192, %v4219
      %v4248 = vmul.f32 %v4195, %v4219
      %v4249 = vmul.f32 %v4200, %v4219
      %v4250 = vmul.f32 %v4203, %v4219
      %v4251 = vmul.f32 %v4208, %v4219
      %v4252 = vmul.f32 %v4211, %v4219
      %v4253 = vld [vmem:[%s6] sm:$0x1]
      %v4255 = vlaneseq
      %v4256 = vshrl.u32 %v4255, 7
      %v4257 = vsub.s32 0, %v4256
      %v4258 = vrot.slane %v4253, %v4257
      %v4260 = vadd.f32 %v4221, %v4258
      %v4261 = vadd.f32 %v4222, %v4258
      %v4262 = vadd.f32 %v4223, %v4258
      %v4263 = vadd.f32 %v4224, %v4258
      %v4264 = vadd.f32 %v4225, %v4258
      %v4265 = vadd.f32 %v4226, %v4258
      %v4266 = vadd.f32 %v4227, %v4258
      %v4267 = vadd.f32 %v4228, %v4258
      %v4268 = vadd.f32 %v4229, %v4258
      %v4269 = vadd.f32 %v4230, %v4258
      %v4270 = vadd.f32 %v4231, %v4258
      %v4271 = vadd.f32 %v4232, %v4258
      %v4272 = vadd.f32 %v4233, %v4258
      %v4273 = vadd.f32 %v4234, %v4258
      %v4274 = vadd.f32 %v4235, %v4258
      %v4275 = vadd.f32 %v4236, %v4258
      %v4276 = vadd.f32 %v4237, %v4258
      %v4277 = vadd.f32 %v4238, %v4258
      %v4278 = vadd.f32 %v4239, %v4258
      %v4279 = vadd.f32 %v4240, %v4258
      %v4280 = vadd.f32 %v4241, %v4258
      %v4281 = vadd.f32 %v4242, %v4258
      %v4282 = vadd.f32 %v4243, %v4258
      %v4283 = vadd.f32 %v4244, %v4258
      %v4284 = vadd.f32 %v4245, %v4258
      %v4285 = vadd.f32 %v4246, %v4258
      %v4286 = vadd.f32 %v4247, %v4258
      %v4287 = vadd.f32 %v4248, %v4258
      %v4288 = vadd.f32 %v4249, %v4258
      %v4289 = vadd.f32 %v4250, %v4258
      %v4290 = vadd.f32 %v4251, %v4258
      %v4291 = vadd.f32 %v4252, %v4258
      %v4292 = vadd.f32 %v4260, %v280
      %v4293 = vadd.f32 %v4261, %v281
      %v4294 = vadd.f32 %v4262, %v282
      %v4295 = vadd.f32 %v4263, %v283
      %v4296 = vadd.f32 %v4264, %v284
      %v4297 = vadd.f32 %v4265, %v285
      %v4298 = vadd.f32 %v4266, %v286
      %v4299 = vadd.f32 %v4267, %v287
      %v4300 = vadd.f32 %v4268, %v288
      %v4301 = vadd.f32 %v4269, %v289
      %v4302 = vadd.f32 %v4270, %v290
      %v4303 = vadd.f32 %v4271, %v291
      %v4304 = vadd.f32 %v4272, %v292
      %v4305 = vadd.f32 %v4273, %v293
      %v4306 = vadd.f32 %v4274, %v294
      %v4307 = vadd.f32 %v4275, %v295
      %v4308 = vadd.f32 %v4276, %v296
      %v4309 = vadd.f32 %v4277, %v297
      %v4310 = vadd.f32 %v4278, %v298
      %v4311 = vadd.f32 %v4279, %v299
      %v4312 = vadd.f32 %v4280, %v300
      %v4313 = vadd.f32 %v4281, %v301
      %v4314 = vadd.f32 %v4282, %v302
      %v4315 = vadd.f32 %v4283, %v303
      %v4316 = vadd.f32 %v4284, %v304
      %v4317 = vadd.f32 %v4285, %v305
      %v4318 = vadd.f32 %v4286, %v306
      %v4319 = vadd.f32 %v4287, %v307
      %v4320 = vadd.f32 %v4288, %v308
      %v4321 = vadd.f32 %v4289, %v309
      %v4322 = vadd.f32 %v4290, %v310
      %v4323 = vadd.f32 %v4291, %v311
      %v4324 = vmax.f32 %v4292, 0.0
      %v4325 = vmax.f32 %v4293, 0.0
      %v4326 = vmax.f32 %v4294, 0.0
      %v4327 = vmax.f32 %v4295, 0.0
      %v4328 = vmax.f32 %v4296, 0.0
      %v4329 = vmax.f32 %v4297, 0.0
      %v4330 = vmax.f32 %v4298, 0.0
      %v4331 = vmax.f32 %v4299, 0.0
      %v4332 = vmax.f32 %v4300, 0.0
      %v4333 = vmax.f32 %v4301, 0.0
      %v4334 = vmax.f32 %v4302, 0.0
      %v4335 = vmax.f32 %v4303, 0.0
      %v4336 = vmax.f32 %v4304, 0.0
      %v4337 = vmax.f32 %v4305, 0.0
      %v4338 = vmax.f32 %v4306, 0.0
      %v4339 = vmax.f32 %v4307, 0.0
      %v4340 = vmax.f32 %v4308, 0.0
      %v4341 = vmax.f32 %v4309, 0.0
      %v4342 = vmax.f32 %v4310, 0.0
      %v4343 = vmax.f32 %v4311, 0.0
      %v4344 = vmax.f32 %v4312, 0.0
      %v4345 = vmax.f32 %v4313, 0.0
      %v4346 = vmax.f32 %v4314, 0.0
      %v4347 = vmax.f32 %v4315, 0.0
      %v4348 = vmax.f32 %v4316, 0.0
      %v4349 = vmax.f32 %v4317, 0.0
      %v4350 = vmax.f32 %v4318, 0.0
      %v4351 = vmax.f32 %v4319, 0.0
      %v4352 = vmax.f32 %v4320, 0.0
      %v4353 = vmax.f32 %v4321, 0.0
      %v4354 = vmax.f32 %v4322, 0.0
      %v4355 = vmax.f32 %v4323, 0.0
      %4356 = vst [vmem:[%s278] sm:$0xff] %v4324
      %4357 = vst [vmem:[%s278 + $0x8] sm:$0xff] %v4325
      %4358 = vst [vmem:[%s278 + $0x10] sm:$0xff] %v4326
      %4359 = vst [vmem:[%s278 + $0x18] sm:$0xff] %v4327
      %4360 = vst [vmem:[%s278 + $0x20] sm:$0xff] %v4328
      %4361 = vst [vmem:[%s278 + $0x28] sm:$0xff] %v4329
      %4362 = vst [vmem:[%s278 + $0x30] sm:$0xff] %v4330
      %4363 = vst [vmem:[%s278 + $0x38] sm:$0xff] %v4331
      %4364 = vst [vmem:[%s278 + $0x40] sm:$0xff] %v4332
      %4365 = vst [vmem:[%s278 + $0x48] sm:$0xff] %v4333
      %4366 = vst [vmem:[%s278 + $0x50] sm:$0xff] %v4334
      %4367 = vst [vmem:[%s278 + $0x58] sm:$0xff] %v4335
      %4368 = vst [vmem:[%s278 + $0x60] sm:$0xff] %v4336
      %4369 = vst [vmem:[%s278 + $0x68] sm:$0xff] %v4337
      %4370 = vst [vmem:[%s278 + $0x70] sm:$0xff] %v4338
      %4371 = vst [vmem:[%s278 + $0x78] sm:$0xff] %v4339
      %4372 = vst [vmem:[%s278 + $0x80] sm:$0xff] %v4340
      %4373 = vst [vmem:[%s278 + $0x88] sm:$0xff] %v4341
      %4374 = vst [vmem:[%s278 + $0x90] sm:$0xff] %v4342
      %4375 = vst [vmem:[%s278 + $0x98] sm:$0xff] %v4343
      %4376 = vst [vmem:[%s278 + $0xa0] sm:$0xff] %v4344
      %4377 = vst [vmem:[%s278 + $0xa8] sm:$0xff] %v4345
      %4378 = vst [vmem:[%s278 + $0xb0] sm:$0xff] %v4346
      %4379 = vst [vmem:[%s278 + $0xb8] sm:$0xff] %v4347
      %4380 = vst [vmem:[%s278 + $0xc0] sm:$0xff] %v4348
      %4381 = vst [vmem:[%s278 + $0xc8] sm:$0xff] %v4349
      %4382 = vst [vmem:[%s278 + $0xd0] sm:$0xff] %v4350
      %4383 = vst [vmem:[%s278 + $0xd8] sm:$0xff] %v4351
      %4384 = vst [vmem:[%s278 + $0xe0] sm:$0xff] %v4352
      %4385 = vst [vmem:[%s278 + $0xe8] sm:$0xff] %v4353
      %4386 = vst [vmem:[%s278 + $0xf0] sm:$0xff] %v4354
      %4387 = vst [vmem:[%s278 + $0xf8] sm:$0xff] %v4355
      %p4388 = scmp.lt.s32.totalorder %s18, 1
      %s4389 = scalar_select %p4388, %s18, 1
      %s4390 = smul.addr %s4389, 32
      %s4391 = smul.addr %s4390, 8
      %s4392 = scalar_lea.vmem %s7, %s4391
      // Predicated region
      $region49: #{basic_block_2d.1} parent=47 // pred_check
        %p4393 = pneg %p188
      $region50: #{basic_block_2d.1} parent=47 // pred_check_branch
        %4395 = sbr.rel (%p4393) target = $region52
      $region51: #{basic_block_2d.1} parent=47 // pred_region
        _
      $region52: #{basic_block_2d.1} parent=47 // pred_fallthru
        _
    $region48: #{basic_block_2d.1} parent=5 // pred_fallthru
      _
    %p4396 = scmp.le.s32.totalorder 2, %s13
    // Predicated region
    $region53: #{basic_block_2d.1} parent=5 // pred_check
      %p4397 = pneg %p4396
    $region54: #{basic_block_2d.1} parent=5 // pred_check_branch
      %4399 = sbr.rel (%p4397) target = $region56
    $region55: #{basic_block_2d.1} parent=5 // pred_region
      %s4400 = ssub.s32 %s13, 2
      // Predicated region
      $region57: #{basic_block_2d.1} parent=55 // pred_check
        %p4401 = pneg %p194
      $region58: #{basic_block_2d.1} parent=55 // pred_check_branch
        %4403 = sbr.rel (%p4401) target = $region60
      $region59: #{basic_block_2d.1} parent=55 // pred_region
        %p4404 = scmp.lt.s32.totalorder %s19, 1
        %s4405 = scalar_select %p4404, %s19, 1
        %s4406 = smul.addr %s4405, 32
        %s4407 = smul.addr %s4406, 8
        %s4408 = scalar_lea.vmem %s7, %s4407
      $region60: #{basic_block_2d.1} parent=55 // pred_fallthru
        _
    $region56: #{basic_block_2d.1} parent=5 // pred_fallthru
      _
  $region6: #{basic_block_2d.1} parent=0 // loop_footer
    %s17 = sadd.s32 1, %s13
  $region7: #{basic_block_2d.1} parent=0 // loop_footer_branch
    %12 = sbr.rel target = $region3
  $region8: #{basic_block_2d.1} parent=0 // loop_exit
    _

</llo_original>
